<compile_context>
chip_gen: v7x
topology: tpu7x:2x2x1
jax: 0.10.0
libtpu: 0.0.40
codegen_flags: <defaults>
</compile_context>

<pallas_src>
import jax
import jax.numpy as jnp
from jax.experimental import pallas as pl
from jax.experimental.pallas import tpu as pltpu

# ---- module hyper-parameters (from `args` / lists in the reference file) ------------
NUM_LAYERS = 3
HIDDEN = 640                       # args['hidden_dim']
EMB_DIM = 10                       # args['emb_dim']
N_IDS = 4                          # len(ids)
N_EVENTS = 6                       # len(events)
OUT_DIM = N_EVENTS + 1             # = 7
IN_CONS = EMB_DIM * N_IDS + 1      # = 41
BN_EPS = 1e-5
DEFAULT_TM = 256                   # batch tile (fills a 256-wide MXU on v6e/v7x)


def _round_up(n, m):
    return ((n + m - 1) // m) * m


# ---- Pallas kernel: folded 4-layer MLP + masked event average -----------------------
def racenet_mlp_kernel(x_ref, mask_ref,
                       w1_ref, b1_ref,
                       w2_ref, b2_ref,
                       w3_ref, b3_ref,
                       w4_ref, b4_ref,
                       o_ref):
    f32 = jnp.float32
    relu = lambda v: jnp.maximum(v, 0.0)

    # layer 1..3: Linear -> ReLU  (BN affine already folded into next layer's W/b;
    # dropout is identity in eval mode)
    h = relu(jnp.dot(x_ref[...].astype(jnp.bfloat16), w1_ref[...],
                     preferred_element_type=f32) + b1_ref[...])
    h = relu(jnp.dot(h.astype(jnp.bfloat16), w2_ref[...],
                     preferred_element_type=f32) + b2_ref[...])
    h = relu(jnp.dot(h.astype(jnp.bfloat16), w3_ref[...],
                     preferred_element_type=f32) + b3_ref[...])
    # output head: Linear(hidden -> 7) with BN3 + scalar bias folded into w4/b4
    y = jnp.dot(h.astype(jnp.bfloat16), w4_ref[...],
                preferred_element_type=f32) + b4_ref[...]
    m = mask_ref[...]
    num = jnp.sum(y * m, axis=-1, keepdims=True)
    den = jnp.sum(m, axis=-1, keepdims=True)
    o_ref[...] = num / den


def _call_mlp(x, mask, p):
    B = x.shape[0]
    tm = min(DEFAULT_TM, _round_up(B, 8))
    b_pad = _round_up(B, tm)
    if b_pad != B:
        x = jnp.pad(x, ((0, b_pad - B), (0, 0)))
        # pad mask rows with ones so padded rows never divide by zero
        mask = jnp.pad(mask, ((0, b_pad - B), (0, 0)), constant_values=1.0)

    row = lambda i: (i, 0)        # batch-tiled operands
    const = lambda i: (0, 0)      # weights: constant index map -> resident, no re-DMA

    out = pl.pallas_call(
        racenet_mlp_kernel,
        out_shape=jax.ShapeDtypeStruct((b_pad, 1), jnp.float32),
        grid=(b_pad // tm,),
        in_specs=[
            pl.BlockSpec((tm, IN_CONS), row),          # x
            pl.BlockSpec((tm, OUT_DIM), row),          # events mask
            pl.BlockSpec((IN_CONS, HIDDEN), const),    # w1 (bf16)
            pl.BlockSpec((1, HIDDEN), const),          # b1
            pl.BlockSpec((HIDDEN, HIDDEN), const),     # w2 (bf16, BN1 folded)
            pl.BlockSpec((1, HIDDEN), const),          # b2
            pl.BlockSpec((HIDDEN, HIDDEN), const),     # w3 (bf16, BN2 folded)
            pl.BlockSpec((1, HIDDEN), const),          # b3
            pl.BlockSpec((HIDDEN, OUT_DIM), const),    # w4 (bf16, BN3 folded)
            pl.BlockSpec((1, OUT_DIM), const),         # b4 (+ scalar bias folded)
        ],
        out_specs=pl.BlockSpec((tm, 1), row),
        compiler_params=pltpu.CompilerParams(
            dimension_semantics=("parallel",),         # v7x: shard batch tiles on 2 TCs
            vmem_limit_bytes=32 << 20),
    )(x, mask, p["w1"], p["b1"], p["w2"], p["b2"],
      p["w3"], p["b3"], p["w4"], p["b4"])
    return out[:B, 0]


# ---- wrapper: embedding gathers + concat (glue) then Pallas MLP ----------------------
def racenet_forward(kparams, batched_lap, batched_cons, batched_weather, batched_events):
    # NOTE: batched_lap / batched_weather are unused by the reference forward pass.
    del batched_lap, batched_weather
    beds = [jnp.take(kparams["embs"][i], batched_cons[:, i], axis=0) for i in range(N_IDS)]
    x = jnp.concatenate([batched_cons[:, -1:].astype(jnp.float32)] + beds, axis=-1)
    assert x.shape[-1] == IN_CONS
    mask = batched_events.astype(jnp.int32).astype(jnp.float32)
    return _call_mlp(x, mask, kparams)


# ---- pure-JAX references -------------------------------------------------------------
def reference_semantic(raw, batched_lap, batched_cons, batched_weather, batched_events):
    """Faithful eval-mode forward of the PyTorch module, f32 un-folded parameters."""
    del batched_lap, batched_weather
    beds = [jnp.take(raw["embs"][i], batched_cons[:, i], axis=0) for i in range(N_IDS)]
    h = jnp.concatenate([batched_cons[:, -1:].astype(jnp.float32)] + beds, axis=-1)
    mask = batched_events.astype(jnp.int32).astype(jnp.float32)
    for i in range(NUM_LAYERS):
        h = jnp.maximum(h @ raw["W"][i] + raw["b"][i], 0.0)
        h = (h - raw["mean"][i]) / jnp.sqrt(raw["var"][i] + BN_EPS) * raw["gamma"][i] + raw["beta"][i]
        # dropout: identity in eval mode
    y = h @ raw["W"][3] + raw["b"][3]
    return jnp.sum(y * mask, axis=-1) / jnp.sum(mask, axis=-1) + raw["bias"]


def reference_kernel_math(kp, batched_cons, batched_events):
    """Mirrors the kernel arithmetic (folded BN/bias, bf16 weights & activations)."""
    f32 = jnp.float32
    beds = [jnp.take(kp["embs"][i], batched_cons[:, i], axis=0) for i in range(N_IDS)]
    x = jnp.concatenate([batched_cons[:, -1:].astype(jnp.float32)] + beds, axis=-1)
    mask = batched_events.astype(jnp.int32).astype(jnp.float32)
    h = jnp.maximum(jnp.dot(x.astype(jnp.bfloat16), kp["w1"], preferred_element_type=f32) + kp["b1"], 0.0)
    h = jnp.maximum(jnp.dot(h.astype(jnp.bfloat16), kp["w2"], preferred_element_type=f32) + kp["b2"], 0.0)
    h = jnp.maximum(jnp.dot(h.astype(jnp.bfloat16), kp["w3"], preferred_element_type=f32) + kp["b3"], 0.0)
    y = jnp.dot(h.astype(jnp.bfloat16), kp["w4"], preferred_element_type=f32) + kp["b4"]
    return jnp.sum(y * mask, axis=-1) / jnp.sum(mask, axis=-1)


# ---- parameter init (raw, PyTorch-style) and offline folding -------------------------
def init_raw_params(key, num_drivers, num_tracks, num_teams):
    keys = jax.random.split(key, 13)

    def lin(k, fan_in, fan_out):
        kw, kb = jax.random.split(k)
        lim = 1.0 / jnp.sqrt(jnp.float32(fan_in))
        w = jax.random.uniform(kw, (fan_in, fan_out), jnp.float32, -lim, lim)
        b = jax.random.uniform(kb, (fan_out,), jnp.float32, -lim, lim)
        return w, b

    def bn(k, n):
        k1, k2, k3, k4 = jax.random.split(k, 4)
        gamma = 1.0 + 0.1 * jax.random.normal(k1, (n,), jnp.float32)
        beta = 0.1 * jax.random.normal(k2, (n,), jnp.float32)
        mean = 0.1 * jax.random.normal(k3, (n,), jnp.float32)
        var = 1.0 + 0.1 * jnp.abs(jax.random.normal(k4, (n,), jnp.float32))
        return gamma, beta, mean, var

    w1, b1 = lin(keys[0], IN_CONS, HIDDEN)
    w2, b2 = lin(keys[1], HIDDEN, HIDDEN)
    w3, b3 = lin(keys[2], HIDDEN, HIDDEN)
    w4, b4 = lin(keys[3], HIDDEN, OUT_DIM)
    g1, be1, m1, v1 = bn(keys[4], HIDDEN)
    g2, be2, m2, v2 = bn(keys[5], HIDDEN)
    g3, be3, m3, v3 = bn(keys[6], HIDDEN)

    embs = [
        jax.random.normal(keys[7], (num_tracks, EMB_DIM), jnp.float32),
        jax.random.normal(keys[8], (num_drivers, EMB_DIM), jnp.float32),
        jax.random.normal(keys[9], (num_teams, EMB_DIM), jnp.float32),
        jax.random.normal(keys[10], (2, EMB_DIM), jnp.float32),
    ]
    bias = 0.1 * jax.random.normal(keys[11], (), jnp.float32)

    return {
        "W": [w1, w2, w3, w4], "b": [b1, b2, b3, b4],
        "gamma": [g1, g2, g3], "beta": [be1, be2, be3],
        "mean": [m1, m2, m3], "var": [v1, v2, v3],
        "embs": embs, "bias": bias,
    }


def prepare_kernel_params(raw):
    """Fold BN_i into Linear_{i+1} and the scalar bias into b4; cast weights to bf16."""
    s = [raw["gamma"][i] / jnp.sqrt(raw["var"][i] + BN_EPS) for i in range(NUM_LAYERS)]
    t = [raw["beta"][i] - raw["mean"][i] * s[i] for i in range(NUM_LAYERS)]

    w1 = raw["W"][0]
    b1 = raw["b"][0]
    w2 = s[0][:, None] * raw["W"][1]
    b2 = raw["b"][1] + t[0] @ raw["W"][1]
    w3 = s[1][:, None] * raw["W"][2]
    b3 = raw["b"][2] + t[1] @ raw["W"][2]
    w4 = s[2][:, None] * raw["W"][3]
    # (bias * mask).sum / mask.sum == bias  =>  bias folds exactly into b4
    b4 = raw["b"][3] + t[2] @ raw["W"][3] + raw["bias"]

    return {
        "w1": w1.astype(jnp.bfloat16), "b1": b1.reshape(1, -1),
        "w2": w2.astype(jnp.bfloat16), "b2": b2.reshape(1, -1),
        "w3": w3.astype(jnp.bfloat16), "b3": b3.reshape(1, -1),
        "w4": w4.astype(jnp.bfloat16), "b4": b4.reshape(1, -1),
        "embs": raw["embs"],
    }


if __name__ == "__main__":
    B = 8
    num_drivers, num_tracks, num_teams = 20, 6, 10

    key = jax.random.PRNGKey(0)
    kp, kl, kw_, ke, kc = jax.random.split(key, 5)
    raw = init_raw_params(kp, num_drivers, num_tracks, num_teams)
    kparams = prepare_kernel_params(raw)

    batched_lap = jax.random.normal(kl, (B, 6), jnp.float32)      # unused by forward
    batched_weather = jax.random.normal(kw_, (B, 6), jnp.float32)  # unused by forward
    kc1, kc2, kc3, kc4, kc5 = jax.random.split(kc, 5)
    batched_cons = jnp.stack(
        [
            jax.random.randint(kc1, (B,), 0, num_tracks),
            jax.random.randint(kc2, (B,), 0, num_drivers),
            jax.random.randint(kc3, (B,), 0, num_teams),
            jax.random.randint(kc4, (B,), 0, 2),
            jax.random.randint(kc5, (B,), 0, 8),   # trailing column used as raw feature
        ],
        axis=1,
    ).astype(jnp.int32)
    batched_events = (jax.random.uniform(ke, (B, OUT_DIM)) < 0.5).astype(jnp.float32)
    batched_events = batched_events.at[:, 0].set(1.0)   # avoid all-zero mask rows

    fwd = jax.jit(racenet_forward)
    out = fwd(kparams, batched_lap, batched_cons, batched_weather, batched_events)
    out = jax.block_until_ready(out)
    assert out.shape == (B,), out.shape

    ref_q = reference_kernel_math(kparams, batched_cons, batched_events)
    ref_s = reference_semantic(raw, batched_lap, batched_cons, batched_weather, batched_events)
    assert jnp.allclose(out, ref_q, atol=1e-3, rtol=1e-3), (out, ref_q)       # kernel math
    assert jnp.allclose(out, ref_s, atol=3e-2, rtol=3e-2), (out, ref_s)       # bf16 vs f32

    print("KERNEL_OK")
</pallas_src>

<mosaic_0001>
module attributes {stable_mosaic.version = 11 : i64} {
  func.func @racenet_mlp_kernel(%arg0: i32, %arg1: memref<8x41xf32, #tpu.memory_space<vmem>>, %arg2: memref<8x7xf32, #tpu.memory_space<vmem>>, %arg3: memref<41x640xbf16, #tpu.memory_space<vmem>>, %arg4: memref<1x640xf32, #tpu.memory_space<vmem>>, %arg5: memref<640x640xbf16, #tpu.memory_space<vmem>>, %arg6: memref<1x640xf32, #tpu.memory_space<vmem>>, %arg7: memref<640x640xbf16, #tpu.memory_space<vmem>>, %arg8: memref<1x640xf32, #tpu.memory_space<vmem>>, %arg9: memref<640x7xbf16, #tpu.memory_space<vmem>>, %arg10: memref<1x7xf32, #tpu.memory_space<vmem>>, %arg11: memref<8x1xf32, #tpu.memory_space<vmem>>) attributes {dimension_semantics = [#tpu.dimension_semantics<parallel>], iteration_bounds = array<i64: 1>, scalar_prefetch = 0 : i64, scratch_operands = 0 : i64, tpu.core_type = #tpu.core_type<tc>, window_params = [{transform_indices = @transform_0, window_bounds = array<i64: 8, 41>}, {transform_indices = @transform_1, window_bounds = array<i64: 8, 7>}, {pipeline_mode = #tpu.pipeline_mode<synchronous>, transform_indices = @transform_2, window_bounds = array<i64: 41, 640>}, {pipeline_mode = #tpu.pipeline_mode<synchronous>, transform_indices = @transform_3, window_bounds = array<i64: 1, 640>}, {pipeline_mode = #tpu.pipeline_mode<synchronous>, transform_indices = @transform_4, window_bounds = array<i64: 640, 640>}, {pipeline_mode = #tpu.pipeline_mode<synchronous>, transform_indices = @transform_5, window_bounds = array<i64: 1, 640>}, {pipeline_mode = #tpu.pipeline_mode<synchronous>, transform_indices = @transform_6, window_bounds = array<i64: 640, 640>}, {pipeline_mode = #tpu.pipeline_mode<synchronous>, transform_indices = @transform_7, window_bounds = array<i64: 1, 640>}, {pipeline_mode = #tpu.pipeline_mode<synchronous>, transform_indices = @transform_8, window_bounds = array<i64: 640, 7>}, {pipeline_mode = #tpu.pipeline_mode<synchronous>, transform_indices = @transform_9, window_bounds = array<i64: 1, 7>}, {transform_indices = @transform_10, window_bounds = array<i64: 8, 1>}]} {
    %c0 = arith.constant 0 : index
    %c0_0 = arith.constant 0 : index
    %0 = vector.load %arg1[%c0, %c0_0] : memref<8x41xf32, #tpu.memory_space<vmem>>, vector<8x41xf32>
    %1 = arith.truncf %0 : vector<8x41xf32> to vector<8x41xbf16>
    %c0_1 = arith.constant 0 : index
    %c0_2 = arith.constant 0 : index
    %2 = vector.load %arg3[%c0_1, %c0_2] : memref<41x640xbf16, #tpu.memory_space<vmem>>, vector<41x640xbf16>
    %cst = arith.constant dense<0.000000e+00> : vector<8x640xf32>
    %3 = tpu.matmul %1, %2, %cst {dimension_numbers = #tpu.dot_dimension_numbers<[1], [0], [0], [1], [0, 0, 1, 1], [], []>} : vector<8x41xbf16>, vector<41x640xbf16>, vector<8x640xf32> -> vector<8x640xf32>
    %c0_3 = arith.constant 0 : index
    %c0_4 = arith.constant 0 : index
    %4 = vector.load %arg4[%c0_3, %c0_4] : memref<1x640xf32, #tpu.memory_space<vmem>>, vector<1x640xf32>
    %5 = vector.broadcast %4 : vector<1x640xf32> to vector<8x640xf32>
    %6 = arith.addf %3, %5 : vector<8x640xf32>
    %cst_5 = arith.constant 0.000000e+00 : f32
    %7 = vector.broadcast %cst_5 : f32 to vector<8x640xf32>
    %8 = arith.maximumf %6, %7 : vector<8x640xf32>
    %9 = arith.truncf %8 : vector<8x640xf32> to vector<8x640xbf16>
    %c0_6 = arith.constant 0 : index
    %c0_7 = arith.constant 0 : index
    %10 = vector.load %arg5[%c0_6, %c0_7] : memref<640x640xbf16, #tpu.memory_space<vmem>>, vector<640x640xbf16>
    %cst_8 = arith.constant dense<0.000000e+00> : vector<8x640xf32>
    %11 = tpu.matmul %9, %10, %cst_8 {dimension_numbers = #tpu.dot_dimension_numbers<[1], [0], [0], [1], [0, 0, 1, 1], [], []>} : vector<8x640xbf16>, vector<640x640xbf16>, vector<8x640xf32> -> vector<8x640xf32>
    %c0_9 = arith.constant 0 : index
    %c0_10 = arith.constant 0 : index
    %12 = vector.load %arg6[%c0_9, %c0_10] : memref<1x640xf32, #tpu.memory_space<vmem>>, vector<1x640xf32>
    %13 = vector.broadcast %12 : vector<1x640xf32> to vector<8x640xf32>
    %14 = arith.addf %11, %13 : vector<8x640xf32>
    %cst_11 = arith.constant 0.000000e+00 : f32
    %15 = vector.broadcast %cst_11 : f32 to vector<8x640xf32>
    %16 = arith.maximumf %14, %15 : vector<8x640xf32>
    %17 = arith.truncf %16 : vector<8x640xf32> to vector<8x640xbf16>
    %c0_12 = arith.constant 0 : index
    %c0_13 = arith.constant 0 : index
    %18 = vector.load %arg7[%c0_12, %c0_13] : memref<640x640xbf16, #tpu.memory_space<vmem>>, vector<640x640xbf16>
    %cst_14 = arith.constant dense<0.000000e+00> : vector<8x640xf32>
    %19 = tpu.matmul %17, %18, %cst_14 {dimension_numbers = #tpu.dot_dimension_numbers<[1], [0], [0], [1], [0, 0, 1, 1], [], []>} : vector<8x640xbf16>, vector<640x640xbf16>, vector<8x640xf32> -> vector<8x640xf32>
    %c0_15 = arith.constant 0 : index
    %c0_16 = arith.constant 0 : index
    %20 = vector.load %arg8[%c0_15, %c0_16] : memref<1x640xf32, #tpu.memory_space<vmem>>, vector<1x640xf32>
    %21 = vector.broadcast %20 : vector<1x640xf32> to vector<8x640xf32>
    %22 = arith.addf %19, %21 : vector<8x640xf32>
    %cst_17 = arith.constant 0.000000e+00 : f32
    %23 = vector.broadcast %cst_17 : f32 to vector<8x640xf32>
    %24 = arith.maximumf %22, %23 : vector<8x640xf32>
    %25 = arith.truncf %24 : vector<8x640xf32> to vector<8x640xbf16>
    %c0_18 = arith.constant 0 : index
    %c0_19 = arith.constant 0 : index
    %26 = vector.load %arg9[%c0_18, %c0_19] : memref<640x7xbf16, #tpu.memory_space<vmem>>, vector<640x7xbf16>
    %cst_20 = arith.constant dense<0.000000e+00> : vector<8x7xf32>
    %27 = tpu.matmul %25, %26, %cst_20 {dimension_numbers = #tpu.dot_dimension_numbers<[1], [0], [0], [1], [0, 0, 1, 1], [], []>} : vector<8x640xbf16>, vector<640x7xbf16>, vector<8x7xf32> -> vector<8x7xf32>
    %c0_21 = arith.constant 0 : index
    %c0_22 = arith.constant 0 : index
    %28 = vector.load %arg10[%c0_21, %c0_22] : memref<1x7xf32, #tpu.memory_space<vmem>>, vector<1x7xf32>
    %29 = vector.broadcast %28 : vector<1x7xf32> to vector<8x7xf32>
    %30 = arith.addf %27, %29 : vector<8x7xf32>
    %c0_23 = arith.constant 0 : index
    %c0_24 = arith.constant 0 : index
    %31 = vector.load %arg2[%c0_23, %c0_24] : memref<8x7xf32, #tpu.memory_space<vmem>>, vector<8x7xf32>
    %32 = arith.mulf %30, %31 : vector<8x7xf32>
    %cst_25 = arith.constant dense<0.000000e+00> : vector<8xf32>
    %33 = vector.multi_reduction <add>, %32, %cst_25 [1] : vector<8x7xf32> to vector<8xf32>
    %34 = vector.shape_cast %33 : vector<8xf32> to vector<8x1xf32>
    %cst_26 = arith.constant dense<0.000000e+00> : vector<8xf32>
    %35 = vector.multi_reduction <add>, %31, %cst_26 [1] : vector<8x7xf32> to vector<8xf32>
    %36 = vector.shape_cast %35 : vector<8xf32> to vector<8x1xf32>
    %37 = arith.divf %34, %36 : vector<8x1xf32>
    %c0_27 = arith.constant 0 : index
    %c0_28 = arith.constant 0 : index
    %38 = vector.load %arg11[%c0_27, %c0_28] : memref<8x1xf32, #tpu.memory_space<vmem>>, vector<8x1xf32>
    tpu.vector_store %arg11[%c0_27, %c0_28], %37 {strides = array<i32>} : memref<8x1xf32, #tpu.memory_space<vmem>>, vector<8x1xf32>,
    return
  }
  func.func @transform_0(%arg0: i32) -> (i32, i32) {
    %c0_i32 = arith.constant 0 : i32
    %c0_i32_0 = arith.constant 0 : i32
    return %arg0, %c0_i32 : i32, i32
  }
  func.func @transform_1(%arg0: i32) -> (i32, i32) {
    %c0_i32 = arith.constant 0 : i32
    %c0_i32_0 = arith.constant 0 : i32
    return %arg0, %c0_i32 : i32, i32
  }
  func.func @transform_2(%arg0: i32) -> (i32, i32) {
    %c0_i32 = arith.constant 0 : i32
    %c0_i32_0 = arith.constant 0 : i32
    %c0_i32_1 = arith.constant 0 : i32
    return %c0_i32, %c0_i32_0 : i32, i32
  }
  func.func @transform_3(%arg0: i32) -> (i32, i32) {
    %c0_i32 = arith.constant 0 : i32
    %c0_i32_0 = arith.constant 0 : i32
    %c0_i32_1 = arith.constant 0 : i32
    return %c0_i32, %c0_i32_0 : i32, i32
  }
  func.func @transform_4(%arg0: i32) -> (i32, i32) {
    %c0_i32 = arith.constant 0 : i32
    %c0_i32_0 = arith.constant 0 : i32
    %c0_i32_1 = arith.constant 0 : i32
    return %c0_i32, %c0_i32_0 : i32, i32
  }
  func.func @transform_5(%arg0: i32) -> (i32, i32) {
    %c0_i32 = arith.constant 0 : i32
    %c0_i32_0 = arith.constant 0 : i32
    %c0_i32_1 = arith.constant 0 : i32
    return %c0_i32, %c0_i32_0 : i32, i32
  }
  func.func @transform_6(%arg0: i32) -> (i32, i32) {
    %c0_i32 = arith.constant 0 : i32
    %c0_i32_0 = arith.constant 0 : i32
    %c0_i32_1 = arith.constant 0 : i32
    return %c0_i32, %c0_i32_0 : i32, i32
  }
  func.func @transform_7(%arg0: i32) -> (i32, i32) {
    %c0_i32 = arith.constant 0 : i32
    %c0_i32_0 = arith.constant 0 : i32
    %c0_i32_1 = arith.constant 0 : i32
    return %c0_i32, %c0_i32_0 : i32, i32
  }
  func.func @transform_8(%arg0: i32) -> (i32, i32) {
    %c0_i32 = arith.constant 0 : i32
    %c0_i32_0 = arith.constant 0 : i32
    %c0_i32_1 = arith.constant 0 : i32
    return %c0_i32, %c0_i32_0 : i32, i32
  }
  func.func @transform_9(%arg0: i32) -> (i32, i32) {
    %c0_i32 = arith.constant 0 : i32
    %c0_i32_0 = arith.constant 0 : i32
    %c0_i32_1 = arith.constant 0 : i32
    return %c0_i32, %c0_i32_0 : i32, i32
  }
  func.func @transform_10(%arg0: i32) -> (i32, i32) {
    %c0_i32 = arith.constant 0 : i32
    %c0_i32_0 = arith.constant 0 : i32
    return %arg0, %c0_i32 : i32, i32
  }
}

</mosaic_0001>

<llo_original>
// kernel: racenet_forward.1
$region0: #{racenet_forward.1}
  #allocation0 [shape = 'u32[]', space=smem, size = 0x4, offset = 0x4, fixed_abs, tag = 'smem constant byte address 0x4 - core index']
  #allocation1 [shape = 'u32[144,128]{1,0:T(1,128)}', space=vmem, size = 0x12000, scoped, tag = 'internal scratch']
  %s0 = inlined_call_operand.vmem [shape: f32[8,41], index: 0, kind: input, shape index: {}]
  %s1 = inlined_call_operand.vmem [shape: f32[8,7], index: 1, kind: input, shape index: {}]
  %s2 = inlined_call_operand.vmem [shape: bf16[41,640], index: 2, kind: input, shape index: {}]
  %s3 = inlined_call_operand.vmem [shape: f32[1,640], index: 3, kind: input, shape index: {}]
  %s4 = inlined_call_operand.hbm [shape: bf16[640,640], index: 4, kind: input, shape index: {}]
  %s5 = inlined_call_operand.vmem [shape: f32[1,640], index: 5, kind: input, shape index: {}]
  %s6 = inlined_call_operand.hbm [shape: bf16[640,640], index: 6, kind: input, shape index: {}]
  %s7 = inlined_call_operand.vmem [shape: f32[1,640], index: 7, kind: input, shape index: {}]
  %s8 = inlined_call_operand.vmem [shape: bf16[640,7], index: 8, kind: input, shape index: {}]
  %s9 = inlined_call_operand.vmem [shape: f32[1,7], index: 9, kind: input, shape index: {}]
  %s10 = inlined_call_operand.vmem [shape: f32[8,1], index: 10, kind: output, shape index: {}]
  %s11 = sld [smem:[#allocation0]]
  $region58: #{racenet_forward.1} parent=0
    _
  %s13 = ssub.s32 1, %s11
  %s14 = scalar_select 0, %s13, %s11
  $region1: #{racenet_forward.1} parent=0
    #allocation2 [shape = 'u8[819200]{0}', space=vmem, size = 0xc8000, scoped, tag = 'input window, operand 4, single buffered']
    #allocation3 [shape = 's32[1]{0}', space=sflag, size = 0x4, scoped, tag = 'scoped memory for racenet_forward.1']
    #allocation4 [shape = 'u8[819200]{0}', space=vmem, size = 0xc8000, scoped, tag = 'input window, operand 6, single buffered']
    #allocation5 [shape = 's32[1]{0}', space=sflag, size = 0x4, scoped, tag = 'scoped memory for racenet_forward.1']
    %15 = vsyncpa [#allocation3], 0
    %16 = vsyncpa [#allocation5], 0
    // Predicated region
    $region2: #{racenet_forward.1} parent=1 // pred_check
      _
    $region3: #{racenet_forward.1} parent=1 // pred_check_branch
      %18 = sbr.rel (0) target = $region5
    $region4: #{racenet_forward.1} parent=1 // pred_region
      _
    $region5: #{racenet_forward.1} parent=1 // pred_fallthru
      _
    // Predicated region
    $region6: #{racenet_forward.1} parent=1 // pred_check
      _
    $region7: #{racenet_forward.1} parent=1 // pred_check_branch
      %20 = sbr.rel (0) target = $region9
    $region8: #{racenet_forward.1} parent=1 // pred_region
      _
    $region9: #{racenet_forward.1} parent=1 // pred_fallthru
      _
    // Predicated region
    $region10: #{racenet_forward.1} parent=1 // pred_check
      _
    $region11: #{racenet_forward.1} parent=1 // pred_check_branch
      %22 = sbr.rel (0) target = $region13
    $region12: #{racenet_forward.1} parent=1 // pred_region
      _
    $region13: #{racenet_forward.1} parent=1 // pred_fallthru
      _
    // Predicated region
    $region14: #{racenet_forward.1} parent=1 // pred_check
      _
    $region15: #{racenet_forward.1} parent=1 // pred_check_branch
      %24 = sbr.rel (0) target = $region17
    $region16: #{racenet_forward.1} parent=1 // pred_region
      _
    $region17: #{racenet_forward.1} parent=1 // pred_fallthru
      _
    // Predicated region
    $region18: #{racenet_forward.1} parent=1 // pred_check
      _
    $region19: #{racenet_forward.1} parent=1 // pred_check_branch
      %26 = sbr.rel (0) target = $region21
    $region20: #{racenet_forward.1} parent=1 // pred_region
      %s28 = ssub.s32 25600, 25600
      %29 = vsyncadd [#allocation3], %s28
      %s30 = sshll.u32 [#allocation2], 4
      %s31 = int_to_ptr.vmem [resolvable:$true] %s30
      %36 = dma.hbm_to_vmem [thread:$0]  %s4, 25600, %s31, [#allocation3], 320, 320, 20
    $region21: #{racenet_forward.1} parent=1 // pred_fallthru
      _
    // Predicated region
    $region22: #{racenet_forward.1} parent=1 // pred_check
      _
    $region23: #{racenet_forward.1} parent=1 // pred_check_branch
      %38 = sbr.rel (0) target = $region25
    $region24: #{racenet_forward.1} parent=1 // pred_region
      _
    $region25: #{racenet_forward.1} parent=1 // pred_fallthru
      _
    // Predicated region
    $region26: #{racenet_forward.1} parent=1 // pred_check
      _
    $region27: #{racenet_forward.1} parent=1 // pred_check_branch
      %40 = sbr.rel (0) target = $region29
    $region28: #{racenet_forward.1} parent=1 // pred_region
      %s42 = ssub.s32 25600, 25600
      %43 = vsyncadd [#allocation5], %s42
      %s44 = sshll.u32 [#allocation4], 4
      %s45 = int_to_ptr.vmem [resolvable:$true] %s44
      %50 = dma.hbm_to_vmem [thread:$0]  %s6, 25600, %s45, [#allocation5], 320, 320, 20
    $region29: #{racenet_forward.1} parent=1 // pred_fallthru
      _
    // Predicated region
    $region30: #{racenet_forward.1} parent=1 // pred_check
      _
    $region31: #{racenet_forward.1} parent=1 // pred_check_branch
      %52 = sbr.rel (0) target = $region33
    $region32: #{racenet_forward.1} parent=1 // pred_region
      _
    $region33: #{racenet_forward.1} parent=1 // pred_fallthru
      _
    // Predicated region
    $region34: #{racenet_forward.1} parent=1 // pred_check
      _
    $region35: #{racenet_forward.1} parent=1 // pred_check_branch
      %54 = sbr.rel (0) target = $region37
    $region36: #{racenet_forward.1} parent=1 // pred_region
      _
    $region37: #{racenet_forward.1} parent=1 // pred_fallthru
      _
    // Predicated region
    $region38: #{racenet_forward.1} parent=1 // pred_check
      _
    $region39: #{racenet_forward.1} parent=1 // pred_check_branch
      %56 = sbr.rel (0) target = $region41
    $region40: #{racenet_forward.1} parent=1 // pred_region
      _
    $region41: #{racenet_forward.1} parent=1 // pred_fallthru
      _
    // Predicated region
    $region42: #{racenet_forward.1} parent=1 // pred_check
      _
    $region43: #{racenet_forward.1} parent=1 // pred_check_branch
      %58 = sbr.rel (0) target = $region45
    $region44: #{racenet_forward.1} parent=1 // pred_region
      %59 = dma.done [#allocation3], 25600
    $region45: #{racenet_forward.1} parent=1 // pred_fallthru
      _
    // Predicated region
    $region46: #{racenet_forward.1} parent=1 // pred_check
      _
    $region47: #{racenet_forward.1} parent=1 // pred_check_branch
      %61 = sbr.rel (0) target = $region49
    $region48: #{racenet_forward.1} parent=1 // pred_region
      %62 = dma.done [#allocation5], 25600
    $region49: #{racenet_forward.1} parent=1 // pred_fallthru
      _
    %v64 = vld [vmem:[%s0] sm:$0xff]
    %v65 = vpack.c.bf16 %v64, %v64
    %v66 = vld [vmem:[%s2] sm:$0xff]
    %v67 = vld [vmem:[%s2 + $0x8] sm:$0xff]
    %v68 = vld [vmem:[%s2 + $0x10] sm:$0xf]
    %v69 = vld [vmem:[%s2 + $0x14] sm:$0xff]
    %v70 = vld [vmem:[%s2 + $0x1c] sm:$0xff]
    %v71 = vld [vmem:[%s2 + $0x24] sm:$0xf]
    %v72 = vld [vmem:[%s2 + $0x28] sm:$0xff]
    %v73 = vld [vmem:[%s2 + $0x30] sm:$0xff]
    %v74 = vld [vmem:[%s2 + $0x38] sm:$0xf]
    %v75 = vld [vmem:[%s2 + $0x3c] sm:$0xff]
    %v76 = vld [vmem:[%s2 + $0x44] sm:$0xff]
    %v77 = vld [vmem:[%s2 + $0x4c] sm:$0xf]
    %v78 = vld [vmem:[%s2 + $0x50] sm:$0xff]
    %v79 = vld [vmem:[%s2 + $0x58] sm:$0xff]
    %v80 = vld [vmem:[%s2 + $0x60] sm:$0xf]
    %v81 = vld [vmem:[%s2 + $0x64] sm:$0x11]
    %v82 = vld [vmem:[%s2 + $0x6c] sm:$0x11]
    %v83 = vld [vmem:[%s2 + $0x74] sm:$0x1]
    %v84 = vld [vmem:[%s3] sm:$0x1f]
    %v86 = vlaneseq
    %v87 = vshrl.u32 %v86, 7
    %v88 = vsub.s32 0, %v87
    %v89 = vrot.slane %v84, %v88
    %v90 = vlaneseq
    %v91 = vshrl.u32 %v90, 7
    %v92 = vsub.s32 1, %v91
    %v93 = vrot.slane %v84, %v92
    %v94 = vlaneseq
    %v95 = vshrl.u32 %v94, 7
    %v96 = vsub.s32 2, %v95
    %v97 = vrot.slane %v84, %v96
    %v98 = vlaneseq
    %v99 = vshrl.u32 %v98, 7
    %v100 = vsub.s32 3, %v99
    %v101 = vrot.slane %v84, %v100
    %v102 = vlaneseq
    %v103 = vshrl.u32 %v102, 7
    %v104 = vsub.s32 4, %v103
    %v105 = vrot.slane %v84, %v104
    %v129 = vunpack.c.l.b16 %v66
    %v130 = vunpack.c.h.b16 %v66
    %v131 = vunpack.c.l.b16 %v67
    %v132 = vunpack.c.h.b16 %v67
    %v133 = vunpack.c.l.b16 %v68
    %v134 = vunpack.c.l.b16 %v69
    %v135 = vunpack.c.h.b16 %v69
    %v136 = vunpack.c.l.b16 %v70
    %v137 = vunpack.c.h.b16 %v70
    %v138 = vunpack.c.l.b16 %v71
    %v139 = vunpack.c.l.b16 %v72
    %v140 = vunpack.c.h.b16 %v72
    %v141 = vunpack.c.l.b16 %v73
    %v142 = vunpack.c.h.b16 %v73
    %v143 = vunpack.c.l.b16 %v74
    %v144 = vunpack.c.l.b16 %v75
    %v145 = vunpack.c.h.b16 %v75
    %v146 = vunpack.c.l.b16 %v76
    %v147 = vunpack.c.h.b16 %v76
    %v148 = vunpack.c.l.b16 %v77
    %v149 = vunpack.c.l.b16 %v78
    %v150 = vunpack.c.h.b16 %v78
    %v151 = vunpack.c.l.b16 %v79
    %v152 = vunpack.c.h.b16 %v79
    %v153 = vunpack.c.l.b16 %v80
    %v154 = vunpack.c.l.b16 %v81
    %v155 = vunpack.c.h.b16 %v81
    %v156 = vunpack.c.l.b16 %v82
    %v157 = vunpack.c.h.b16 %v82
    %v158 = vunpack.c.l.b16 %v83
    %v159 = vpack.c.b16 %v134, %v129
    %v160 = vpack.c.b16 %v135, %v130
    %v161 = vpack.c.b16 %v136, %v131
    %v162 = vpack.c.b16 %v137, %v132
    %v163 = vpack.c.b16 %v138, %v133
    %v164 = vpack.c.b16 %v144, %v139
    %v165 = vpack.c.b16 %v145, %v140
    %v166 = vpack.c.b16 %v146, %v141
    %v167 = vpack.c.b16 %v147, %v142
    %v168 = vpack.c.b16 %v148, %v143
    %v169 = vpack.c.b16 %v154, %v149
    %v170 = vpack.c.b16 %v155, %v150
    %v171 = vpack.c.b16 %v156, %v151
    %v172 = vpack.c.b16 %v157, %v152
    %v173 = vpack.c.b16 %v158, %v153
    %vm184 = vcmask 334848
    %v186 = vsel %vm184, %v65, 0
    %vm188 = vcmask 1043456
    %vm189 = vcmask 1044480
    %v190 = vsel %vm188, 4294967295, 65535
    %v191 = vsel %vm189, %v190, 0
    %v193 = vand.u32 %v169, %v191
    %v196 = vand.u32 %v170, %v191
    %v199 = vand.u32 %v171, %v191
    %v202 = vand.u32 %v172, %v191
    %v205 = vand.u32 %v173, %v191
    %207 = vmatprep.subr.bf16.mxu0 %v160
    %208 = vmatpush1.bf16.msra.mxu0 %v159
    %209 = vmatprep.subr.bf16.mxu0 %v165
    %210 = vmatpush1.bf16.msra.mxu0 %v164
    %211 = vmatprep.subr.bf16.mxu0 %v196
    %212 = vmatpush1.bf16.msra.mxu0 %v193
    %213 = vmatprep.subr.bf16.mxu0 0
    %214 = vmatpush1.bf16.msra.mxu0 0
    %215 = vmatprep.subr.bf16.mxu0 0
    %216 = vmatpush1.bf16.msra.mxu0 0
    %217 = vmatprep.subr.bf16.mxu0 0
    %218 = vmatpush1.bf16.msra.mxu0 0
    %219 = vmatprep.subr.bf16.mxu0 0
    %220 = vmatpush1.bf16.msra.mxu0 0
    %221 = vmatprep.subr.bf16.mxu0 0
    %222 = vmatpush1.bf16.msra.mxu0 0
    %223 = vmatprep.subr.bf16.mxu0 0
    %224 = vmatpush1.bf16.msra.mxu0 0
    %225 = vmatprep.subr.bf16.mxu0 0
    %226 = vmatpush1.bf16.msra.mxu0 0
    %227 = vmatprep.subr.bf16.mxu0 0
    %228 = vmatpush1.bf16.msra.mxu0 0
    %229 = vmatprep.subr.bf16.mxu0 0
    %230 = vmatpush1.bf16.msra.mxu0 0
    %231 = vmatprep.subr.bf16.mxu0 0
    %232 = vmatpush1.bf16.msra.mxu0 0
    %233 = vmatprep.subr.bf16.mxu0 0
    %234 = vmatpush1.bf16.msra.mxu0 0
    %235 = vmatprep.subr.bf16.mxu0 0
    %236 = vmatpush1.bf16.msra.mxu0 0
    %237 = vmatprep.subr.bf16.mxu0 0
    %238 = vmatpush1.bf16.msra.mxu0 0
    %239 = vmatprep.mubr.bf16.mxu0 0
    %240 = vmatmul.mubr.bf16.gmra.mrb[0].mxu0 %v186
    %v241 = vpop.f32.mrb[0].mxu0
    %v242 = vadd.f32 %v89, %v241
    %v243 = vpop.f32.mrb[0].mxu0
    %v244 = vadd.f32 %v93, %v243
    %v245 = vpop.f32.mrb[0].mxu0
    %v246 = vpop.f32.mrb[0].mxu0
    %247 = vdwg.mxu0
    %248 = vmatprep.subr.bf16.mxu0 %v162
    %249 = vmatpush1.bf16.msra.mxu0 %v161
    %250 = vmatprep.subr.bf16.mxu0 %v167
    %251 = vmatpush1.bf16.msra.mxu0 %v166
    %252 = vmatprep.subr.bf16.mxu0 %v202
    %253 = vmatpush1.bf16.msra.mxu0 %v199
    %254 = vmatprep.subr.bf16.mxu0 0
    %255 = vmatpush1.bf16.msra.mxu0 0
    %256 = vmatprep.subr.bf16.mxu0 0
    %257 = vmatpush1.bf16.msra.mxu0 0
    %258 = vmatprep.subr.bf16.mxu0 0
    %259 = vmatpush1.bf16.msra.mxu0 0
    %260 = vmatprep.subr.bf16.mxu0 0
    %261 = vmatpush1.bf16.msra.mxu0 0
    %262 = vmatprep.subr.bf16.mxu0 0
    %263 = vmatpush1.bf16.msra.mxu0 0
    %264 = vmatprep.subr.bf16.mxu0 0
    %265 = vmatpush1.bf16.msra.mxu0 0
    %266 = vmatprep.subr.bf16.mxu0 0
    %267 = vmatpush1.bf16.msra.mxu0 0
    %268 = vmatprep.subr.bf16.mxu0 0
    %269 = vmatpush1.bf16.msra.mxu0 0
    %270 = vmatprep.subr.bf16.mxu0 0
    %271 = vmatpush1.bf16.msra.mxu0 0
    %272 = vmatprep.subr.bf16.mxu0 0
    %273 = vmatpush1.bf16.msra.mxu0 0
    %274 = vmatprep.subr.bf16.mxu0 0
    %275 = vmatpush1.bf16.msra.mxu0 0
    %276 = vmatprep.subr.bf16.mxu0 0
    %277 = vmatpush1.bf16.msra.mxu0 0
    %278 = vmatprep.subr.bf16.mxu0 0
    %279 = vmatpush1.bf16.msra.mxu0 0
    %280 = vmatprep.mubr.bf16.mxu0 0
    %281 = vmatmul.mubr.bf16.gmra.mrb[0].mxu0 %v186
    %v282 = vpop.f32.mrb[0].mxu0
    %v283 = vadd.f32 %v97, %v282
    %v284 = vpop.f32.mrb[0].mxu0
    %v285 = vadd.f32 %v101, %v284
    %v286 = vpop.f32.mrb[0].mxu0
    %v287 = vpop.f32.mrb[0].mxu0
    %288 = vdwg.mxu0
    %289 = vmatprep.subr.bf16.mxu0 0
    %290 = vmatpush1.bf16.msra.mxu0 %v163
    %291 = vmatprep.subr.bf16.mxu0 0
    %292 = vmatpush1.bf16.msra.mxu0 %v168
    %293 = vmatprep.subr.bf16.mxu0 0
    %294 = vmatpush1.bf16.msra.mxu0 %v205
    %295 = vmatprep.subr.bf16.mxu0 0
    %296 = vmatpush1.bf16.msra.mxu0 0
    %297 = vmatprep.subr.bf16.mxu0 0
    %298 = vmatpush1.bf16.msra.mxu0 0
    %299 = vmatprep.subr.bf16.mxu0 0
    %300 = vmatpush1.bf16.msra.mxu0 0
    %301 = vmatprep.subr.bf16.mxu0 0
    %302 = vmatpush1.bf16.msra.mxu0 0
    %303 = vmatprep.subr.bf16.mxu0 0
    %304 = vmatpush1.bf16.msra.mxu0 0
    %305 = vmatprep.subr.bf16.mxu0 0
    %306 = vmatpush1.bf16.msra.mxu0 0
    %307 = vmatprep.subr.bf16.mxu0 0
    %308 = vmatpush1.bf16.msra.mxu0 0
    %309 = vmatprep.subr.bf16.mxu0 0
    %310 = vmatpush1.bf16.msra.mxu0 0
    %311 = vmatprep.subr.bf16.mxu0 0
    %312 = vmatpush1.bf16.msra.mxu0 0
    %313 = vmatprep.subr.bf16.mxu0 0
    %314 = vmatpush1.bf16.msra.mxu0 0
    %315 = vmatprep.subr.bf16.mxu0 0
    %316 = vmatpush1.bf16.msra.mxu0 0
    %317 = vmatprep.subr.bf16.mxu0 0
    %318 = vmatpush1.bf16.msra.mxu0 0
    %319 = vmatprep.subr.bf16.mxu0 0
    %320 = vmatpush1.bf16.msra.mxu0 0
    %321 = vmatprep.mubr.bf16.mxu0 0
    %322 = vmatmul.mubr.bf16.gmra.mrb[0].mxu0 %v186
    %v323 = vpop.f32.mrb[0].mxu0
    %v324 = vadd.f32 %v105, %v323
    %v325 = vpop.f32.mrb[0].mxu0
    %v326 = vpop.f32.mrb[0].mxu0
    %v327 = vpop.f32.mrb[0].mxu0
    %328 = vdwg.mxu0
    %v329 = vmax.f32 %v242, 0.0
    %v330 = vmax.f32 %v244, 0.0
    %v331 = vmax.f32 %v283, 0.0
    %v332 = vmax.f32 %v285, 0.0
    %v333 = vmax.f32 %v324, 0.0
    %v334 = vpack.c.bf16 %v329, %v329
    %v335 = vpack.c.bf16 %v330, %v330
    %v336 = vpack.c.bf16 %v331, %v331
    %v337 = vpack.c.bf16 %v332, %v332
    %v338 = vpack.c.bf16 %v333, %v333
    %v339 = vld [vmem:[#allocation2] sm:$0xff]
    %v340 = vld [vmem:[#allocation2 + $0x8] sm:$0xff]
    %v341 = vld [vmem:[#allocation2 + $0x10] sm:$0xf]
    %v342 = vld [vmem:[#allocation2 + $0x14] sm:$0xff]
    %v343 = vld [vmem:[#allocation2 + $0x1c] sm:$0xff]
    %v344 = vld [vmem:[#allocation2 + $0x24] sm:$0xf]
    %v345 = vld [vmem:[#allocation2 + $0x28] sm:$0xff]
    %v346 = vld [vmem:[#allocation2 + $0x30] sm:$0xff]
    %v347 = vld [vmem:[#allocation2 + $0x38] sm:$0xf]
    %v348 = vld [vmem:[#allocation2 + $0x3c] sm:$0xff]
    %v349 = vld [vmem:[#allocation2 + $0x44] sm:$0xff]
    %v350 = vld [vmem:[#allocation2 + $0x4c] sm:$0xf]
    %v351 = vld [vmem:[#allocation2 + $0x50] sm:$0xff]
    %v352 = vld [vmem:[#allocation2 + $0x58] sm:$0xff]
    %v353 = vld [vmem:[#allocation2 + $0x60] sm:$0xf]
    %v354 = vld [vmem:[#allocation2 + $0x64] sm:$0xff]
    %v355 = vld [vmem:[#allocation2 + $0x6c] sm:$0xff]
    %v356 = vld [vmem:[#allocation2 + $0x74] sm:$0xf]
    %v357 = vld [vmem:[#allocation2 + $0x78] sm:$0xff]
    %v358 = vld [vmem:[#allocation2 + $0x80] sm:$0xff]
    %v359 = vld [vmem:[#allocation2 + $0x88] sm:$0xf]
    %v360 = vld [vmem:[#allocation2 + $0x8c] sm:$0xff]
    %v361 = vld [vmem:[#allocation2 + $0x94] sm:$0xff]
    %v362 = vld [vmem:[#allocation2 + $0x9c] sm:$0xf]
    %v363 = vld [vmem:[#allocation2 + $0xa0] sm:$0xff]
    %v364 = vld [vmem:[#allocation2 + $0xa8] sm:$0xff]
    %v365 = vld [vmem:[#allocation2 + $0xb0] sm:$0xf]
    %v366 = vld [vmem:[#allocation2 + $0xb4] sm:$0xff]
    %v367 = vld [vmem:[#allocation2 + $0xbc] sm:$0xff]
    %v368 = vld [vmem:[#allocation2 + $0xc4] sm:$0xf]
    %v369 = vld [vmem:[#allocation2 + $0xc8] sm:$0xff]
    %v370 = vld [vmem:[#allocation2 + $0xd0] sm:$0xff]
    %v371 = vld [vmem:[#allocation2 + $0xd8] sm:$0xf]
    %v372 = vld [vmem:[#allocation2 + $0xdc] sm:$0xff]
    %v373 = vld [vmem:[#allocation2 + $0xe4] sm:$0xff]
    %v374 = vld [vmem:[#allocation2 + $0xec] sm:$0xf]
    %v375 = vld [vmem:[#allocation2 + $0xf0] sm:$0xff]
    %v376 = vld [vmem:[#allocation2 + $0xf8] sm:$0xff]
    %v377 = vld [vmem:[#allocation2 + $0x100] sm:$0xf]
    %v378 = vld [vmem:[#allocation2 + $0x104] sm:$0xff]
    %v379 = vld [vmem:[#allocation2 + $0x10c] sm:$0xff]
    %v380 = vld [vmem:[#allocation2 + $0x114] sm:$0xf]
    %v381 = vld [vmem:[#allocation2 + $0x118] sm:$0xff]
    %v382 = vld [vmem:[#allocation2 + $0x120] sm:$0xff]
    %v383 = vld [vmem:[#allocation2 + $0x128] sm:$0xf]
    %v384 = vld [vmem:[#allocation2 + $0x12c] sm:$0xff]
    %v385 = vld [vmem:[#allocation2 + $0x134] sm:$0xff]
    %v386 = vld [vmem:[#allocation2 + $0x13c] sm:$0xf]
    %v387 = vld [vmem:[#allocation2 + $0x140] sm:$0xff]
    %v388 = vld [vmem:[#allocation2 + $0x148] sm:$0xff]
    %v389 = vld [vmem:[#allocation2 + $0x150] sm:$0xf]
    %v390 = vld [vmem:[#allocation2 + $0x154] sm:$0xff]
    %v391 = vld [vmem:[#allocation2 + $0x15c] sm:$0xff]
    %v392 = vld [vmem:[#allocation2 + $0x164] sm:$0xf]
    %v393 = vld [vmem:[#allocation2 + $0x168] sm:$0xff]
    %v394 = vld [vmem:[#allocation2 + $0x170] sm:$0xff]
    %v395 = vld [vmem:[#allocation2 + $0x178] sm:$0xf]
    %v396 = vld [vmem:[#allocation2 + $0x17c] sm:$0xff]
    %v397 = vld [vmem:[#allocation2 + $0x184] sm:$0xff]
    %v398 = vld [vmem:[#allocation2 + $0x18c] sm:$0xf]
    %v399 = vld [vmem:[#allocation2 + $0x190] sm:$0xff]
    %v400 = vld [vmem:[#allocation2 + $0x198] sm:$0xff]
    %v401 = vld [vmem:[#allocation2 + $0x1a0] sm:$0xf]
    %v402 = vld [vmem:[#allocation2 + $0x1a4] sm:$0xff]
    %v403 = vld [vmem:[#allocation2 + $0x1ac] sm:$0xff]
    %v404 = vld [vmem:[#allocation2 + $0x1b4] sm:$0xf]
    %v405 = vld [vmem:[#allocation2 + $0x1b8] sm:$0xff]
    %v406 = vld [vmem:[#allocation2 + $0x1c0] sm:$0xff]
    %v407 = vld [vmem:[#allocation2 + $0x1c8] sm:$0xf]
    %v408 = vld [vmem:[#allocation2 + $0x1cc] sm:$0xff]
    %v409 = vld [vmem:[#allocation2 + $0x1d4] sm:$0xff]
    %v410 = vld [vmem:[#allocation2 + $0x1dc] sm:$0xf]
    %v411 = vld [vmem:[#allocation2 + $0x1e0] sm:$0xff]
    %v412 = vld [vmem:[#allocation2 + $0x1e8] sm:$0xff]
    %v413 = vld [vmem:[#allocation2 + $0x1f0] sm:$0xf]
    %v414 = vld [vmem:[#allocation2 + $0x1f4] sm:$0xff]
    %v415 = vld [vmem:[#allocation2 + $0x1fc] sm:$0xff]
    %v416 = vld [vmem:[#allocation2 + $0x204] sm:$0xf]
    %v417 = vld [vmem:[#allocation2 + $0x208] sm:$0xff]
    %v418 = vld [vmem:[#allocation2 + $0x210] sm:$0xff]
    %v419 = vld [vmem:[#allocation2 + $0x218] sm:$0xf]
    %v420 = vld [vmem:[#allocation2 + $0x21c] sm:$0xff]
    %v421 = vld [vmem:[#allocation2 + $0x224] sm:$0xff]
    %v422 = vld [vmem:[#allocation2 + $0x22c] sm:$0xf]
    %v423 = vld [vmem:[#allocation2 + $0x230] sm:$0xff]
    %v424 = vld [vmem:[#allocation2 + $0x238] sm:$0xff]
    %v425 = vld [vmem:[#allocation2 + $0x240] sm:$0xf]
    %v426 = vld [vmem:[#allocation2 + $0x244] sm:$0xff]
    %v427 = vld [vmem:[#allocation2 + $0x24c] sm:$0xff]
    %v428 = vld [vmem:[#allocation2 + $0x254] sm:$0xf]
    %v429 = vld [vmem:[#allocation2 + $0x258] sm:$0xff]
    %v430 = vld [vmem:[#allocation2 + $0x260] sm:$0xff]
    %v431 = vld [vmem:[#allocation2 + $0x268] sm:$0xf]
    %v432 = vld [vmem:[#allocation2 + $0x26c] sm:$0xff]
    %v433 = vld [vmem:[#allocation2 + $0x274] sm:$0xff]
    %v434 = vld [vmem:[#allocation2 + $0x27c] sm:$0xf]
    %v435 = vld [vmem:[#allocation2 + $0x280] sm:$0xff]
    %v436 = vld [vmem:[#allocation2 + $0x288] sm:$0xff]
    %v437 = vld [vmem:[#allocation2 + $0x290] sm:$0xf]
    %v438 = vld [vmem:[#allocation2 + $0x294] sm:$0xff]
    %v439 = vld [vmem:[#allocation2 + $0x29c] sm:$0xff]
    %v440 = vld [vmem:[#allocation2 + $0x2a4] sm:$0xf]
    %v441 = vld [vmem:[#allocation2 + $0x2a8] sm:$0xff]
    %v442 = vld [vmem:[#allocation2 + $0x2b0] sm:$0xff]
    %v443 = vld [vmem:[#allocation2 + $0x2b8] sm:$0xf]
    %v444 = vld [vmem:[#allocation2 + $0x2bc] sm:$0xff]
    %v445 = vld [vmem:[#allocation2 + $0x2c4] sm:$0xff]
    %v446 = vld [vmem:[#allocation2 + $0x2cc] sm:$0xf]
    %v447 = vld [vmem:[#allocation2 + $0x2d0] sm:$0xff]
    %v448 = vld [vmem:[#allocation2 + $0x2d8] sm:$0xff]
    %v449 = vld [vmem:[#allocation2 + $0x2e0] sm:$0xf]
    %v450 = vld [vmem:[#allocation2 + $0x2e4] sm:$0xff]
    %v451 = vld [vmem:[#allocation2 + $0x2ec] sm:$0xff]
    %v452 = vld [vmem:[#allocation2 + $0x2f4] sm:$0xf]
    %v453 = vld [vmem:[#allocation2 + $0x2f8] sm:$0xff]
    %v454 = vld [vmem:[#allocation2 + $0x300] sm:$0xff]
    %v455 = vld [vmem:[#allocation2 + $0x308] sm:$0xf]
    %v456 = vld [vmem:[#allocation2 + $0x30c] sm:$0xff]
    %v457 = vld [vmem:[#allocation2 + $0x314] sm:$0xff]
    %v458 = vld [vmem:[#allocation2 + $0x31c] sm:$0xf]
    %v459 = vld [vmem:[#allocation2 + $0x320] sm:$0xff]
    %v460 = vld [vmem:[#allocation2 + $0x328] sm:$0xff]
    %v461 = vld [vmem:[#allocation2 + $0x330] sm:$0xf]
    %v462 = vld [vmem:[#allocation2 + $0x334] sm:$0xff]
    %v463 = vld [vmem:[#allocation2 + $0x33c] sm:$0xff]
    %v464 = vld [vmem:[#allocation2 + $0x344] sm:$0xf]
    %v465 = vld [vmem:[#allocation2 + $0x348] sm:$0xff]
    %v466 = vld [vmem:[#allocation2 + $0x350] sm:$0xff]
    %v467 = vld [vmem:[#allocation2 + $0x358] sm:$0xf]
    %v468 = vld [vmem:[#allocation2 + $0x35c] sm:$0xff]
    %v469 = vld [vmem:[#allocation2 + $0x364] sm:$0xff]
    %v470 = vld [vmem:[#allocation2 + $0x36c] sm:$0xf]
    %v471 = vld [vmem:[#allocation2 + $0x370] sm:$0xff]
    %v472 = vld [vmem:[#allocation2 + $0x378] sm:$0xff]
    %v473 = vld [vmem:[#allocation2 + $0x380] sm:$0xf]
    %v474 = vld [vmem:[#allocation2 + $0x384] sm:$0xff]
    %v475 = vld [vmem:[#allocation2 + $0x38c] sm:$0xff]
    %v476 = vld [vmem:[#allocation2 + $0x394] sm:$0xf]
    %v477 = vld [vmem:[#allocation2 + $0x398] sm:$0xff]
    %v478 = vld [vmem:[#allocation2 + $0x3a0] sm:$0xff]
    %v479 = vld [vmem:[#allocation2 + $0x3a8] sm:$0xf]
    %v480 = vld [vmem:[#allocation2 + $0x3ac] sm:$0xff]
    %v481 = vld [vmem:[#allocation2 + $0x3b4] sm:$0xff]
    %v482 = vld [vmem:[#allocation2 + $0x3bc] sm:$0xf]
    %v483 = vld [vmem:[#allocation2 + $0x3c0] sm:$0xff]
    %v484 = vld [vmem:[#allocation2 + $0x3c8] sm:$0xff]
    %v485 = vld [vmem:[#allocation2 + $0x3d0] sm:$0xf]
    %v486 = vld [vmem:[#allocation2 + $0x3d4] sm:$0xff]
    %v487 = vld [vmem:[#allocation2 + $0x3dc] sm:$0xff]
    %v488 = vld [vmem:[#allocation2 + $0x3e4] sm:$0xf]
    %v489 = vld [vmem:[#allocation2 + $0x3e8] sm:$0xff]
    %v490 = vld [vmem:[#allocation2 + $0x3f0] sm:$0xff]
    %v491 = vld [vmem:[#allocation2 + $0x3f8] sm:$0xf]
    %v492 = vld [vmem:[#allocation2 + $0x3fc] sm:$0xff]
    %v493 = vld [vmem:[#allocation2 + $0x404] sm:$0xff]
    %v494 = vld [vmem:[#allocation2 + $0x40c] sm:$0xf]
    %v495 = vld [vmem:[#allocation2 + $0x410] sm:$0xff]
    %v496 = vld [vmem:[#allocation2 + $0x418] sm:$0xff]
    %v497 = vld [vmem:[#allocation2 + $0x420] sm:$0xf]
    %v498 = vld [vmem:[#allocation2 + $0x424] sm:$0xff]
    %v499 = vld [vmem:[#allocation2 + $0x42c] sm:$0xff]
    %v500 = vld [vmem:[#allocation2 + $0x434] sm:$0xf]
    %v501 = vld [vmem:[#allocation2 + $0x438] sm:$0xff]
    %v502 = vld [vmem:[#allocation2 + $0x440] sm:$0xff]
    %v503 = vld [vmem:[#allocation2 + $0x448] sm:$0xf]
    %v504 = vld [vmem:[#allocation2 + $0x44c] sm:$0xff]
    %v505 = vld [vmem:[#allocation2 + $0x454] sm:$0xff]
    %v506 = vld [vmem:[#allocation2 + $0x45c] sm:$0xf]
    %v507 = vld [vmem:[#allocation2 + $0x460] sm:$0xff]
    %v508 = vld [vmem:[#allocation2 + $0x468] sm:$0xff]
    %v509 = vld [vmem:[#allocation2 + $0x470] sm:$0xf]
    %v510 = vld [vmem:[#allocation2 + $0x474] sm:$0xff]
    %v511 = vld [vmem:[#allocation2 + $0x47c] sm:$0xff]
    %v512 = vld [vmem:[#allocation2 + $0x484] sm:$0xf]
    %v513 = vld [vmem:[#allocation2 + $0x488] sm:$0xff]
    %v514 = vld [vmem:[#allocation2 + $0x490] sm:$0xff]
    %v515 = vld [vmem:[#allocation2 + $0x498] sm:$0xf]
    %v516 = vld [vmem:[#allocation2 + $0x49c] sm:$0xff]
    %v517 = vld [vmem:[#allocation2 + $0x4a4] sm:$0xff]
    %v518 = vld [vmem:[#allocation2 + $0x4ac] sm:$0xf]
    %v519 = vld [vmem:[#allocation2 + $0x4b0] sm:$0xff]
    %v520 = vld [vmem:[#allocation2 + $0x4b8] sm:$0xff]
    %v521 = vld [vmem:[#allocation2 + $0x4c0] sm:$0xf]
    %v522 = vld [vmem:[#allocation2 + $0x4c4] sm:$0xff]
    %v523 = vld [vmem:[#allocation2 + $0x4cc] sm:$0xff]
    %v524 = vld [vmem:[#allocation2 + $0x4d4] sm:$0xf]
    %v525 = vld [vmem:[#allocation2 + $0x4d8] sm:$0xff]
    %v526 = vld [vmem:[#allocation2 + $0x4e0] sm:$0xff]
    %v527 = vld [vmem:[#allocation2 + $0x4e8] sm:$0xf]
    %v528 = vld [vmem:[#allocation2 + $0x4ec] sm:$0xff]
    %v529 = vld [vmem:[#allocation2 + $0x4f4] sm:$0xff]
    %v530 = vld [vmem:[#allocation2 + $0x4fc] sm:$0xf]
    %v531 = vld [vmem:[#allocation2 + $0x500] sm:$0xff]
    %v532 = vld [vmem:[#allocation2 + $0x508] sm:$0xff]
    %v533 = vld [vmem:[#allocation2 + $0x510] sm:$0xf]
    %v534 = vld [vmem:[#allocation2 + $0x514] sm:$0xff]
    %v535 = vld [vmem:[#allocation2 + $0x51c] sm:$0xff]
    %v536 = vld [vmem:[#allocation2 + $0x524] sm:$0xf]
    %v537 = vld [vmem:[#allocation2 + $0x528] sm:$0xff]
    %v538 = vld [vmem:[#allocation2 + $0x530] sm:$0xff]
    %v539 = vld [vmem:[#allocation2 + $0x538] sm:$0xf]
    %v540 = vld [vmem:[#allocation2 + $0x53c] sm:$0xff]
    %v541 = vld [vmem:[#allocation2 + $0x544] sm:$0xff]
    %v542 = vld [vmem:[#allocation2 + $0x54c] sm:$0xf]
    %v543 = vld [vmem:[#allocation2 + $0x550] sm:$0xff]
    %v544 = vld [vmem:[#allocation2 + $0x558] sm:$0xff]
    %v545 = vld [vmem:[#allocation2 + $0x560] sm:$0xf]
    %v546 = vld [vmem:[#allocation2 + $0x564] sm:$0xff]
    %v547 = vld [vmem:[#allocation2 + $0x56c] sm:$0xff]
    %v548 = vld [vmem:[#allocation2 + $0x574] sm:$0xf]
    %v549 = vld [vmem:[#allocation2 + $0x578] sm:$0xff]
    %v550 = vld [vmem:[#allocation2 + $0x580] sm:$0xff]
    %v551 = vld [vmem:[#allocation2 + $0x588] sm:$0xf]
    %v552 = vld [vmem:[#allocation2 + $0x58c] sm:$0xff]
    %v553 = vld [vmem:[#allocation2 + $0x594] sm:$0xff]
    %v554 = vld [vmem:[#allocation2 + $0x59c] sm:$0xf]
    %v555 = vld [vmem:[#allocation2 + $0x5a0] sm:$0xff]
    %v556 = vld [vmem:[#allocation2 + $0x5a8] sm:$0xff]
    %v557 = vld [vmem:[#allocation2 + $0x5b0] sm:$0xf]
    %v558 = vld [vmem:[#allocation2 + $0x5b4] sm:$0xff]
    %v559 = vld [vmem:[#allocation2 + $0x5bc] sm:$0xff]
    %v560 = vld [vmem:[#allocation2 + $0x5c4] sm:$0xf]
    %v561 = vld [vmem:[#allocation2 + $0x5c8] sm:$0xff]
    %v562 = vld [vmem:[#allocation2 + $0x5d0] sm:$0xff]
    %v563 = vld [vmem:[#allocation2 + $0x5d8] sm:$0xf]
    %v564 = vld [vmem:[#allocation2 + $0x5dc] sm:$0xff]
    %v565 = vld [vmem:[#allocation2 + $0x5e4] sm:$0xff]
    %v566 = vld [vmem:[#allocation2 + $0x5ec] sm:$0xf]
    %v567 = vld [vmem:[#allocation2 + $0x5f0] sm:$0xff]
    %v568 = vld [vmem:[#allocation2 + $0x5f8] sm:$0xff]
    %v569 = vld [vmem:[#allocation2 + $0x600] sm:$0xf]
    %v570 = vld [vmem:[#allocation2 + $0x604] sm:$0xff]
    %v571 = vld [vmem:[#allocation2 + $0x60c] sm:$0xff]
    %v572 = vld [vmem:[#allocation2 + $0x614] sm:$0xf]
    %v573 = vld [vmem:[#allocation2 + $0x618] sm:$0xff]
    %v574 = vld [vmem:[#allocation2 + $0x620] sm:$0xff]
    %v575 = vld [vmem:[#allocation2 + $0x628] sm:$0xf]
    %v576 = vld [vmem:[#allocation2 + $0x62c] sm:$0xff]
    %v577 = vld [vmem:[#allocation2 + $0x634] sm:$0xff]
    %v578 = vld [vmem:[#allocation2 + $0x63c] sm:$0xf]
    %v579 = vld [vmem:[%s5] sm:$0x1f]
    %v581 = vlaneseq
    %v582 = vshrl.u32 %v581, 7
    %v583 = vsub.s32 0, %v582
    %v584 = vrot.slane %v579, %v583
    %v585 = vlaneseq
    %v586 = vshrl.u32 %v585, 7
    %v587 = vsub.s32 1, %v586
    %v588 = vrot.slane %v579, %v587
    %v589 = vlaneseq
    %v590 = vshrl.u32 %v589, 7
    %v591 = vsub.s32 2, %v590
    %v592 = vrot.slane %v579, %v591
    %v593 = vlaneseq
    %v594 = vshrl.u32 %v593, 7
    %v595 = vsub.s32 3, %v594
    %v596 = vrot.slane %v579, %v595
    %v597 = vlaneseq
    %v598 = vshrl.u32 %v597, 7
    %v599 = vsub.s32 4, %v598
    %v600 = vrot.slane %v579, %v599
    %v846 = vunpack.c.l.b16 %v339
    %v847 = vunpack.c.h.b16 %v339
    %v848 = vunpack.c.l.b16 %v340
    %v849 = vunpack.c.h.b16 %v340
    %v850 = vunpack.c.l.b16 %v341
    %v851 = vunpack.c.l.b16 %v342
    %v852 = vunpack.c.h.b16 %v342
    %v853 = vunpack.c.l.b16 %v343
    %v854 = vunpack.c.h.b16 %v343
    %v855 = vunpack.c.l.b16 %v344
    %v856 = vunpack.c.l.b16 %v345
    %v857 = vunpack.c.h.b16 %v345
    %v858 = vunpack.c.l.b16 %v346
    %v859 = vunpack.c.h.b16 %v346
    %v860 = vunpack.c.l.b16 %v347
    %v861 = vunpack.c.l.b16 %v348
    %v862 = vunpack.c.h.b16 %v348
    %v863 = vunpack.c.l.b16 %v349
    %v864 = vunpack.c.h.b16 %v349
    %v865 = vunpack.c.l.b16 %v350
    %v866 = vunpack.c.l.b16 %v351
    %v867 = vunpack.c.h.b16 %v351
    %v868 = vunpack.c.l.b16 %v352
    %v869 = vunpack.c.h.b16 %v352
    %v870 = vunpack.c.l.b16 %v353
    %v871 = vunpack.c.l.b16 %v354
    %v872 = vunpack.c.h.b16 %v354
    %v873 = vunpack.c.l.b16 %v355
    %v874 = vunpack.c.h.b16 %v355
    %v875 = vunpack.c.l.b16 %v356
    %v876 = vunpack.c.l.b16 %v357
    %v877 = vunpack.c.h.b16 %v357
    %v878 = vunpack.c.l.b16 %v358
    %v879 = vunpack.c.h.b16 %v358
    %v880 = vunpack.c.l.b16 %v359
    %v881 = vunpack.c.l.b16 %v360
    %v882 = vunpack.c.h.b16 %v360
    %v883 = vunpack.c.l.b16 %v361
    %v884 = vunpack.c.h.b16 %v361
    %v885 = vunpack.c.l.b16 %v362
    %v886 = vunpack.c.l.b16 %v363
    %v887 = vunpack.c.h.b16 %v363
    %v888 = vunpack.c.l.b16 %v364
    %v889 = vunpack.c.h.b16 %v364
    %v890 = vunpack.c.l.b16 %v365
    %v891 = vunpack.c.l.b16 %v366
    %v892 = vunpack.c.h.b16 %v366
    %v893 = vunpack.c.l.b16 %v367
    %v894 = vunpack.c.h.b16 %v367
    %v895 = vunpack.c.l.b16 %v368
    %v896 = vunpack.c.l.b16 %v369
    %v897 = vunpack.c.h.b16 %v369
    %v898 = vunpack.c.l.b16 %v370
    %v899 = vunpack.c.h.b16 %v370
    %v900 = vunpack.c.l.b16 %v371
    %v901 = vunpack.c.l.b16 %v372
    %v902 = vunpack.c.h.b16 %v372
    %v903 = vunpack.c.l.b16 %v373
    %v904 = vunpack.c.h.b16 %v373
    %v905 = vunpack.c.l.b16 %v374
    %v906 = vunpack.c.l.b16 %v375
    %v907 = vunpack.c.h.b16 %v375
    %v908 = vunpack.c.l.b16 %v376
    %v909 = vunpack.c.h.b16 %v376
    %v910 = vunpack.c.l.b16 %v377
    %v911 = vunpack.c.l.b16 %v378
    %v912 = vunpack.c.h.b16 %v378
    %v913 = vunpack.c.l.b16 %v379
    %v914 = vunpack.c.h.b16 %v379
    %v915 = vunpack.c.l.b16 %v380
    %v916 = vunpack.c.l.b16 %v381
    %v917 = vunpack.c.h.b16 %v381
    %v918 = vunpack.c.l.b16 %v382
    %v919 = vunpack.c.h.b16 %v382
    %v920 = vunpack.c.l.b16 %v383
    %v921 = vunpack.c.l.b16 %v384
    %v922 = vunpack.c.h.b16 %v384
    %v923 = vunpack.c.l.b16 %v385
    %v924 = vunpack.c.h.b16 %v385
    %v925 = vunpack.c.l.b16 %v386
    %v926 = vunpack.c.l.b16 %v387
    %v927 = vunpack.c.h.b16 %v387
    %v928 = vunpack.c.l.b16 %v388
    %v929 = vunpack.c.h.b16 %v388
    %v930 = vunpack.c.l.b16 %v389
    %v931 = vunpack.c.l.b16 %v390
    %v932 = vunpack.c.h.b16 %v390
    %v933 = vunpack.c.l.b16 %v391
    %v934 = vunpack.c.h.b16 %v391
    %v935 = vunpack.c.l.b16 %v392
    %v936 = vunpack.c.l.b16 %v393
    %v937 = vunpack.c.h.b16 %v393
    %v938 = vunpack.c.l.b16 %v394
    %v939 = vunpack.c.h.b16 %v394
    %v940 = vunpack.c.l.b16 %v395
    %v941 = vunpack.c.l.b16 %v396
    %v942 = vunpack.c.h.b16 %v396
    %v943 = vunpack.c.l.b16 %v397
    %v944 = vunpack.c.h.b16 %v397
    %v945 = vunpack.c.l.b16 %v398
    %v946 = vunpack.c.l.b16 %v399
    %v947 = vunpack.c.h.b16 %v399
    %v948 = vunpack.c.l.b16 %v400
    %v949 = vunpack.c.h.b16 %v400
    %v950 = vunpack.c.l.b16 %v401
    %v951 = vunpack.c.l.b16 %v402
    %v952 = vunpack.c.h.b16 %v402
    %v953 = vunpack.c.l.b16 %v403
    %v954 = vunpack.c.h.b16 %v403
    %v955 = vunpack.c.l.b16 %v404
    %v956 = vunpack.c.l.b16 %v405
    %v957 = vunpack.c.h.b16 %v405
    %v958 = vunpack.c.l.b16 %v406
    %v959 = vunpack.c.h.b16 %v406
    %v960 = vunpack.c.l.b16 %v407
    %v961 = vunpack.c.l.b16 %v408
    %v962 = vunpack.c.h.b16 %v408
    %v963 = vunpack.c.l.b16 %v409
    %v964 = vunpack.c.h.b16 %v409
    %v965 = vunpack.c.l.b16 %v410
    %v966 = vunpack.c.l.b16 %v411
    %v967 = vunpack.c.h.b16 %v411
    %v968 = vunpack.c.l.b16 %v412
    %v969 = vunpack.c.h.b16 %v412
    %v970 = vunpack.c.l.b16 %v413
    %v971 = vunpack.c.l.b16 %v414
    %v972 = vunpack.c.h.b16 %v414
    %v973 = vunpack.c.l.b16 %v415
    %v974 = vunpack.c.h.b16 %v415
    %v975 = vunpack.c.l.b16 %v416
    %v976 = vunpack.c.l.b16 %v417
    %v977 = vunpack.c.h.b16 %v417
    %v978 = vunpack.c.l.b16 %v418
    %v979 = vunpack.c.h.b16 %v418
    %v980 = vunpack.c.l.b16 %v419
    %v981 = vunpack.c.l.b16 %v420
    %v982 = vunpack.c.h.b16 %v420
    %v983 = vunpack.c.l.b16 %v421
    %v984 = vunpack.c.h.b16 %v421
    %v985 = vunpack.c.l.b16 %v422
    %v986 = vunpack.c.l.b16 %v423
    %v987 = vunpack.c.h.b16 %v423
    %v988 = vunpack.c.l.b16 %v424
    %v989 = vunpack.c.h.b16 %v424
    %v990 = vunpack.c.l.b16 %v425
    %v991 = vunpack.c.l.b16 %v426
    %v992 = vunpack.c.h.b16 %v426
    %v993 = vunpack.c.l.b16 %v427
    %v994 = vunpack.c.h.b16 %v427
    %v995 = vunpack.c.l.b16 %v428
    %v996 = vunpack.c.l.b16 %v429
    %v997 = vunpack.c.h.b16 %v429
    %v998 = vunpack.c.l.b16 %v430
    %v999 = vunpack.c.h.b16 %v430
    %v1000 = vunpack.c.l.b16 %v431
    %v1001 = vunpack.c.l.b16 %v432
    %v1002 = vunpack.c.h.b16 %v432
    %v1003 = vunpack.c.l.b16 %v433
    %v1004 = vunpack.c.h.b16 %v433
    %v1005 = vunpack.c.l.b16 %v434
    %v1006 = vunpack.c.l.b16 %v435
    %v1007 = vunpack.c.h.b16 %v435
    %v1008 = vunpack.c.l.b16 %v436
    %v1009 = vunpack.c.h.b16 %v436
    %v1010 = vunpack.c.l.b16 %v437
    %v1011 = vunpack.c.l.b16 %v438
    %v1012 = vunpack.c.h.b16 %v438
    %v1013 = vunpack.c.l.b16 %v439
    %v1014 = vunpack.c.h.b16 %v439
    %v1015 = vunpack.c.l.b16 %v440
    %v1016 = vunpack.c.l.b16 %v441
    %v1017 = vunpack.c.h.b16 %v441
    %v1018 = vunpack.c.l.b16 %v442
    %v1019 = vunpack.c.h.b16 %v442
    %v1020 = vunpack.c.l.b16 %v443
    %v1021 = vunpack.c.l.b16 %v444
    %v1022 = vunpack.c.h.b16 %v444
    %v1023 = vunpack.c.l.b16 %v445
    %v1024 = vunpack.c.h.b16 %v445
    %v1025 = vunpack.c.l.b16 %v446
    %v1026 = vunpack.c.l.b16 %v447
    %v1027 = vunpack.c.h.b16 %v447
    %v1028 = vunpack.c.l.b16 %v448
    %v1029 = vunpack.c.h.b16 %v448
    %v1030 = vunpack.c.l.b16 %v449
    %v1031 = vunpack.c.l.b16 %v450
    %v1032 = vunpack.c.h.b16 %v450
    %v1033 = vunpack.c.l.b16 %v451
    %v1034 = vunpack.c.h.b16 %v451
    %v1035 = vunpack.c.l.b16 %v452
    %v1036 = vunpack.c.l.b16 %v453
    %v1037 = vunpack.c.h.b16 %v453
    %v1038 = vunpack.c.l.b16 %v454
    %v1039 = vunpack.c.h.b16 %v454
    %v1040 = vunpack.c.l.b16 %v455
    %v1041 = vunpack.c.l.b16 %v456
    %v1042 = vunpack.c.h.b16 %v456
    %v1043 = vunpack.c.l.b16 %v457
    %v1044 = vunpack.c.h.b16 %v457
    %v1045 = vunpack.c.l.b16 %v458
    %v1046 = vunpack.c.l.b16 %v459
    %v1047 = vunpack.c.h.b16 %v459
    %v1048 = vunpack.c.l.b16 %v460
    %v1049 = vunpack.c.h.b16 %v460
    %v1050 = vunpack.c.l.b16 %v461
    %v1051 = vunpack.c.l.b16 %v462
    %v1052 = vunpack.c.h.b16 %v462
    %v1053 = vunpack.c.l.b16 %v463
    %v1054 = vunpack.c.h.b16 %v463
    %v1055 = vunpack.c.l.b16 %v464
    %v1056 = vunpack.c.l.b16 %v465
    %v1057 = vunpack.c.h.b16 %v465
    %v1058 = vunpack.c.l.b16 %v466
    %v1059 = vunpack.c.h.b16 %v466
    %v1060 = vunpack.c.l.b16 %v467
    %v1061 = vunpack.c.l.b16 %v468
    %v1062 = vunpack.c.h.b16 %v468
    %v1063 = vunpack.c.l.b16 %v469
    %v1064 = vunpack.c.h.b16 %v469
    %v1065 = vunpack.c.l.b16 %v470
    %v1066 = vunpack.c.l.b16 %v471
    %v1067 = vunpack.c.h.b16 %v471
    %v1068 = vunpack.c.l.b16 %v472
    %v1069 = vunpack.c.h.b16 %v472
    %v1070 = vunpack.c.l.b16 %v473
    %v1071 = vunpack.c.l.b16 %v474
    %v1072 = vunpack.c.h.b16 %v474
    %v1073 = vunpack.c.l.b16 %v475
    %v1074 = vunpack.c.h.b16 %v475
    %v1075 = vunpack.c.l.b16 %v476
    %v1076 = vunpack.c.l.b16 %v477
    %v1077 = vunpack.c.h.b16 %v477
    %v1078 = vunpack.c.l.b16 %v478
    %v1079 = vunpack.c.h.b16 %v478
    %v1080 = vunpack.c.l.b16 %v479
    %v1081 = vunpack.c.l.b16 %v480
    %v1082 = vunpack.c.h.b16 %v480
    %v1083 = vunpack.c.l.b16 %v481
    %v1084 = vunpack.c.h.b16 %v481
    %v1085 = vunpack.c.l.b16 %v482
    %v1086 = vunpack.c.l.b16 %v483
    %v1087 = vunpack.c.h.b16 %v483
    %v1088 = vunpack.c.l.b16 %v484
    %v1089 = vunpack.c.h.b16 %v484
    %v1090 = vunpack.c.l.b16 %v485
    %v1091 = vunpack.c.l.b16 %v486
    %v1092 = vunpack.c.h.b16 %v486
    %v1093 = vunpack.c.l.b16 %v487
    %v1094 = vunpack.c.h.b16 %v487
    %v1095 = vunpack.c.l.b16 %v488
    %v1096 = vunpack.c.l.b16 %v489
    %v1097 = vunpack.c.h.b16 %v489
    %v1098 = vunpack.c.l.b16 %v490
    %v1099 = vunpack.c.h.b16 %v490
    %v1100 = vunpack.c.l.b16 %v491
    %v1101 = vunpack.c.l.b16 %v492
    %v1102 = vunpack.c.h.b16 %v492
    %v1103 = vunpack.c.l.b16 %v493
    %v1104 = vunpack.c.h.b16 %v493
    %v1105 = vunpack.c.l.b16 %v494
    %v1106 = vunpack.c.l.b16 %v495
    %v1107 = vunpack.c.h.b16 %v495
    %v1108 = vunpack.c.l.b16 %v496
    %v1109 = vunpack.c.h.b16 %v496
    %v1110 = vunpack.c.l.b16 %v497
    %v1111 = vunpack.c.l.b16 %v498
    %v1112 = vunpack.c.h.b16 %v498
    %v1113 = vunpack.c.l.b16 %v499
    %v1114 = vunpack.c.h.b16 %v499
    %v1115 = vunpack.c.l.b16 %v500
    %v1116 = vunpack.c.l.b16 %v501
    %v1117 = vunpack.c.h.b16 %v501
    %v1118 = vunpack.c.l.b16 %v502
    %v1119 = vunpack.c.h.b16 %v502
    %v1120 = vunpack.c.l.b16 %v503
    %v1121 = vunpack.c.l.b16 %v504
    %v1122 = vunpack.c.h.b16 %v504
    %v1123 = vunpack.c.l.b16 %v505
    %v1124 = vunpack.c.h.b16 %v505
    %v1125 = vunpack.c.l.b16 %v506
    %v1126 = vunpack.c.l.b16 %v507
    %v1127 = vunpack.c.h.b16 %v507
    %v1128 = vunpack.c.l.b16 %v508
    %v1129 = vunpack.c.h.b16 %v508
    %v1130 = vunpack.c.l.b16 %v509
    %v1131 = vunpack.c.l.b16 %v510
    %v1132 = vunpack.c.h.b16 %v510
    %v1133 = vunpack.c.l.b16 %v511
    %v1134 = vunpack.c.h.b16 %v511
    %v1135 = vunpack.c.l.b16 %v512
    %v1136 = vunpack.c.l.b16 %v513
    %v1137 = vunpack.c.h.b16 %v513
    %v1138 = vunpack.c.l.b16 %v514
    %v1139 = vunpack.c.h.b16 %v514
    %v1140 = vunpack.c.l.b16 %v515
    %v1141 = vunpack.c.l.b16 %v516
    %v1142 = vunpack.c.h.b16 %v516
    %v1143 = vunpack.c.l.b16 %v517
    %v1144 = vunpack.c.h.b16 %v517
    %v1145 = vunpack.c.l.b16 %v518
    %v1146 = vunpack.c.l.b16 %v519
    %v1147 = vunpack.c.h.b16 %v519
    %v1148 = vunpack.c.l.b16 %v520
    %v1149 = vunpack.c.h.b16 %v520
    %v1150 = vunpack.c.l.b16 %v521
    %v1151 = vunpack.c.l.b16 %v522
    %v1152 = vunpack.c.h.b16 %v522
    %v1153 = vunpack.c.l.b16 %v523
    %v1154 = vunpack.c.h.b16 %v523
    %v1155 = vunpack.c.l.b16 %v524
    %v1156 = vunpack.c.l.b16 %v525
    %v1157 = vunpack.c.h.b16 %v525
    %v1158 = vunpack.c.l.b16 %v526
    %v1159 = vunpack.c.h.b16 %v526
    %v1160 = vunpack.c.l.b16 %v527
    %v1161 = vunpack.c.l.b16 %v528
    %v1162 = vunpack.c.h.b16 %v528
    %v1163 = vunpack.c.l.b16 %v529
    %v1164 = vunpack.c.h.b16 %v529
    %v1165 = vunpack.c.l.b16 %v530
    %v1166 = vunpack.c.l.b16 %v531
    %v1167 = vunpack.c.h.b16 %v531
    %v1168 = vunpack.c.l.b16 %v532
    %v1169 = vunpack.c.h.b16 %v532
    %v1170 = vunpack.c.l.b16 %v533
    %v1171 = vunpack.c.l.b16 %v534
    %v1172 = vunpack.c.h.b16 %v534
    %v1173 = vunpack.c.l.b16 %v535
    %v1174 = vunpack.c.h.b16 %v535
    %v1175 = vunpack.c.l.b16 %v536
    %v1176 = vunpack.c.l.b16 %v537
    %v1177 = vunpack.c.h.b16 %v537
    %v1178 = vunpack.c.l.b16 %v538
    %v1179 = vunpack.c.h.b16 %v538
    %v1180 = vunpack.c.l.b16 %v539
    %v1181 = vunpack.c.l.b16 %v540
    %v1182 = vunpack.c.h.b16 %v540
    %v1183 = vunpack.c.l.b16 %v541
    %v1184 = vunpack.c.h.b16 %v541
    %v1185 = vunpack.c.l.b16 %v542
    %v1186 = vunpack.c.l.b16 %v543
    %v1187 = vunpack.c.h.b16 %v543
    %v1188 = vunpack.c.l.b16 %v544
    %v1189 = vunpack.c.h.b16 %v544
    %v1190 = vunpack.c.l.b16 %v545
    %v1191 = vunpack.c.l.b16 %v546
    %v1192 = vunpack.c.h.b16 %v546
    %v1193 = vunpack.c.l.b16 %v547
    %v1194 = vunpack.c.h.b16 %v547
    %v1195 = vunpack.c.l.b16 %v548
    %v1196 = vunpack.c.l.b16 %v549
    %v1197 = vunpack.c.h.b16 %v549
    %v1198 = vunpack.c.l.b16 %v550
    %v1199 = vunpack.c.h.b16 %v550
    %v1200 = vunpack.c.l.b16 %v551
    %v1201 = vunpack.c.l.b16 %v552
    %v1202 = vunpack.c.h.b16 %v552
    %v1203 = vunpack.c.l.b16 %v553
    %v1204 = vunpack.c.h.b16 %v553
    %v1205 = vunpack.c.l.b16 %v554
    %v1206 = vunpack.c.l.b16 %v555
    %v1207 = vunpack.c.h.b16 %v555
    %v1208 = vunpack.c.l.b16 %v556
    %v1209 = vunpack.c.h.b16 %v556
    %v1210 = vunpack.c.l.b16 %v557
    %v1211 = vunpack.c.l.b16 %v558
    %v1212 = vunpack.c.h.b16 %v558
    %v1213 = vunpack.c.l.b16 %v559
    %v1214 = vunpack.c.h.b16 %v559
    %v1215 = vunpack.c.l.b16 %v560
    %v1216 = vunpack.c.l.b16 %v561
    %v1217 = vunpack.c.h.b16 %v561
    %v1218 = vunpack.c.l.b16 %v562
    %v1219 = vunpack.c.h.b16 %v562
    %v1220 = vunpack.c.l.b16 %v563
    %v1221 = vunpack.c.l.b16 %v564
    %v1222 = vunpack.c.h.b16 %v564
    %v1223 = vunpack.c.l.b16 %v565
    %v1224 = vunpack.c.h.b16 %v565
    %v1225 = vunpack.c.l.b16 %v566
    %v1226 = vunpack.c.l.b16 %v567
    %v1227 = vunpack.c.h.b16 %v567
    %v1228 = vunpack.c.l.b16 %v568
    %v1229 = vunpack.c.h.b16 %v568
    %v1230 = vunpack.c.l.b16 %v569
    %v1231 = vunpack.c.l.b16 %v570
    %v1232 = vunpack.c.h.b16 %v570
    %v1233 = vunpack.c.l.b16 %v571
    %v1234 = vunpack.c.h.b16 %v571
    %v1235 = vunpack.c.l.b16 %v572
    %v1236 = vunpack.c.l.b16 %v573
    %v1237 = vunpack.c.h.b16 %v573
    %v1238 = vunpack.c.l.b16 %v574
    %v1239 = vunpack.c.h.b16 %v574
    %v1240 = vunpack.c.l.b16 %v575
    %v1241 = vunpack.c.l.b16 %v576
    %v1242 = vunpack.c.h.b16 %v576
    %v1243 = vunpack.c.l.b16 %v577
    %v1244 = vunpack.c.h.b16 %v577
    %v1245 = vunpack.c.l.b16 %v578
    %v1246 = vpack.c.b16 %v851, %v846
    %v1247 = vpack.c.b16 %v852, %v847
    %v1248 = vpack.c.b16 %v853, %v848
    %v1249 = vpack.c.b16 %v854, %v849
    %v1250 = vpack.c.b16 %v855, %v850
    %v1251 = vpack.c.b16 %v861, %v856
    %v1252 = vpack.c.b16 %v862, %v857
    %v1253 = vpack.c.b16 %v863, %v858
    %v1254 = vpack.c.b16 %v864, %v859
    %v1255 = vpack.c.b16 %v865, %v860
    %v1256 = vpack.c.b16 %v871, %v866
    %v1257 = vpack.c.b16 %v872, %v867
    %v1258 = vpack.c.b16 %v873, %v868
    %v1259 = vpack.c.b16 %v874, %v869
    %v1260 = vpack.c.b16 %v875, %v870
    %v1261 = vpack.c.b16 %v881, %v876
    %v1262 = vpack.c.b16 %v882, %v877
    %v1263 = vpack.c.b16 %v883, %v878
    %v1264 = vpack.c.b16 %v884, %v879
    %v1265 = vpack.c.b16 %v885, %v880
    %v1266 = vpack.c.b16 %v891, %v886
    %v1267 = vpack.c.b16 %v892, %v887
    %v1268 = vpack.c.b16 %v893, %v888
    %v1269 = vpack.c.b16 %v894, %v889
    %v1270 = vpack.c.b16 %v895, %v890
    %v1271 = vpack.c.b16 %v901, %v896
    %v1272 = vpack.c.b16 %v902, %v897
    %v1273 = vpack.c.b16 %v903, %v898
    %v1274 = vpack.c.b16 %v904, %v899
    %v1275 = vpack.c.b16 %v905, %v900
    %v1276 = vpack.c.b16 %v911, %v906
    %v1277 = vpack.c.b16 %v912, %v907
    %v1278 = vpack.c.b16 %v913, %v908
    %v1279 = vpack.c.b16 %v914, %v909
    %v1280 = vpack.c.b16 %v915, %v910
    %v1281 = vpack.c.b16 %v921, %v916
    %v1282 = vpack.c.b16 %v922, %v917
    %v1283 = vpack.c.b16 %v923, %v918
    %v1284 = vpack.c.b16 %v924, %v919
    %v1285 = vpack.c.b16 %v925, %v920
    %v1286 = vpack.c.b16 %v931, %v926
    %v1287 = vpack.c.b16 %v932, %v927
    %v1288 = vpack.c.b16 %v933, %v928
    %v1289 = vpack.c.b16 %v934, %v929
    %v1290 = vpack.c.b16 %v935, %v930
    %v1291 = vpack.c.b16 %v941, %v936
    %v1292 = vpack.c.b16 %v942, %v937
    %v1293 = vpack.c.b16 %v943, %v938
    %v1294 = vpack.c.b16 %v944, %v939
    %v1295 = vpack.c.b16 %v945, %v940
    %v1296 = vpack.c.b16 %v951, %v946
    %v1297 = vpack.c.b16 %v952, %v947
    %v1298 = vpack.c.b16 %v953, %v948
    %v1299 = vpack.c.b16 %v954, %v949
    %v1300 = vpack.c.b16 %v955, %v950
    %v1301 = vpack.c.b16 %v961, %v956
    %v1302 = vpack.c.b16 %v962, %v957
    %v1303 = vpack.c.b16 %v963, %v958
    %v1304 = vpack.c.b16 %v964, %v959
    %v1305 = vpack.c.b16 %v965, %v960
    %v1306 = vpack.c.b16 %v971, %v966
    %v1307 = vpack.c.b16 %v972, %v967
    %v1308 = vpack.c.b16 %v973, %v968
    %v1309 = vpack.c.b16 %v974, %v969
    %v1310 = vpack.c.b16 %v975, %v970
    %v1311 = vpack.c.b16 %v981, %v976
    %v1312 = vpack.c.b16 %v982, %v977
    %v1313 = vpack.c.b16 %v983, %v978
    %v1314 = vpack.c.b16 %v984, %v979
    %v1315 = vpack.c.b16 %v985, %v980
    %v1316 = vpack.c.b16 %v991, %v986
    %v1317 = vpack.c.b16 %v992, %v987
    %v1318 = vpack.c.b16 %v993, %v988
    %v1319 = vpack.c.b16 %v994, %v989
    %v1320 = vpack.c.b16 %v995, %v990
    %v1321 = vpack.c.b16 %v1001, %v996
    %v1322 = vpack.c.b16 %v1002, %v997
    %v1323 = vpack.c.b16 %v1003, %v998
    %v1324 = vpack.c.b16 %v1004, %v999
    %v1325 = vpack.c.b16 %v1005, %v1000
    %v1326 = vpack.c.b16 %v1011, %v1006
    %v1327 = vpack.c.b16 %v1012, %v1007
    %v1328 = vpack.c.b16 %v1013, %v1008
    %v1329 = vpack.c.b16 %v1014, %v1009
    %v1330 = vpack.c.b16 %v1015, %v1010
    %v1331 = vpack.c.b16 %v1021, %v1016
    %v1332 = vpack.c.b16 %v1022, %v1017
    %v1333 = vpack.c.b16 %v1023, %v1018
    %v1334 = vpack.c.b16 %v1024, %v1019
    %v1335 = vpack.c.b16 %v1025, %v1020
    %v1336 = vpack.c.b16 %v1031, %v1026
    %v1337 = vpack.c.b16 %v1032, %v1027
    %v1338 = vpack.c.b16 %v1033, %v1028
    %v1339 = vpack.c.b16 %v1034, %v1029
    %v1340 = vpack.c.b16 %v1035, %v1030
    %v1341 = vpack.c.b16 %v1041, %v1036
    %v1342 = vpack.c.b16 %v1042, %v1037
    %v1343 = vpack.c.b16 %v1043, %v1038
    %v1344 = vpack.c.b16 %v1044, %v1039
    %v1345 = vpack.c.b16 %v1045, %v1040
    %v1346 = vpack.c.b16 %v1051, %v1046
    %v1347 = vpack.c.b16 %v1052, %v1047
    %v1348 = vpack.c.b16 %v1053, %v1048
    %v1349 = vpack.c.b16 %v1054, %v1049
    %v1350 = vpack.c.b16 %v1055, %v1050
    %v1351 = vpack.c.b16 %v1061, %v1056
    %v1352 = vpack.c.b16 %v1062, %v1057
    %v1353 = vpack.c.b16 %v1063, %v1058
    %v1354 = vpack.c.b16 %v1064, %v1059
    %v1355 = vpack.c.b16 %v1065, %v1060
    %v1356 = vpack.c.b16 %v1071, %v1066
    %v1357 = vpack.c.b16 %v1072, %v1067
    %v1358 = vpack.c.b16 %v1073, %v1068
    %v1359 = vpack.c.b16 %v1074, %v1069
    %v1360 = vpack.c.b16 %v1075, %v1070
    %v1361 = vpack.c.b16 %v1081, %v1076
    %v1362 = vpack.c.b16 %v1082, %v1077
    %v1363 = vpack.c.b16 %v1083, %v1078
    %v1364 = vpack.c.b16 %v1084, %v1079
    %v1365 = vpack.c.b16 %v1085, %v1080
    %v1366 = vpack.c.b16 %v1091, %v1086
    %v1367 = vpack.c.b16 %v1092, %v1087
    %v1368 = vpack.c.b16 %v1093, %v1088
    %v1369 = vpack.c.b16 %v1094, %v1089
    %v1370 = vpack.c.b16 %v1095, %v1090
    %v1371 = vpack.c.b16 %v1101, %v1096
    %v1372 = vpack.c.b16 %v1102, %v1097
    %v1373 = vpack.c.b16 %v1103, %v1098
    %v1374 = vpack.c.b16 %v1104, %v1099
    %v1375 = vpack.c.b16 %v1105, %v1100
    %v1376 = vpack.c.b16 %v1111, %v1106
    %v1377 = vpack.c.b16 %v1112, %v1107
    %v1378 = vpack.c.b16 %v1113, %v1108
    %v1379 = vpack.c.b16 %v1114, %v1109
    %v1380 = vpack.c.b16 %v1115, %v1110
    %v1381 = vpack.c.b16 %v1121, %v1116
    %v1382 = vpack.c.b16 %v1122, %v1117
    %v1383 = vpack.c.b16 %v1123, %v1118
    %v1384 = vpack.c.b16 %v1124, %v1119
    %v1385 = vpack.c.b16 %v1125, %v1120
    %v1386 = vpack.c.b16 %v1131, %v1126
    %v1387 = vpack.c.b16 %v1132, %v1127
    %v1388 = vpack.c.b16 %v1133, %v1128
    %v1389 = vpack.c.b16 %v1134, %v1129
    %v1390 = vpack.c.b16 %v1135, %v1130
    %v1391 = vpack.c.b16 %v1141, %v1136
    %v1392 = vpack.c.b16 %v1142, %v1137
    %v1393 = vpack.c.b16 %v1143, %v1138
    %v1394 = vpack.c.b16 %v1144, %v1139
    %v1395 = vpack.c.b16 %v1145, %v1140
    %v1396 = vpack.c.b16 %v1151, %v1146
    %v1397 = vpack.c.b16 %v1152, %v1147
    %v1398 = vpack.c.b16 %v1153, %v1148
    %v1399 = vpack.c.b16 %v1154, %v1149
    %v1400 = vpack.c.b16 %v1155, %v1150
    %v1401 = vpack.c.b16 %v1161, %v1156
    %v1402 = vpack.c.b16 %v1162, %v1157
    %v1403 = vpack.c.b16 %v1163, %v1158
    %v1404 = vpack.c.b16 %v1164, %v1159
    %v1405 = vpack.c.b16 %v1165, %v1160
    %v1406 = vpack.c.b16 %v1171, %v1166
    %v1407 = vpack.c.b16 %v1172, %v1167
    %v1408 = vpack.c.b16 %v1173, %v1168
    %v1409 = vpack.c.b16 %v1174, %v1169
    %v1410 = vpack.c.b16 %v1175, %v1170
    %v1411 = vpack.c.b16 %v1181, %v1176
    %v1412 = vpack.c.b16 %v1182, %v1177
    %v1413 = vpack.c.b16 %v1183, %v1178
    %v1414 = vpack.c.b16 %v1184, %v1179
    %v1415 = vpack.c.b16 %v1185, %v1180
    %v1416 = vpack.c.b16 %v1191, %v1186
    %v1417 = vpack.c.b16 %v1192, %v1187
    %v1418 = vpack.c.b16 %v1193, %v1188
    %v1419 = vpack.c.b16 %v1194, %v1189
    %v1420 = vpack.c.b16 %v1195, %v1190
    %v1421 = vpack.c.b16 %v1201, %v1196
    %v1422 = vpack.c.b16 %v1202, %v1197
    %v1423 = vpack.c.b16 %v1203, %v1198
    %v1424 = vpack.c.b16 %v1204, %v1199
    %v1425 = vpack.c.b16 %v1205, %v1200
    %v1426 = vpack.c.b16 %v1211, %v1206
    %v1427 = vpack.c.b16 %v1212, %v1207
    %v1428 = vpack.c.b16 %v1213, %v1208
    %v1429 = vpack.c.b16 %v1214, %v1209
    %v1430 = vpack.c.b16 %v1215, %v1210
    %v1431 = vpack.c.b16 %v1221, %v1216
    %v1432 = vpack.c.b16 %v1222, %v1217
    %v1433 = vpack.c.b16 %v1223, %v1218
    %v1434 = vpack.c.b16 %v1224, %v1219
    %v1435 = vpack.c.b16 %v1225, %v1220
    %v1436 = vpack.c.b16 %v1231, %v1226
    %v1437 = vpack.c.b16 %v1232, %v1227
    %v1438 = vpack.c.b16 %v1233, %v1228
    %v1439 = vpack.c.b16 %v1234, %v1229
    %v1440 = vpack.c.b16 %v1235, %v1230
    %v1441 = vpack.c.b16 %v1241, %v1236
    %v1442 = vpack.c.b16 %v1242, %v1237
    %v1443 = vpack.c.b16 %v1243, %v1238
    %v1444 = vpack.c.b16 %v1244, %v1239
    %v1445 = vpack.c.b16 %v1245, %v1240
    %1646 = vmatprep.subr.bf16.mxu0 %v1247
    %1647 = vmatpush1.bf16.msra.mxu0 %v1246
    %1648 = vmatprep.subr.bf16.mxu0 %v1252
    %1649 = vmatpush1.bf16.msra.mxu0 %v1251
    %1650 = vmatprep.subr.bf16.mxu0 %v1257
    %1651 = vmatpush1.bf16.msra.mxu0 %v1256
    %1652 = vmatprep.subr.bf16.mxu0 %v1262
    %1653 = vmatpush1.bf16.msra.mxu0 %v1261
    %1654 = vmatprep.subr.bf16.mxu0 %v1267
    %1655 = vmatpush1.bf16.msra.mxu0 %v1266
    %1656 = vmatprep.subr.bf16.mxu0 %v1272
    %1657 = vmatpush1.bf16.msra.mxu0 %v1271
    %1658 = vmatprep.subr.bf16.mxu0 %v1277
    %1659 = vmatpush1.bf16.msra.mxu0 %v1276
    %1660 = vmatprep.subr.bf16.mxu0 %v1282
    %1661 = vmatpush1.bf16.msra.mxu0 %v1281
    %1662 = vmatprep.subr.bf16.mxu0 %v1287
    %1663 = vmatpush1.bf16.msra.mxu0 %v1286
    %1664 = vmatprep.subr.bf16.mxu0 %v1292
    %1665 = vmatpush1.bf16.msra.mxu0 %v1291
    %1666 = vmatprep.subr.bf16.mxu0 %v1297
    %1667 = vmatpush1.bf16.msra.mxu0 %v1296
    %1668 = vmatprep.subr.bf16.mxu0 %v1302
    %1669 = vmatpush1.bf16.msra.mxu0 %v1301
    %1670 = vmatprep.subr.bf16.mxu0 %v1307
    %1671 = vmatpush1.bf16.msra.mxu0 %v1306
    %1672 = vmatprep.subr.bf16.mxu0 %v1312
    %1673 = vmatpush1.bf16.msra.mxu0 %v1311
    %1674 = vmatprep.subr.bf16.mxu0 %v1317
    %1675 = vmatpush1.bf16.msra.mxu0 %v1316
    %1676 = vmatprep.subr.bf16.mxu0 %v1322
    %1677 = vmatpush1.bf16.msra.mxu0 %v1321
    %1678 = vmatprep.mubr.bf16.mxu0 %v335
    %1679 = vmatmul.mubr.bf16.gmra.mrb[0].mxu0 %v334
    %v1680 = vpop.f32.mrb[0].mxu0
    %v1681 = vadd.f32 %v584, %v1680
    %v1682 = vpop.f32.mrb[0].mxu0
    %v1683 = vadd.f32 %v588, %v1682
    %v1684 = vpop.f32.mrb[0].mxu0
    %v1685 = vpop.f32.mrb[0].mxu0
    %1686 = vdwg.mxu0
    %1687 = vmatprep.subr.bf16.mxu0 %v1327
    %1688 = vmatpush1.bf16.msra.mxu0 %v1326
    %1689 = vmatprep.subr.bf16.mxu0 %v1332
    %1690 = vmatpush1.bf16.msra.mxu0 %v1331
    %1691 = vmatprep.subr.bf16.mxu0 %v1337
    %1692 = vmatpush1.bf16.msra.mxu0 %v1336
    %1693 = vmatprep.subr.bf16.mxu0 %v1342
    %1694 = vmatpush1.bf16.msra.mxu0 %v1341
    %1695 = vmatprep.subr.bf16.mxu0 %v1347
    %1696 = vmatpush1.bf16.msra.mxu0 %v1346
    %1697 = vmatprep.subr.bf16.mxu0 %v1352
    %1698 = vmatpush1.bf16.msra.mxu0 %v1351
    %1699 = vmatprep.subr.bf16.mxu0 %v1357
    %1700 = vmatpush1.bf16.msra.mxu0 %v1356
    %1701 = vmatprep.subr.bf16.mxu0 %v1362
    %1702 = vmatpush1.bf16.msra.mxu0 %v1361
    %1703 = vmatprep.subr.bf16.mxu0 %v1367
    %1704 = vmatpush1.bf16.msra.mxu0 %v1366
    %1705 = vmatprep.subr.bf16.mxu0 %v1372
    %1706 = vmatpush1.bf16.msra.mxu0 %v1371
    %1707 = vmatprep.subr.bf16.mxu0 %v1377
    %1708 = vmatpush1.bf16.msra.mxu0 %v1376
    %1709 = vmatprep.subr.bf16.mxu0 %v1382
    %1710 = vmatpush1.bf16.msra.mxu0 %v1381
    %1711 = vmatprep.subr.bf16.mxu0 %v1387
    %1712 = vmatpush1.bf16.msra.mxu0 %v1386
    %1713 = vmatprep.subr.bf16.mxu0 %v1392
    %1714 = vmatpush1.bf16.msra.mxu0 %v1391
    %1715 = vmatprep.subr.bf16.mxu0 %v1397
    %1716 = vmatpush1.bf16.msra.mxu0 %v1396
    %1717 = vmatprep.subr.bf16.mxu0 %v1402
    %1718 = vmatpush1.bf16.msra.mxu0 %v1401
    %1719 = vmatprep.mubr.bf16.mxu0 %v337
    %1720 = vmatmul.mubr.bf16.gmra.mrb[0].mxu0 %v336
    %v1721 = vpop.f32.mrb[0].mxu0
    %v1722 = vadd.f32 %v1681, %v1721
    %v1723 = vpop.f32.mrb[0].mxu0
    %v1724 = vadd.f32 %v1683, %v1723
    %v1725 = vpop.f32.mrb[0].mxu0
    %v1726 = vpop.f32.mrb[0].mxu0
    %1727 = vdwg.mxu0
    %1728 = vmatprep.subr.bf16.mxu0 %v1407
    %1729 = vmatpush1.bf16.msra.mxu0 %v1406
    %1730 = vmatprep.subr.bf16.mxu0 %v1412
    %1731 = vmatpush1.bf16.msra.mxu0 %v1411
    %1732 = vmatprep.subr.bf16.mxu0 %v1417
    %1733 = vmatpush1.bf16.msra.mxu0 %v1416
    %1734 = vmatprep.subr.bf16.mxu0 %v1422
    %1735 = vmatpush1.bf16.msra.mxu0 %v1421
    %1736 = vmatprep.subr.bf16.mxu0 %v1427
    %1737 = vmatpush1.bf16.msra.mxu0 %v1426
    %1738 = vmatprep.subr.bf16.mxu0 %v1432
    %1739 = vmatpush1.bf16.msra.mxu0 %v1431
    %1740 = vmatprep.subr.bf16.mxu0 %v1437
    %1741 = vmatpush1.bf16.msra.mxu0 %v1436
    %1742 = vmatprep.subr.bf16.mxu0 %v1442
    %1743 = vmatpush1.bf16.msra.mxu0 %v1441
    %1744 = vmatprep.subr.bf16.mxu0 0
    %1745 = vmatpush1.bf16.msra.mxu0 0
    %1746 = vmatprep.subr.bf16.mxu0 0
    %1747 = vmatpush1.bf16.msra.mxu0 0
    %1748 = vmatprep.subr.bf16.mxu0 0
    %1749 = vmatpush1.bf16.msra.mxu0 0
    %1750 = vmatprep.subr.bf16.mxu0 0
    %1751 = vmatpush1.bf16.msra.mxu0 0
    %1752 = vmatprep.subr.bf16.mxu0 0
    %1753 = vmatpush1.bf16.msra.mxu0 0
    %1754 = vmatprep.subr.bf16.mxu0 0
    %1755 = vmatpush1.bf16.msra.mxu0 0
    %1756 = vmatprep.subr.bf16.mxu0 0
    %1757 = vmatpush1.bf16.msra.mxu0 0
    %1758 = vmatprep.subr.bf16.mxu0 0
    %1759 = vmatpush1.bf16.msra.mxu0 0
    %1760 = vmatprep.mubr.bf16.mxu0 0
    %1761 = vmatmul.mubr.bf16.gmra.mrb[0].mxu0 %v338
    %v1762 = vpop.f32.mrb[0].mxu0
    %v1763 = vadd.f32 %v1722, %v1762
    %v1764 = vpop.f32.mrb[0].mxu0
    %v1765 = vadd.f32 %v1724, %v1764
    %v1766 = vpop.f32.mrb[0].mxu0
    %v1767 = vpop.f32.mrb[0].mxu0
    %1768 = vdwg.mxu0
    %1769 = vmatprep.subr.bf16.mxu0 %v1249
    %1770 = vmatpush1.bf16.msra.mxu0 %v1248
    %1771 = vmatprep.subr.bf16.mxu0 %v1254
    %1772 = vmatpush1.bf16.msra.mxu0 %v1253
    %1773 = vmatprep.subr.bf16.mxu0 %v1259
    %1774 = vmatpush1.bf16.msra.mxu0 %v1258
    %1775 = vmatprep.subr.bf16.mxu0 %v1264
    %1776 = vmatpush1.bf16.msra.mxu0 %v1263
    %1777 = vmatprep.subr.bf16.mxu0 %v1269
    %1778 = vmatpush1.bf16.msra.mxu0 %v1268
    %1779 = vmatprep.subr.bf16.mxu0 %v1274
    %1780 = vmatpush1.bf16.msra.mxu0 %v1273
    %1781 = vmatprep.subr.bf16.mxu0 %v1279
    %1782 = vmatpush1.bf16.msra.mxu0 %v1278
    %1783 = vmatprep.subr.bf16.mxu0 %v1284
    %1784 = vmatpush1.bf16.msra.mxu0 %v1283
    %1785 = vmatprep.subr.bf16.mxu0 %v1289
    %1786 = vmatpush1.bf16.msra.mxu0 %v1288
    %1787 = vmatprep.subr.bf16.mxu0 %v1294
    %1788 = vmatpush1.bf16.msra.mxu0 %v1293
    %1789 = vmatprep.subr.bf16.mxu0 %v1299
    %1790 = vmatpush1.bf16.msra.mxu0 %v1298
    %1791 = vmatprep.subr.bf16.mxu0 %v1304
    %1792 = vmatpush1.bf16.msra.mxu0 %v1303
    %1793 = vmatprep.subr.bf16.mxu0 %v1309
    %1794 = vmatpush1.bf16.msra.mxu0 %v1308
    %1795 = vmatprep.subr.bf16.mxu0 %v1314
    %1796 = vmatpush1.bf16.msra.mxu0 %v1313
    %1797 = vmatprep.subr.bf16.mxu0 %v1319
    %1798 = vmatpush1.bf16.msra.mxu0 %v1318
    %1799 = vmatprep.subr.bf16.mxu0 %v1324
    %1800 = vmatpush1.bf16.msra.mxu0 %v1323
    %1801 = vmatprep.mubr.bf16.mxu0 %v335
    %1802 = vmatmul.mubr.bf16.gmra.mrb[0].mxu0 %v334
    %v1803 = vpop.f32.mrb[0].mxu0
    %v1804 = vadd.f32 %v592, %v1803
    %v1805 = vpop.f32.mrb[0].mxu0
    %v1806 = vadd.f32 %v596, %v1805
    %v1807 = vpop.f32.mrb[0].mxu0
    %v1808 = vpop.f32.mrb[0].mxu0
    %1809 = vdwg.mxu0
    %1810 = vmatprep.subr.bf16.mxu0 %v1329
    %1811 = vmatpush1.bf16.msra.mxu0 %v1328
    %1812 = vmatprep.subr.bf16.mxu0 %v1334
    %1813 = vmatpush1.bf16.msra.mxu0 %v1333
    %1814 = vmatprep.subr.bf16.mxu0 %v1339
    %1815 = vmatpush1.bf16.msra.mxu0 %v1338
    %1816 = vmatprep.subr.bf16.mxu0 %v1344
    %1817 = vmatpush1.bf16.msra.mxu0 %v1343
    %1818 = vmatprep.subr.bf16.mxu0 %v1349
    %1819 = vmatpush1.bf16.msra.mxu0 %v1348
    %1820 = vmatprep.subr.bf16.mxu0 %v1354
    %1821 = vmatpush1.bf16.msra.mxu0 %v1353
    %1822 = vmatprep.subr.bf16.mxu0 %v1359
    %1823 = vmatpush1.bf16.msra.mxu0 %v1358
    %1824 = vmatprep.subr.bf16.mxu0 %v1364
    %1825 = vmatpush1.bf16.msra.mxu0 %v1363
    %1826 = vmatprep.subr.bf16.mxu0 %v1369
    %1827 = vmatpush1.bf16.msra.mxu0 %v1368
    %1828 = vmatprep.subr.bf16.mxu0 %v1374
    %1829 = vmatpush1.bf16.msra.mxu0 %v1373
    %1830 = vmatprep.subr.bf16.mxu0 %v1379
    %1831 = vmatpush1.bf16.msra.mxu0 %v1378
    %1832 = vmatprep.subr.bf16.mxu0 %v1384
    %1833 = vmatpush1.bf16.msra.mxu0 %v1383
    %1834 = vmatprep.subr.bf16.mxu0 %v1389
    %1835 = vmatpush1.bf16.msra.mxu0 %v1388
    %1836 = vmatprep.subr.bf16.mxu0 %v1394
    %1837 = vmatpush1.bf16.msra.mxu0 %v1393
    %1838 = vmatprep.subr.bf16.mxu0 %v1399
    %1839 = vmatpush1.bf16.msra.mxu0 %v1398
    %1840 = vmatprep.subr.bf16.mxu0 %v1404
    %1841 = vmatpush1.bf16.msra.mxu0 %v1403
    %1842 = vmatprep.mubr.bf16.mxu0 %v337
    %1843 = vmatmul.mubr.bf16.gmra.mrb[0].mxu0 %v336
    %v1844 = vpop.f32.mrb[0].mxu0
    %v1845 = vadd.f32 %v1804, %v1844
    %v1846 = vpop.f32.mrb[0].mxu0
    %v1847 = vadd.f32 %v1806, %v1846
    %v1848 = vpop.f32.mrb[0].mxu0
    %v1849 = vpop.f32.mrb[0].mxu0
    %1850 = vdwg.mxu0
    %1851 = vmatprep.subr.bf16.mxu0 %v1409
    %1852 = vmatpush1.bf16.msra.mxu0 %v1408
    %1853 = vmatprep.subr.bf16.mxu0 %v1414
    %1854 = vmatpush1.bf16.msra.mxu0 %v1413
    %1855 = vmatprep.subr.bf16.mxu0 %v1419
    %1856 = vmatpush1.bf16.msra.mxu0 %v1418
    %1857 = vmatprep.subr.bf16.mxu0 %v1424
    %1858 = vmatpush1.bf16.msra.mxu0 %v1423
    %1859 = vmatprep.subr.bf16.mxu0 %v1429
    %1860 = vmatpush1.bf16.msra.mxu0 %v1428
    %1861 = vmatprep.subr.bf16.mxu0 %v1434
    %1862 = vmatpush1.bf16.msra.mxu0 %v1433
    %1863 = vmatprep.subr.bf16.mxu0 %v1439
    %1864 = vmatpush1.bf16.msra.mxu0 %v1438
    %1865 = vmatprep.subr.bf16.mxu0 %v1444
    %1866 = vmatpush1.bf16.msra.mxu0 %v1443
    %1867 = vmatprep.subr.bf16.mxu0 0
    %1868 = vmatpush1.bf16.msra.mxu0 0
    %1869 = vmatprep.subr.bf16.mxu0 0
    %1870 = vmatpush1.bf16.msra.mxu0 0
    %1871 = vmatprep.subr.bf16.mxu0 0
    %1872 = vmatpush1.bf16.msra.mxu0 0
    %1873 = vmatprep.subr.bf16.mxu0 0
    %1874 = vmatpush1.bf16.msra.mxu0 0
    %1875 = vmatprep.subr.bf16.mxu0 0
    %1876 = vmatpush1.bf16.msra.mxu0 0
    %1877 = vmatprep.subr.bf16.mxu0 0
    %1878 = vmatpush1.bf16.msra.mxu0 0
    %1879 = vmatprep.subr.bf16.mxu0 0
    %1880 = vmatpush1.bf16.msra.mxu0 0
    %1881 = vmatprep.subr.bf16.mxu0 0
    %1882 = vmatpush1.bf16.msra.mxu0 0
    %1883 = vmatprep.mubr.bf16.mxu0 0
    %1884 = vmatmul.mubr.bf16.gmra.mrb[0].mxu0 %v338
    %v1885 = vpop.f32.mrb[0].mxu0
    %v1886 = vadd.f32 %v1845, %v1885
    %v1887 = vpop.f32.mrb[0].mxu0
    %v1888 = vadd.f32 %v1847, %v1887
    %v1889 = vpop.f32.mrb[0].mxu0
    %v1890 = vpop.f32.mrb[0].mxu0
    %1891 = vdwg.mxu0
    %1892 = vmatprep.subr.bf16.mxu0 0
    %1893 = vmatpush1.bf16.msra.mxu0 %v1250
    %1894 = vmatprep.subr.bf16.mxu0 0
    %1895 = vmatpush1.bf16.msra.mxu0 %v1255
    %1896 = vmatprep.subr.bf16.mxu0 0
    %1897 = vmatpush1.bf16.msra.mxu0 %v1260
    %1898 = vmatprep.subr.bf16.mxu0 0
    %1899 = vmatpush1.bf16.msra.mxu0 %v1265
    %1900 = vmatprep.subr.bf16.mxu0 0
    %1901 = vmatpush1.bf16.msra.mxu0 %v1270
    %1902 = vmatprep.subr.bf16.mxu0 0
    %1903 = vmatpush1.bf16.msra.mxu0 %v1275
    %1904 = vmatprep.subr.bf16.mxu0 0
    %1905 = vmatpush1.bf16.msra.mxu0 %v1280
    %1906 = vmatprep.subr.bf16.mxu0 0
    %1907 = vmatpush1.bf16.msra.mxu0 %v1285
    %1908 = vmatprep.subr.bf16.mxu0 0
    %1909 = vmatpush1.bf16.msra.mxu0 %v1290
    %1910 = vmatprep.subr.bf16.mxu0 0
    %1911 = vmatpush1.bf16.msra.mxu0 %v1295
    %1912 = vmatprep.subr.bf16.mxu0 0
    %1913 = vmatpush1.bf16.msra.mxu0 %v1300
    %1914 = vmatprep.subr.bf16.mxu0 0
    %1915 = vmatpush1.bf16.msra.mxu0 %v1305
    %1916 = vmatprep.subr.bf16.mxu0 0
    %1917 = vmatpush1.bf16.msra.mxu0 %v1310
    %1918 = vmatprep.subr.bf16.mxu0 0
    %1919 = vmatpush1.bf16.msra.mxu0 %v1315
    %1920 = vmatprep.subr.bf16.mxu0 0
    %1921 = vmatpush1.bf16.msra.mxu0 %v1320
    %1922 = vmatprep.subr.bf16.mxu0 0
    %1923 = vmatpush1.bf16.msra.mxu0 %v1325
    %1924 = vmatprep.mubr.bf16.mxu0 %v335
    %1925 = vmatmul.mubr.bf16.gmra.mrb[0].mxu0 %v334
    %v1926 = vpop.f32.mrb[0].mxu0
    %v1927 = vadd.f32 %v600, %v1926
    %v1928 = vpop.f32.mrb[0].mxu0
    %v1929 = vpop.f32.mrb[0].mxu0
    %v1930 = vpop.f32.mrb[0].mxu0
    %1931 = vdwg.mxu0
    %1932 = vmatprep.subr.bf16.mxu0 0
    %1933 = vmatpush1.bf16.msra.mxu0 %v1330
    %1934 = vmatprep.subr.bf16.mxu0 0
    %1935 = vmatpush1.bf16.msra.mxu0 %v1335
    %1936 = vmatprep.subr.bf16.mxu0 0
    %1937 = vmatpush1.bf16.msra.mxu0 %v1340
    %1938 = vmatprep.subr.bf16.mxu0 0
    %1939 = vmatpush1.bf16.msra.mxu0 %v1345
    %1940 = vmatprep.subr.bf16.mxu0 0
    %1941 = vmatpush1.bf16.msra.mxu0 %v1350
    %1942 = vmatprep.subr.bf16.mxu0 0
    %1943 = vmatpush1.bf16.msra.mxu0 %v1355
    %1944 = vmatprep.subr.bf16.mxu0 0
    %1945 = vmatpush1.bf16.msra.mxu0 %v1360
    %1946 = vmatprep.subr.bf16.mxu0 0
    %1947 = vmatpush1.bf16.msra.mxu0 %v1365
    %1948 = vmatprep.subr.bf16.mxu0 0
    %1949 = vmatpush1.bf16.msra.mxu0 %v1370
    %1950 = vmatprep.subr.bf16.mxu0 0
    %1951 = vmatpush1.bf16.msra.mxu0 %v1375
    %1952 = vmatprep.subr.bf16.mxu0 0
    %1953 = vmatpush1.bf16.msra.mxu0 %v1380
    %1954 = vmatprep.subr.bf16.mxu0 0
    %1955 = vmatpush1.bf16.msra.mxu0 %v1385
    %1956 = vmatprep.subr.bf16.mxu0 0
    %1957 = vmatpush1.bf16.msra.mxu0 %v1390
    %1958 = vmatprep.subr.bf16.mxu0 0
    %1959 = vmatpush1.bf16.msra.mxu0 %v1395
    %1960 = vmatprep.subr.bf16.mxu0 0
    %1961 = vmatpush1.bf16.msra.mxu0 %v1400
    %1962 = vmatprep.subr.bf16.mxu0 0
    %1963 = vmatpush1.bf16.msra.mxu0 %v1405
    %1964 = vmatprep.mubr.bf16.mxu0 %v337
    %1965 = vmatmul.mubr.bf16.gmra.mrb[0].mxu0 %v336
    %v1966 = vpop.f32.mrb[0].mxu0
    %v1967 = vadd.f32 %v1927, %v1966
    %v1968 = vpop.f32.mrb[0].mxu0
    %v1969 = vpop.f32.mrb[0].mxu0
    %v1970 = vpop.f32.mrb[0].mxu0
    %1971 = vdwg.mxu0
    %1972 = vmatprep.subr.bf16.mxu0 0
    %1973 = vmatpush1.bf16.msra.mxu0 %v1410
    %1974 = vmatprep.subr.bf16.mxu0 0
    %1975 = vmatpush1.bf16.msra.mxu0 %v1415
    %1976 = vmatprep.subr.bf16.mxu0 0
    %1977 = vmatpush1.bf16.msra.mxu0 %v1420
    %1978 = vmatprep.subr.bf16.mxu0 0
    %1979 = vmatpush1.bf16.msra.mxu0 %v1425
    %1980 = vmatprep.subr.bf16.mxu0 0
    %1981 = vmatpush1.bf16.msra.mxu0 %v1430
    %1982 = vmatprep.subr.bf16.mxu0 0
    %1983 = vmatpush1.bf16.msra.mxu0 %v1435
    %1984 = vmatprep.subr.bf16.mxu0 0
    %1985 = vmatpush1.bf16.msra.mxu0 %v1440
    %1986 = vmatprep.subr.bf16.mxu0 0
    %1987 = vmatpush1.bf16.msra.mxu0 %v1445
    %1988 = vmatprep.subr.bf16.mxu0 0
    %1989 = vmatpush1.bf16.msra.mxu0 0
    %1990 = vmatprep.subr.bf16.mxu0 0
    %1991 = vmatpush1.bf16.msra.mxu0 0
    %1992 = vmatprep.subr.bf16.mxu0 0
    %1993 = vmatpush1.bf16.msra.mxu0 0
    %1994 = vmatprep.subr.bf16.mxu0 0
    %1995 = vmatpush1.bf16.msra.mxu0 0
    %1996 = vmatprep.subr.bf16.mxu0 0
    %1997 = vmatpush1.bf16.msra.mxu0 0
    %1998 = vmatprep.subr.bf16.mxu0 0
    %1999 = vmatpush1.bf16.msra.mxu0 0
    %2000 = vmatprep.subr.bf16.mxu0 0
    %2001 = vmatpush1.bf16.msra.mxu0 0
    %2002 = vmatprep.subr.bf16.mxu0 0
    %2003 = vmatpush1.bf16.msra.mxu0 0
    %2004 = vmatprep.mubr.bf16.mxu0 0
    %2005 = vmatmul.mubr.bf16.gmra.mrb[0].mxu0 %v338
    %v2006 = vpop.f32.mrb[0].mxu0
    %v2007 = vadd.f32 %v1967, %v2006
    %v2008 = vpop.f32.mrb[0].mxu0
    %v2009 = vpop.f32.mrb[0].mxu0
    %v2010 = vpop.f32.mrb[0].mxu0
    %2011 = vdwg.mxu0
    %v2012 = vmax.f32 %v1763, 0.0
    %v2013 = vmax.f32 %v1765, 0.0
    %v2014 = vmax.f32 %v1886, 0.0
    %v2015 = vmax.f32 %v1888, 0.0
    %v2016 = vmax.f32 %v2007, 0.0
    %v2017 = vpack.c.bf16 %v2012, %v2012
    %v2018 = vpack.c.bf16 %v2013, %v2013
    %v2019 = vpack.c.bf16 %v2014, %v2014
    %v2020 = vpack.c.bf16 %v2015, %v2015
    %v2021 = vpack.c.bf16 %v2016, %v2016
    %v2022 = vld [vmem:[#allocation4] sm:$0xff]
    %v2023 = vld [vmem:[#allocation4 + $0x8] sm:$0xff]
    %v2024 = vld [vmem:[#allocation4 + $0x10] sm:$0xf]
    %v2025 = vld [vmem:[#allocation4 + $0x14] sm:$0xff]
    %v2026 = vld [vmem:[#allocation4 + $0x1c] sm:$0xff]
    %v2027 = vld [vmem:[#allocation4 + $0x24] sm:$0xf]
    %v2028 = vld [vmem:[#allocation4 + $0x28] sm:$0xff]
    %v2029 = vld [vmem:[#allocation4 + $0x30] sm:$0xff]
    %v2030 = vld [vmem:[#allocation4 + $0x38] sm:$0xf]
    %v2031 = vld [vmem:[#allocation4 + $0x3c] sm:$0xff]
    %v2032 = vld [vmem:[#allocation4 + $0x44] sm:$0xff]
    %v2033 = vld [vmem:[#allocation4 + $0x4c] sm:$0xf]
    %v2034 = vld [vmem:[#allocation4 + $0x50] sm:$0xff]
    %v2035 = vld [vmem:[#allocation4 + $0x58] sm:$0xff]
    %v2036 = vld [vmem:[#allocation4 + $0x60] sm:$0xf]
    %v2037 = vld [vmem:[#allocation4 + $0x64] sm:$0xff]
    %v2038 = vld [vmem:[#allocation4 + $0x6c] sm:$0xff]
    %v2039 = vld [vmem:[#allocation4 + $0x74] sm:$0xf]
    %v2040 = vld [vmem:[#allocation4 + $0x78] sm:$0xff]
    %v2041 = vld [vmem:[#allocation4 + $0x80] sm:$0xff]
    %v2042 = vld [vmem:[#allocation4 + $0x88] sm:$0xf]
    %v2043 = vld [vmem:[#allocation4 + $0x8c] sm:$0xff]
    %v2044 = vld [vmem:[#allocation4 + $0x94] sm:$0xff]
    %v2045 = vld [vmem:[#allocation4 + $0x9c] sm:$0xf]
    %v2046 = vld [vmem:[#allocation4 + $0xa0] sm:$0xff]
    %v2047 = vld [vmem:[#allocation4 + $0xa8] sm:$0xff]
    %v2048 = vld [vmem:[#allocation4 + $0xb0] sm:$0xf]
    %v2049 = vld [vmem:[#allocation4 + $0xb4] sm:$0xff]
    %v2050 = vld [vmem:[#allocation4 + $0xbc] sm:$0xff]
    %v2051 = vld [vmem:[#allocation4 + $0xc4] sm:$0xf]
    %v2052 = vld [vmem:[#allocation4 + $0xc8] sm:$0xff]
    %v2053 = vld [vmem:[#allocation4 + $0xd0] sm:$0xff]
    %v2054 = vld [vmem:[#allocation4 + $0xd8] sm:$0xf]
    %v2055 = vld [vmem:[#allocation4 + $0xdc] sm:$0xff]
    %v2056 = vld [vmem:[#allocation4 + $0xe4] sm:$0xff]
    %v2057 = vld [vmem:[#allocation4 + $0xec] sm:$0xf]
    %v2058 = vld [vmem:[#allocation4 + $0xf0] sm:$0xff]
    %v2059 = vld [vmem:[#allocation4 + $0xf8] sm:$0xff]
    %v2060 = vld [vmem:[#allocation4 + $0x100] sm:$0xf]
    %v2061 = vld [vmem:[#allocation4 + $0x104] sm:$0xff]
    %v2062 = vld [vmem:[#allocation4 + $0x10c] sm:$0xff]
    %v2063 = vld [vmem:[#allocation4 + $0x114] sm:$0xf]
    %v2064 = vld [vmem:[#allocation4 + $0x118] sm:$0xff]
    %v2065 = vld [vmem:[#allocation4 + $0x120] sm:$0xff]
    %v2066 = vld [vmem:[#allocation4 + $0x128] sm:$0xf]
    %v2067 = vld [vmem:[#allocation4 + $0x12c] sm:$0xff]
    %v2068 = vld [vmem:[#allocation4 + $0x134] sm:$0xff]
    %v2069 = vld [vmem:[#allocation4 + $0x13c] sm:$0xf]
    %v2070 = vld [vmem:[#allocation4 + $0x140] sm:$0xff]
    %v2071 = vld [vmem:[#allocation4 + $0x148] sm:$0xff]
    %v2072 = vld [vmem:[#allocation4 + $0x150] sm:$0xf]
    %v2073 = vld [vmem:[#allocation4 + $0x154] sm:$0xff]
    %v2074 = vld [vmem:[#allocation4 + $0x15c] sm:$0xff]
    %v2075 = vld [vmem:[#allocation4 + $0x164] sm:$0xf]
    %v2076 = vld [vmem:[#allocation4 + $0x168] sm:$0xff]
    %v2077 = vld [vmem:[#allocation4 + $0x170] sm:$0xff]
    %v2078 = vld [vmem:[#allocation4 + $0x178] sm:$0xf]
    %v2079 = vld [vmem:[#allocation4 + $0x17c] sm:$0xff]
    %v2080 = vld [vmem:[#allocation4 + $0x184] sm:$0xff]
    %v2081 = vld [vmem:[#allocation4 + $0x18c] sm:$0xf]
    %v2082 = vld [vmem:[#allocation4 + $0x190] sm:$0xff]
    %v2083 = vld [vmem:[#allocation4 + $0x198] sm:$0xff]
    %v2084 = vld [vmem:[#allocation4 + $0x1a0] sm:$0xf]
    %v2085 = vld [vmem:[#allocation4 + $0x1a4] sm:$0xff]
    %v2086 = vld [vmem:[#allocation4 + $0x1ac] sm:$0xff]
    %v2087 = vld [vmem:[#allocation4 + $0x1b4] sm:$0xf]
    %v2088 = vld [vmem:[#allocation4 + $0x1b8] sm:$0xff]
    %v2089 = vld [vmem:[#allocation4 + $0x1c0] sm:$0xff]
    %v2090 = vld [vmem:[#allocation4 + $0x1c8] sm:$0xf]
    %v2091 = vld [vmem:[#allocation4 + $0x1cc] sm:$0xff]
    %v2092 = vld [vmem:[#allocation4 + $0x1d4] sm:$0xff]
    %v2093 = vld [vmem:[#allocation4 + $0x1dc] sm:$0xf]
    %v2094 = vld [vmem:[#allocation4 + $0x1e0] sm:$0xff]
    %v2095 = vld [vmem:[#allocation4 + $0x1e8] sm:$0xff]
    %v2096 = vld [vmem:[#allocation4 + $0x1f0] sm:$0xf]
    %v2097 = vld [vmem:[#allocation4 + $0x1f4] sm:$0xff]
    %v2098 = vld [vmem:[#allocation4 + $0x1fc] sm:$0xff]
    %v2099 = vld [vmem:[#allocation4 + $0x204] sm:$0xf]
    %v2100 = vld [vmem:[#allocation4 + $0x208] sm:$0xff]
    %v2101 = vld [vmem:[#allocation4 + $0x210] sm:$0xff]
    %v2102 = vld [vmem:[#allocation4 + $0x218] sm:$0xf]
    %v2103 = vld [vmem:[#allocation4 + $0x21c] sm:$0xff]
    %v2104 = vld [vmem:[#allocation4 + $0x224] sm:$0xff]
    %v2105 = vld [vmem:[#allocation4 + $0x22c] sm:$0xf]
    %v2106 = vld [vmem:[#allocation4 + $0x230] sm:$0xff]
    %v2107 = vld [vmem:[#allocation4 + $0x238] sm:$0xff]
    %v2108 = vld [vmem:[#allocation4 + $0x240] sm:$0xf]
    %v2109 = vld [vmem:[#allocation4 + $0x244] sm:$0xff]
    %v2110 = vld [vmem:[#allocation4 + $0x24c] sm:$0xff]
    %v2111 = vld [vmem:[#allocation4 + $0x254] sm:$0xf]
    %v2112 = vld [vmem:[#allocation4 + $0x258] sm:$0xff]
    %v2113 = vld [vmem:[#allocation4 + $0x260] sm:$0xff]
    %v2114 = vld [vmem:[#allocation4 + $0x268] sm:$0xf]
    %v2115 = vld [vmem:[#allocation4 + $0x26c] sm:$0xff]
    %v2116 = vld [vmem:[#allocation4 + $0x274] sm:$0xff]
    %v2117 = vld [vmem:[#allocation4 + $0x27c] sm:$0xf]
    %v2118 = vld [vmem:[#allocation4 + $0x280] sm:$0xff]
    %v2119 = vld [vmem:[#allocation4 + $0x288] sm:$0xff]
    %v2120 = vld [vmem:[#allocation4 + $0x290] sm:$0xf]
    %v2121 = vld [vmem:[#allocation4 + $0x294] sm:$0xff]
    %v2122 = vld [vmem:[#allocation4 + $0x29c] sm:$0xff]
    %v2123 = vld [vmem:[#allocation4 + $0x2a4] sm:$0xf]
    %v2124 = vld [vmem:[#allocation4 + $0x2a8] sm:$0xff]
    %v2125 = vld [vmem:[#allocation4 + $0x2b0] sm:$0xff]
    %v2126 = vld [vmem:[#allocation4 + $0x2b8] sm:$0xf]
    %v2127 = vld [vmem:[#allocation4 + $0x2bc] sm:$0xff]
    %v2128 = vld [vmem:[#allocation4 + $0x2c4] sm:$0xff]
    %v2129 = vld [vmem:[#allocation4 + $0x2cc] sm:$0xf]
    %v2130 = vld [vmem:[#allocation4 + $0x2d0] sm:$0xff]
    %v2131 = vld [vmem:[#allocation4 + $0x2d8] sm:$0xff]
    %v2132 = vld [vmem:[#allocation4 + $0x2e0] sm:$0xf]
    %v2133 = vld [vmem:[#allocation4 + $0x2e4] sm:$0xff]
    %v2134 = vld [vmem:[#allocation4 + $0x2ec] sm:$0xff]
    %v2135 = vld [vmem:[#allocation4 + $0x2f4] sm:$0xf]
    %v2136 = vld [vmem:[#allocation4 + $0x2f8] sm:$0xff]
    %v2137 = vld [vmem:[#allocation4 + $0x300] sm:$0xff]
    %v2138 = vld [vmem:[#allocation4 + $0x308] sm:$0xf]
    %v2139 = vld [vmem:[#allocation4 + $0x30c] sm:$0xff]
    %v2140 = vld [vmem:[#allocation4 + $0x314] sm:$0xff]
    %v2141 = vld [vmem:[#allocation4 + $0x31c] sm:$0xf]
    %v2142 = vld [vmem:[#allocation4 + $0x320] sm:$0xff]
    %v2143 = vld [vmem:[#allocation4 + $0x328] sm:$0xff]
    %v2144 = vld [vmem:[#allocation4 + $0x330] sm:$0xf]
    %v2145 = vld [vmem:[#allocation4 + $0x334] sm:$0xff]
    %v2146 = vld [vmem:[#allocation4 + $0x33c] sm:$0xff]
    %v2147 = vld [vmem:[#allocation4 + $0x344] sm:$0xf]
    %v2148 = vld [vmem:[#allocation4 + $0x348] sm:$0xff]
    %v2149 = vld [vmem:[#allocation4 + $0x350] sm:$0xff]
    %v2150 = vld [vmem:[#allocation4 + $0x358] sm:$0xf]
    %v2151 = vld [vmem:[#allocation4 + $0x35c] sm:$0xff]
    %v2152 = vld [vmem:[#allocation4 + $0x364] sm:$0xff]
    %v2153 = vld [vmem:[#allocation4 + $0x36c] sm:$0xf]
    %v2154 = vld [vmem:[#allocation4 + $0x370] sm:$0xff]
    %v2155 = vld [vmem:[#allocation4 + $0x378] sm:$0xff]
    %v2156 = vld [vmem:[#allocation4 + $0x380] sm:$0xf]
    %v2157 = vld [vmem:[#allocation4 + $0x384] sm:$0xff]
    %v2158 = vld [vmem:[#allocation4 + $0x38c] sm:$0xff]
    %v2159 = vld [vmem:[#allocation4 + $0x394] sm:$0xf]
    %v2160 = vld [vmem:[#allocation4 + $0x398] sm:$0xff]
    %v2161 = vld [vmem:[#allocation4 + $0x3a0] sm:$0xff]
    %v2162 = vld [vmem:[#allocation4 + $0x3a8] sm:$0xf]
    %v2163 = vld [vmem:[#allocation4 + $0x3ac] sm:$0xff]
    %v2164 = vld [vmem:[#allocation4 + $0x3b4] sm:$0xff]
    %v2165 = vld [vmem:[#allocation4 + $0x3bc] sm:$0xf]
    %v2166 = vld [vmem:[#allocation4 + $0x3c0] sm:$0xff]
    %v2167 = vld [vmem:[#allocation4 + $0x3c8] sm:$0xff]
    %v2168 = vld [vmem:[#allocation4 + $0x3d0] sm:$0xf]
    %v2169 = vld [vmem:[#allocation4 + $0x3d4] sm:$0xff]
    %v2170 = vld [vmem:[#allocation4 + $0x3dc] sm:$0xff]
    %v2171 = vld [vmem:[#allocation4 + $0x3e4] sm:$0xf]
    %v2172 = vld [vmem:[#allocation4 + $0x3e8] sm:$0xff]
    %v2173 = vld [vmem:[#allocation4 + $0x3f0] sm:$0xff]
    %v2174 = vld [vmem:[#allocation4 + $0x3f8] sm:$0xf]
    %v2175 = vld [vmem:[#allocation4 + $0x3fc] sm:$0xff]
    %v2176 = vld [vmem:[#allocation4 + $0x404] sm:$0xff]
    %v2177 = vld [vmem:[#allocation4 + $0x40c] sm:$0xf]
    %v2178 = vld [vmem:[#allocation4 + $0x410] sm:$0xff]
    %v2179 = vld [vmem:[#allocation4 + $0x418] sm:$0xff]
    %v2180 = vld [vmem:[#allocation4 + $0x420] sm:$0xf]
    %v2181 = vld [vmem:[#allocation4 + $0x424] sm:$0xff]
    %v2182 = vld [vmem:[#allocation4 + $0x42c] sm:$0xff]
    %v2183 = vld [vmem:[#allocation4 + $0x434] sm:$0xf]
    %v2184 = vld [vmem:[#allocation4 + $0x438] sm:$0xff]
    %v2185 = vld [vmem:[#allocation4 + $0x440] sm:$0xff]
    %v2186 = vld [vmem:[#allocation4 + $0x448] sm:$0xf]
    %v2187 = vld [vmem:[#allocation4 + $0x44c] sm:$0xff]
    %v2188 = vld [vmem:[#allocation4 + $0x454] sm:$0xff]
    %v2189 = vld [vmem:[#allocation4 + $0x45c] sm:$0xf]
    %v2190 = vld [vmem:[#allocation4 + $0x460] sm:$0xff]
    %v2191 = vld [vmem:[#allocation4 + $0x468] sm:$0xff]
    %v2192 = vld [vmem:[#allocation4 + $0x470] sm:$0xf]
    %v2193 = vld [vmem:[#allocation4 + $0x474] sm:$0xff]
    %v2194 = vld [vmem:[#allocation4 + $0x47c] sm:$0xff]
    %v2195 = vld [vmem:[#allocation4 + $0x484] sm:$0xf]
    %v2196 = vld [vmem:[#allocation4 + $0x488] sm:$0xff]
    %v2197 = vld [vmem:[#allocation4 + $0x490] sm:$0xff]
    %v2198 = vld [vmem:[#allocation4 + $0x498] sm:$0xf]
    %v2199 = vld [vmem:[#allocation4 + $0x49c] sm:$0xff]
    %v2200 = vld [vmem:[#allocation4 + $0x4a4] sm:$0xff]
    %v2201 = vld [vmem:[#allocation4 + $0x4ac] sm:$0xf]
    %v2202 = vld [vmem:[#allocation4 + $0x4b0] sm:$0xff]
    %v2203 = vld [vmem:[#allocation4 + $0x4b8] sm:$0xff]
    %v2204 = vld [vmem:[#allocation4 + $0x4c0] sm:$0xf]
    %v2205 = vld [vmem:[#allocation4 + $0x4c4] sm:$0xff]
    %v2206 = vld [vmem:[#allocation4 + $0x4cc] sm:$0xff]
    %v2207 = vld [vmem:[#allocation4 + $0x4d4] sm:$0xf]
    %v2208 = vld [vmem:[#allocation4 + $0x4d8] sm:$0xff]
    %v2209 = vld [vmem:[#allocation4 + $0x4e0] sm:$0xff]
    %v2210 = vld [vmem:[#allocation4 + $0x4e8] sm:$0xf]
    %v2211 = vld [vmem:[#allocation4 + $0x4ec] sm:$0xff]
    %v2212 = vld [vmem:[#allocation4 + $0x4f4] sm:$0xff]
    %v2213 = vld [vmem:[#allocation4 + $0x4fc] sm:$0xf]
    %v2214 = vld [vmem:[#allocation4 + $0x500] sm:$0xff]
    %v2215 = vld [vmem:[#allocation4 + $0x508] sm:$0xff]
    %v2216 = vld [vmem:[#allocation4 + $0x510] sm:$0xf]
    %v2217 = vld [vmem:[#allocation4 + $0x514] sm:$0xff]
    %v2218 = vld [vmem:[#allocation4 + $0x51c] sm:$0xff]
    %v2219 = vld [vmem:[#allocation4 + $0x524] sm:$0xf]
    %v2220 = vld [vmem:[#allocation4 + $0x528] sm:$0xff]
    %v2221 = vld [vmem:[#allocation4 + $0x530] sm:$0xff]
    %v2222 = vld [vmem:[#allocation4 + $0x538] sm:$0xf]
    %v2223 = vld [vmem:[#allocation4 + $0x53c] sm:$0xff]
    %v2224 = vld [vmem:[#allocation4 + $0x544] sm:$0xff]
    %v2225 = vld [vmem:[#allocation4 + $0x54c] sm:$0xf]
    %v2226 = vld [vmem:[#allocation4 + $0x550] sm:$0xff]
    %v2227 = vld [vmem:[#allocation4 + $0x558] sm:$0xff]
    %v2228 = vld [vmem:[#allocation4 + $0x560] sm:$0xf]
    %v2229 = vld [vmem:[#allocation4 + $0x564] sm:$0xff]
    %v2230 = vld [vmem:[#allocation4 + $0x56c] sm:$0xff]
    %v2231 = vld [vmem:[#allocation4 + $0x574] sm:$0xf]
    %v2232 = vld [vmem:[#allocation4 + $0x578] sm:$0xff]
    %v2233 = vld [vmem:[#allocation4 + $0x580] sm:$0xff]
    %v2234 = vld [vmem:[#allocation4 + $0x588] sm:$0xf]
    %v2235 = vld [vmem:[#allocation4 + $0x58c] sm:$0xff]
    %v2236 = vld [vmem:[#allocation4 + $0x594] sm:$0xff]
    %v2237 = vld [vmem:[#allocation4 + $0x59c] sm:$0xf]
    %v2238 = vld [vmem:[#allocation4 + $0x5a0] sm:$0xff]
    %v2239 = vld [vmem:[#allocation4 + $0x5a8] sm:$0xff]
    %v2240 = vld [vmem:[#allocation4 + $0x5b0] sm:$0xf]
    %v2241 = vld [vmem:[#allocation4 + $0x5b4] sm:$0xff]
    %v2242 = vld [vmem:[#allocation4 + $0x5bc] sm:$0xff]
    %v2243 = vld [vmem:[#allocation4 + $0x5c4] sm:$0xf]
    %v2244 = vld [vmem:[#allocation4 + $0x5c8] sm:$0xff]
    %v2245 = vld [vmem:[#allocation4 + $0x5d0] sm:$0xff]
    %v2246 = vld [vmem:[#allocation4 + $0x5d8] sm:$0xf]
    %v2247 = vld [vmem:[#allocation4 + $0x5dc] sm:$0xff]
    %v2248 = vld [vmem:[#allocation4 + $0x5e4] sm:$0xff]
    %v2249 = vld [vmem:[#allocation4 + $0x5ec] sm:$0xf]
    %v2250 = vld [vmem:[#allocation4 + $0x5f0] sm:$0xff]
    %v2251 = vld [vmem:[#allocation4 + $0x5f8] sm:$0xff]
    %v2252 = vld [vmem:[#allocation4 + $0x600] sm:$0xf]
    %v2253 = vld [vmem:[#allocation4 + $0x604] sm:$0xff]
    %v2254 = vld [vmem:[#allocation4 + $0x60c] sm:$0xff]
    %v2255 = vld [vmem:[#allocation4 + $0x614] sm:$0xf]
    %v2256 = vld [vmem:[#allocation4 + $0x618] sm:$0xff]
    %v2257 = vld [vmem:[#allocation4 + $0x620] sm:$0xff]
    %v2258 = vld [vmem:[#allocation4 + $0x628] sm:$0xf]
    %v2259 = vld [vmem:[#allocation4 + $0x62c] sm:$0xff]
    %v2260 = vld [vmem:[#allocation4 + $0x634] sm:$0xff]
    %v2261 = vld [vmem:[#allocation4 + $0x63c] sm:$0xf]
    %v2262 = vld [vmem:[%s7] sm:$0x1f]
    %v2264 = vlaneseq
    %v2265 = vshrl.u32 %v2264, 7
    %v2266 = vsub.s32 0, %v2265
    %v2267 = vrot.slane %v2262, %v2266
    %v2268 = vlaneseq
    %v2269 = vshrl.u32 %v2268, 7
    %v2270 = vsub.s32 1, %v2269
    %v2271 = vrot.slane %v2262, %v2270
    %v2272 = vlaneseq
    %v2273 = vshrl.u32 %v2272, 7
    %v2274 = vsub.s32 2, %v2273
    %v2275 = vrot.slane %v2262, %v2274
    %v2276 = vlaneseq
    %v2277 = vshrl.u32 %v2276, 7
    %v2278 = vsub.s32 3, %v2277
    %v2279 = vrot.slane %v2262, %v2278
    %v2280 = vlaneseq
    %v2281 = vshrl.u32 %v2280, 7
    %v2282 = vsub.s32 4, %v2281
    %v2283 = vrot.slane %v2262, %v2282
    %v2529 = vunpack.c.l.b16 %v2022
    %v2530 = vunpack.c.h.b16 %v2022
    %v2531 = vunpack.c.l.b16 %v2023
    %v2532 = vunpack.c.h.b16 %v2023
    %v2533 = vunpack.c.l.b16 %v2024
    %v2534 = vunpack.c.l.b16 %v2025
    %v2535 = vunpack.c.h.b16 %v2025
    %v2536 = vunpack.c.l.b16 %v2026
    %v2537 = vunpack.c.h.b16 %v2026
    %v2538 = vunpack.c.l.b16 %v2027
    %v2539 = vunpack.c.l.b16 %v2028
    %v2540 = vunpack.c.h.b16 %v2028
    %v2541 = vunpack.c.l.b16 %v2029
    %v2542 = vunpack.c.h.b16 %v2029
    %v2543 = vunpack.c.l.b16 %v2030
    %v2544 = vunpack.c.l.b16 %v2031
    %v2545 = vunpack.c.h.b16 %v2031
    %v2546 = vunpack.c.l.b16 %v2032
    %v2547 = vunpack.c.h.b16 %v2032
    %v2548 = vunpack.c.l.b16 %v2033
    %v2549 = vunpack.c.l.b16 %v2034
    %v2550 = vunpack.c.h.b16 %v2034
    %v2551 = vunpack.c.l.b16 %v2035
    %v2552 = vunpack.c.h.b16 %v2035
    %v2553 = vunpack.c.l.b16 %v2036
    %v2554 = vunpack.c.l.b16 %v2037
    %v2555 = vunpack.c.h.b16 %v2037
    %v2556 = vunpack.c.l.b16 %v2038
    %v2557 = vunpack.c.h.b16 %v2038
    %v2558 = vunpack.c.l.b16 %v2039
    %v2559 = vunpack.c.l.b16 %v2040
    %v2560 = vunpack.c.h.b16 %v2040
    %v2561 = vunpack.c.l.b16 %v2041
    %v2562 = vunpack.c.h.b16 %v2041
    %v2563 = vunpack.c.l.b16 %v2042
    %v2564 = vunpack.c.l.b16 %v2043
    %v2565 = vunpack.c.h.b16 %v2043
    %v2566 = vunpack.c.l.b16 %v2044
    %v2567 = vunpack.c.h.b16 %v2044
    %v2568 = vunpack.c.l.b16 %v2045
    %v2569 = vunpack.c.l.b16 %v2046
    %v2570 = vunpack.c.h.b16 %v2046
    %v2571 = vunpack.c.l.b16 %v2047
    %v2572 = vunpack.c.h.b16 %v2047
    %v2573 = vunpack.c.l.b16 %v2048
    %v2574 = vunpack.c.l.b16 %v2049
    %v2575 = vunpack.c.h.b16 %v2049
    %v2576 = vunpack.c.l.b16 %v2050
    %v2577 = vunpack.c.h.b16 %v2050
    %v2578 = vunpack.c.l.b16 %v2051
    %v2579 = vunpack.c.l.b16 %v2052
    %v2580 = vunpack.c.h.b16 %v2052
    %v2581 = vunpack.c.l.b16 %v2053
    %v2582 = vunpack.c.h.b16 %v2053
    %v2583 = vunpack.c.l.b16 %v2054
    %v2584 = vunpack.c.l.b16 %v2055
    %v2585 = vunpack.c.h.b16 %v2055
    %v2586 = vunpack.c.l.b16 %v2056
    %v2587 = vunpack.c.h.b16 %v2056
    %v2588 = vunpack.c.l.b16 %v2057
    %v2589 = vunpack.c.l.b16 %v2058
    %v2590 = vunpack.c.h.b16 %v2058
    %v2591 = vunpack.c.l.b16 %v2059
    %v2592 = vunpack.c.h.b16 %v2059
    %v2593 = vunpack.c.l.b16 %v2060
    %v2594 = vunpack.c.l.b16 %v2061
    %v2595 = vunpack.c.h.b16 %v2061
    %v2596 = vunpack.c.l.b16 %v2062
    %v2597 = vunpack.c.h.b16 %v2062
    %v2598 = vunpack.c.l.b16 %v2063
    %v2599 = vunpack.c.l.b16 %v2064
    %v2600 = vunpack.c.h.b16 %v2064
    %v2601 = vunpack.c.l.b16 %v2065
    %v2602 = vunpack.c.h.b16 %v2065
    %v2603 = vunpack.c.l.b16 %v2066
    %v2604 = vunpack.c.l.b16 %v2067
    %v2605 = vunpack.c.h.b16 %v2067
    %v2606 = vunpack.c.l.b16 %v2068
    %v2607 = vunpack.c.h.b16 %v2068
    %v2608 = vunpack.c.l.b16 %v2069
    %v2609 = vunpack.c.l.b16 %v2070
    %v2610 = vunpack.c.h.b16 %v2070
    %v2611 = vunpack.c.l.b16 %v2071
    %v2612 = vunpack.c.h.b16 %v2071
    %v2613 = vunpack.c.l.b16 %v2072
    %v2614 = vunpack.c.l.b16 %v2073
    %v2615 = vunpack.c.h.b16 %v2073
    %v2616 = vunpack.c.l.b16 %v2074
    %v2617 = vunpack.c.h.b16 %v2074
    %v2618 = vunpack.c.l.b16 %v2075
    %v2619 = vunpack.c.l.b16 %v2076
    %v2620 = vunpack.c.h.b16 %v2076
    %v2621 = vunpack.c.l.b16 %v2077
    %v2622 = vunpack.c.h.b16 %v2077
    %v2623 = vunpack.c.l.b16 %v2078
    %v2624 = vunpack.c.l.b16 %v2079
    %v2625 = vunpack.c.h.b16 %v2079
    %v2626 = vunpack.c.l.b16 %v2080
    %v2627 = vunpack.c.h.b16 %v2080
    %v2628 = vunpack.c.l.b16 %v2081
    %v2629 = vunpack.c.l.b16 %v2082
    %v2630 = vunpack.c.h.b16 %v2082
    %v2631 = vunpack.c.l.b16 %v2083
    %v2632 = vunpack.c.h.b16 %v2083
    %v2633 = vunpack.c.l.b16 %v2084
    %v2634 = vunpack.c.l.b16 %v2085
    %v2635 = vunpack.c.h.b16 %v2085
    %v2636 = vunpack.c.l.b16 %v2086
    %v2637 = vunpack.c.h.b16 %v2086
    %v2638 = vunpack.c.l.b16 %v2087
    %v2639 = vunpack.c.l.b16 %v2088
    %v2640 = vunpack.c.h.b16 %v2088
    %v2641 = vunpack.c.l.b16 %v2089
    %v2642 = vunpack.c.h.b16 %v2089
    %v2643 = vunpack.c.l.b16 %v2090
    %v2644 = vunpack.c.l.b16 %v2091
    %v2645 = vunpack.c.h.b16 %v2091
    %v2646 = vunpack.c.l.b16 %v2092
    %v2647 = vunpack.c.h.b16 %v2092
    %v2648 = vunpack.c.l.b16 %v2093
    %v2649 = vunpack.c.l.b16 %v2094
    %v2650 = vunpack.c.h.b16 %v2094
    %v2651 = vunpack.c.l.b16 %v2095
    %v2652 = vunpack.c.h.b16 %v2095
    %v2653 = vunpack.c.l.b16 %v2096
    %v2654 = vunpack.c.l.b16 %v2097
    %v2655 = vunpack.c.h.b16 %v2097
    %v2656 = vunpack.c.l.b16 %v2098
    %v2657 = vunpack.c.h.b16 %v2098
    %v2658 = vunpack.c.l.b16 %v2099
    %v2659 = vunpack.c.l.b16 %v2100
    %v2660 = vunpack.c.h.b16 %v2100
    %v2661 = vunpack.c.l.b16 %v2101
    %v2662 = vunpack.c.h.b16 %v2101
    %v2663 = vunpack.c.l.b16 %v2102
    %v2664 = vunpack.c.l.b16 %v2103
    %v2665 = vunpack.c.h.b16 %v2103
    %v2666 = vunpack.c.l.b16 %v2104
    %v2667 = vunpack.c.h.b16 %v2104
    %v2668 = vunpack.c.l.b16 %v2105
    %v2669 = vunpack.c.l.b16 %v2106
    %v2670 = vunpack.c.h.b16 %v2106
    %v2671 = vunpack.c.l.b16 %v2107
    %v2672 = vunpack.c.h.b16 %v2107
    %v2673 = vunpack.c.l.b16 %v2108
    %v2674 = vunpack.c.l.b16 %v2109
    %v2675 = vunpack.c.h.b16 %v2109
    %v2676 = vunpack.c.l.b16 %v2110
    %v2677 = vunpack.c.h.b16 %v2110
    %v2678 = vunpack.c.l.b16 %v2111
    %v2679 = vunpack.c.l.b16 %v2112
    %v2680 = vunpack.c.h.b16 %v2112
    %v2681 = vunpack.c.l.b16 %v2113
    %v2682 = vunpack.c.h.b16 %v2113
    %v2683 = vunpack.c.l.b16 %v2114
    %v2684 = vunpack.c.l.b16 %v2115
    %v2685 = vunpack.c.h.b16 %v2115
    %v2686 = vunpack.c.l.b16 %v2116
    %v2687 = vunpack.c.h.b16 %v2116
    %v2688 = vunpack.c.l.b16 %v2117
    %v2689 = vunpack.c.l.b16 %v2118
    %v2690 = vunpack.c.h.b16 %v2118
    %v2691 = vunpack.c.l.b16 %v2119
    %v2692 = vunpack.c.h.b16 %v2119
    %v2693 = vunpack.c.l.b16 %v2120
    %v2694 = vunpack.c.l.b16 %v2121
    %v2695 = vunpack.c.h.b16 %v2121
    %v2696 = vunpack.c.l.b16 %v2122
    %v2697 = vunpack.c.h.b16 %v2122
    %v2698 = vunpack.c.l.b16 %v2123
    %v2699 = vunpack.c.l.b16 %v2124
    %v2700 = vunpack.c.h.b16 %v2124
    %v2701 = vunpack.c.l.b16 %v2125
    %v2702 = vunpack.c.h.b16 %v2125
    %v2703 = vunpack.c.l.b16 %v2126
    %v2704 = vunpack.c.l.b16 %v2127
    %v2705 = vunpack.c.h.b16 %v2127
    %v2706 = vunpack.c.l.b16 %v2128
    %v2707 = vunpack.c.h.b16 %v2128
    %v2708 = vunpack.c.l.b16 %v2129
    %v2709 = vunpack.c.l.b16 %v2130
    %v2710 = vunpack.c.h.b16 %v2130
    %v2711 = vunpack.c.l.b16 %v2131
    %v2712 = vunpack.c.h.b16 %v2131
    %v2713 = vunpack.c.l.b16 %v2132
    %v2714 = vunpack.c.l.b16 %v2133
    %v2715 = vunpack.c.h.b16 %v2133
    %v2716 = vunpack.c.l.b16 %v2134
    %v2717 = vunpack.c.h.b16 %v2134
    %v2718 = vunpack.c.l.b16 %v2135
    %v2719 = vunpack.c.l.b16 %v2136
    %v2720 = vunpack.c.h.b16 %v2136
    %v2721 = vunpack.c.l.b16 %v2137
    %v2722 = vunpack.c.h.b16 %v2137
    %v2723 = vunpack.c.l.b16 %v2138
    %v2724 = vunpack.c.l.b16 %v2139
    %v2725 = vunpack.c.h.b16 %v2139
    %v2726 = vunpack.c.l.b16 %v2140
    %v2727 = vunpack.c.h.b16 %v2140
    %v2728 = vunpack.c.l.b16 %v2141
    %v2729 = vunpack.c.l.b16 %v2142
    %v2730 = vunpack.c.h.b16 %v2142
    %v2731 = vunpack.c.l.b16 %v2143
    %v2732 = vunpack.c.h.b16 %v2143
    %v2733 = vunpack.c.l.b16 %v2144
    %v2734 = vunpack.c.l.b16 %v2145
    %v2735 = vunpack.c.h.b16 %v2145
    %v2736 = vunpack.c.l.b16 %v2146
    %v2737 = vunpack.c.h.b16 %v2146
    %v2738 = vunpack.c.l.b16 %v2147
    %v2739 = vunpack.c.l.b16 %v2148
    %v2740 = vunpack.c.h.b16 %v2148
    %v2741 = vunpack.c.l.b16 %v2149
    %v2742 = vunpack.c.h.b16 %v2149
    %v2743 = vunpack.c.l.b16 %v2150
    %v2744 = vunpack.c.l.b16 %v2151
    %v2745 = vunpack.c.h.b16 %v2151
    %v2746 = vunpack.c.l.b16 %v2152
    %v2747 = vunpack.c.h.b16 %v2152
    %v2748 = vunpack.c.l.b16 %v2153
    %v2749 = vunpack.c.l.b16 %v2154
    %v2750 = vunpack.c.h.b16 %v2154
    %v2751 = vunpack.c.l.b16 %v2155
    %v2752 = vunpack.c.h.b16 %v2155
    %v2753 = vunpack.c.l.b16 %v2156
    %v2754 = vunpack.c.l.b16 %v2157
    %v2755 = vunpack.c.h.b16 %v2157
    %v2756 = vunpack.c.l.b16 %v2158
    %v2757 = vunpack.c.h.b16 %v2158
    %v2758 = vunpack.c.l.b16 %v2159
    %v2759 = vunpack.c.l.b16 %v2160
    %v2760 = vunpack.c.h.b16 %v2160
    %v2761 = vunpack.c.l.b16 %v2161
    %v2762 = vunpack.c.h.b16 %v2161
    %v2763 = vunpack.c.l.b16 %v2162
    %v2764 = vunpack.c.l.b16 %v2163
    %v2765 = vunpack.c.h.b16 %v2163
    %v2766 = vunpack.c.l.b16 %v2164
    %v2767 = vunpack.c.h.b16 %v2164
    %v2768 = vunpack.c.l.b16 %v2165
    %v2769 = vunpack.c.l.b16 %v2166
    %v2770 = vunpack.c.h.b16 %v2166
    %v2771 = vunpack.c.l.b16 %v2167
    %v2772 = vunpack.c.h.b16 %v2167
    %v2773 = vunpack.c.l.b16 %v2168
    %v2774 = vunpack.c.l.b16 %v2169
    %v2775 = vunpack.c.h.b16 %v2169
    %v2776 = vunpack.c.l.b16 %v2170
    %v2777 = vunpack.c.h.b16 %v2170
    %v2778 = vunpack.c.l.b16 %v2171
    %v2779 = vunpack.c.l.b16 %v2172
    %v2780 = vunpack.c.h.b16 %v2172
    %v2781 = vunpack.c.l.b16 %v2173
    %v2782 = vunpack.c.h.b16 %v2173
    %v2783 = vunpack.c.l.b16 %v2174
    %v2784 = vunpack.c.l.b16 %v2175
    %v2785 = vunpack.c.h.b16 %v2175
    %v2786 = vunpack.c.l.b16 %v2176
    %v2787 = vunpack.c.h.b16 %v2176
    %v2788 = vunpack.c.l.b16 %v2177
    %v2789 = vunpack.c.l.b16 %v2178
    %v2790 = vunpack.c.h.b16 %v2178
    %v2791 = vunpack.c.l.b16 %v2179
    %v2792 = vunpack.c.h.b16 %v2179
    %v2793 = vunpack.c.l.b16 %v2180
    %v2794 = vunpack.c.l.b16 %v2181
    %v2795 = vunpack.c.h.b16 %v2181
    %v2796 = vunpack.c.l.b16 %v2182
    %v2797 = vunpack.c.h.b16 %v2182
    %v2798 = vunpack.c.l.b16 %v2183
    %v2799 = vunpack.c.l.b16 %v2184
    %v2800 = vunpack.c.h.b16 %v2184
    %v2801 = vunpack.c.l.b16 %v2185
    %v2802 = vunpack.c.h.b16 %v2185
    %v2803 = vunpack.c.l.b16 %v2186
    %v2804 = vunpack.c.l.b16 %v2187
    %v2805 = vunpack.c.h.b16 %v2187
    %v2806 = vunpack.c.l.b16 %v2188
    %v2807 = vunpack.c.h.b16 %v2188
    %v2808 = vunpack.c.l.b16 %v2189
    %v2809 = vunpack.c.l.b16 %v2190
    %v2810 = vunpack.c.h.b16 %v2190
    %v2811 = vunpack.c.l.b16 %v2191
    %v2812 = vunpack.c.h.b16 %v2191
    %v2813 = vunpack.c.l.b16 %v2192
    %v2814 = vunpack.c.l.b16 %v2193
    %v2815 = vunpack.c.h.b16 %v2193
    %v2816 = vunpack.c.l.b16 %v2194
    %v2817 = vunpack.c.h.b16 %v2194
    %v2818 = vunpack.c.l.b16 %v2195
    %v2819 = vunpack.c.l.b16 %v2196
    %v2820 = vunpack.c.h.b16 %v2196
    %v2821 = vunpack.c.l.b16 %v2197
    %v2822 = vunpack.c.h.b16 %v2197
    %v2823 = vunpack.c.l.b16 %v2198
    %v2824 = vunpack.c.l.b16 %v2199
    %v2825 = vunpack.c.h.b16 %v2199
    %v2826 = vunpack.c.l.b16 %v2200
    %v2827 = vunpack.c.h.b16 %v2200
    %v2828 = vunpack.c.l.b16 %v2201
    %v2829 = vunpack.c.l.b16 %v2202
    %v2830 = vunpack.c.h.b16 %v2202
    %v2831 = vunpack.c.l.b16 %v2203
    %v2832 = vunpack.c.h.b16 %v2203
    %v2833 = vunpack.c.l.b16 %v2204
    %v2834 = vunpack.c.l.b16 %v2205
    %v2835 = vunpack.c.h.b16 %v2205
    %v2836 = vunpack.c.l.b16 %v2206
    %v2837 = vunpack.c.h.b16 %v2206
    %v2838 = vunpack.c.l.b16 %v2207
    %v2839 = vunpack.c.l.b16 %v2208
    %v2840 = vunpack.c.h.b16 %v2208
    %v2841 = vunpack.c.l.b16 %v2209
    %v2842 = vunpack.c.h.b16 %v2209
    %v2843 = vunpack.c.l.b16 %v2210
    %v2844 = vunpack.c.l.b16 %v2211
    %v2845 = vunpack.c.h.b16 %v2211
    %v2846 = vunpack.c.l.b16 %v2212
    %v2847 = vunpack.c.h.b16 %v2212
    %v2848 = vunpack.c.l.b16 %v2213
    %v2849 = vunpack.c.l.b16 %v2214
    %v2850 = vunpack.c.h.b16 %v2214
    %v2851 = vunpack.c.l.b16 %v2215
    %v2852 = vunpack.c.h.b16 %v2215
    %v2853 = vunpack.c.l.b16 %v2216
    %v2854 = vunpack.c.l.b16 %v2217
    %v2855 = vunpack.c.h.b16 %v2217
    %v2856 = vunpack.c.l.b16 %v2218
    %v2857 = vunpack.c.h.b16 %v2218
    %v2858 = vunpack.c.l.b16 %v2219
    %v2859 = vunpack.c.l.b16 %v2220
    %v2860 = vunpack.c.h.b16 %v2220
    %v2861 = vunpack.c.l.b16 %v2221
    %v2862 = vunpack.c.h.b16 %v2221
    %v2863 = vunpack.c.l.b16 %v2222
    %v2864 = vunpack.c.l.b16 %v2223
    %v2865 = vunpack.c.h.b16 %v2223
    %v2866 = vunpack.c.l.b16 %v2224
    %v2867 = vunpack.c.h.b16 %v2224
    %v2868 = vunpack.c.l.b16 %v2225
    %v2869 = vunpack.c.l.b16 %v2226
    %v2870 = vunpack.c.h.b16 %v2226
    %v2871 = vunpack.c.l.b16 %v2227
    %v2872 = vunpack.c.h.b16 %v2227
    %v2873 = vunpack.c.l.b16 %v2228
    %v2874 = vunpack.c.l.b16 %v2229
    %v2875 = vunpack.c.h.b16 %v2229
    %v2876 = vunpack.c.l.b16 %v2230
    %v2877 = vunpack.c.h.b16 %v2230
    %v2878 = vunpack.c.l.b16 %v2231
    %v2879 = vunpack.c.l.b16 %v2232
    %v2880 = vunpack.c.h.b16 %v2232
    %v2881 = vunpack.c.l.b16 %v2233
    %v2882 = vunpack.c.h.b16 %v2233
    %v2883 = vunpack.c.l.b16 %v2234
    %v2884 = vunpack.c.l.b16 %v2235
    %v2885 = vunpack.c.h.b16 %v2235
    %v2886 = vunpack.c.l.b16 %v2236
    %v2887 = vunpack.c.h.b16 %v2236
    %v2888 = vunpack.c.l.b16 %v2237
    %v2889 = vunpack.c.l.b16 %v2238
    %v2890 = vunpack.c.h.b16 %v2238
    %v2891 = vunpack.c.l.b16 %v2239
    %v2892 = vunpack.c.h.b16 %v2239
    %v2893 = vunpack.c.l.b16 %v2240
    %v2894 = vunpack.c.l.b16 %v2241
    %v2895 = vunpack.c.h.b16 %v2241
    %v2896 = vunpack.c.l.b16 %v2242
    %v2897 = vunpack.c.h.b16 %v2242
    %v2898 = vunpack.c.l.b16 %v2243
    %v2899 = vunpack.c.l.b16 %v2244
    %v2900 = vunpack.c.h.b16 %v2244
    %v2901 = vunpack.c.l.b16 %v2245
    %v2902 = vunpack.c.h.b16 %v2245
    %v2903 = vunpack.c.l.b16 %v2246
    %v2904 = vunpack.c.l.b16 %v2247
    %v2905 = vunpack.c.h.b16 %v2247
    %v2906 = vunpack.c.l.b16 %v2248
    %v2907 = vunpack.c.h.b16 %v2248
    %v2908 = vunpack.c.l.b16 %v2249
    %v2909 = vunpack.c.l.b16 %v2250
    %v2910 = vunpack.c.h.b16 %v2250
    %v2911 = vunpack.c.l.b16 %v2251
    %v2912 = vunpack.c.h.b16 %v2251
    %v2913 = vunpack.c.l.b16 %v2252
    %v2914 = vunpack.c.l.b16 %v2253
    %v2915 = vunpack.c.h.b16 %v2253
    %v2916 = vunpack.c.l.b16 %v2254
    %v2917 = vunpack.c.h.b16 %v2254
    %v2918 = vunpack.c.l.b16 %v2255
    %v2919 = vunpack.c.l.b16 %v2256
    %v2920 = vunpack.c.h.b16 %v2256
    %v2921 = vunpack.c.l.b16 %v2257
    %v2922 = vunpack.c.h.b16 %v2257
    %v2923 = vunpack.c.l.b16 %v2258
    %v2924 = vunpack.c.l.b16 %v2259
    %v2925 = vunpack.c.h.b16 %v2259
    %v2926 = vunpack.c.l.b16 %v2260
    %v2927 = vunpack.c.h.b16 %v2260
    %v2928 = vunpack.c.l.b16 %v2261
    %v2929 = vpack.c.b16 %v2534, %v2529
    %v2930 = vpack.c.b16 %v2535, %v2530
    %v2931 = vpack.c.b16 %v2536, %v2531
    %v2932 = vpack.c.b16 %v2537, %v2532
    %v2933 = vpack.c.b16 %v2538, %v2533
    %v2934 = vpack.c.b16 %v2544, %v2539
    %v2935 = vpack.c.b16 %v2545, %v2540
    %v2936 = vpack.c.b16 %v2546, %v2541
    %v2937 = vpack.c.b16 %v2547, %v2542
    %v2938 = vpack.c.b16 %v2548, %v2543
    %v2939 = vpack.c.b16 %v2554, %v2549
    %v2940 = vpack.c.b16 %v2555, %v2550
    %v2941 = vpack.c.b16 %v2556, %v2551
    %v2942 = vpack.c.b16 %v2557, %v2552
    %v2943 = vpack.c.b16 %v2558, %v2553
    %v2944 = vpack.c.b16 %v2564, %v2559
    %v2945 = vpack.c.b16 %v2565, %v2560
    %v2946 = vpack.c.b16 %v2566, %v2561
    %v2947 = vpack.c.b16 %v2567, %v2562
    %v2948 = vpack.c.b16 %v2568, %v2563
    %v2949 = vpack.c.b16 %v2574, %v2569
    %v2950 = vpack.c.b16 %v2575, %v2570
    %v2951 = vpack.c.b16 %v2576, %v2571
    %v2952 = vpack.c.b16 %v2577, %v2572
    %v2953 = vpack.c.b16 %v2578, %v2573
    %v2954 = vpack.c.b16 %v2584, %v2579
    %v2955 = vpack.c.b16 %v2585, %v2580
    %v2956 = vpack.c.b16 %v2586, %v2581
    %v2957 = vpack.c.b16 %v2587, %v2582
    %v2958 = vpack.c.b16 %v2588, %v2583
    %v2959 = vpack.c.b16 %v2594, %v2589
    %v2960 = vpack.c.b16 %v2595, %v2590
    %v2961 = vpack.c.b16 %v2596, %v2591
    %v2962 = vpack.c.b16 %v2597, %v2592
    %v2963 = vpack.c.b16 %v2598, %v2593
    %v2964 = vpack.c.b16 %v2604, %v2599
    %v2965 = vpack.c.b16 %v2605, %v2600
    %v2966 = vpack.c.b16 %v2606, %v2601
    %v2967 = vpack.c.b16 %v2607, %v2602
    %v2968 = vpack.c.b16 %v2608, %v2603
    %v2969 = vpack.c.b16 %v2614, %v2609
    %v2970 = vpack.c.b16 %v2615, %v2610
    %v2971 = vpack.c.b16 %v2616, %v2611
    %v2972 = vpack.c.b16 %v2617, %v2612
    %v2973 = vpack.c.b16 %v2618, %v2613
    %v2974 = vpack.c.b16 %v2624, %v2619
    %v2975 = vpack.c.b16 %v2625, %v2620
    %v2976 = vpack.c.b16 %v2626, %v2621
    %v2977 = vpack.c.b16 %v2627, %v2622
    %v2978 = vpack.c.b16 %v2628, %v2623
    %v2979 = vpack.c.b16 %v2634, %v2629
    %v2980 = vpack.c.b16 %v2635, %v2630
    %v2981 = vpack.c.b16 %v2636, %v2631
    %v2982 = vpack.c.b16 %v2637, %v2632
    %v2983 = vpack.c.b16 %v2638, %v2633
    %v2984 = vpack.c.b16 %v2644, %v2639
    %v2985 = vpack.c.b16 %v2645, %v2640
    %v2986 = vpack.c.b16 %v2646, %v2641
    %v2987 = vpack.c.b16 %v2647, %v2642
    %v2988 = vpack.c.b16 %v2648, %v2643
    %v2989 = vpack.c.b16 %v2654, %v2649
    %v2990 = vpack.c.b16 %v2655, %v2650
    %v2991 = vpack.c.b16 %v2656, %v2651
    %v2992 = vpack.c.b16 %v2657, %v2652
    %v2993 = vpack.c.b16 %v2658, %v2653
    %v2994 = vpack.c.b16 %v2664, %v2659
    %v2995 = vpack.c.b16 %v2665, %v2660
    %v2996 = vpack.c.b16 %v2666, %v2661
    %v2997 = vpack.c.b16 %v2667, %v2662
    %v2998 = vpack.c.b16 %v2668, %v2663
    %v2999 = vpack.c.b16 %v2674, %v2669
    %v3000 = vpack.c.b16 %v2675, %v2670
    %v3001 = vpack.c.b16 %v2676, %v2671
    %v3002 = vpack.c.b16 %v2677, %v2672
    %v3003 = vpack.c.b16 %v2678, %v2673
    %v3004 = vpack.c.b16 %v2684, %v2679
    %v3005 = vpack.c.b16 %v2685, %v2680
    %v3006 = vpack.c.b16 %v2686, %v2681
    %v3007 = vpack.c.b16 %v2687, %v2682
    %v3008 = vpack.c.b16 %v2688, %v2683
    %v3009 = vpack.c.b16 %v2694, %v2689
    %v3010 = vpack.c.b16 %v2695, %v2690
    %v3011 = vpack.c.b16 %v2696, %v2691
    %v3012 = vpack.c.b16 %v2697, %v2692
    %v3013 = vpack.c.b16 %v2698, %v2693
    %v3014 = vpack.c.b16 %v2704, %v2699
    %v3015 = vpack.c.b16 %v2705, %v2700
    %v3016 = vpack.c.b16 %v2706, %v2701
    %v3017 = vpack.c.b16 %v2707, %v2702
    %v3018 = vpack.c.b16 %v2708, %v2703
    %v3019 = vpack.c.b16 %v2714, %v2709
    %v3020 = vpack.c.b16 %v2715, %v2710
    %v3021 = vpack.c.b16 %v2716, %v2711
    %v3022 = vpack.c.b16 %v2717, %v2712
    %v3023 = vpack.c.b16 %v2718, %v2713
    %v3024 = vpack.c.b16 %v2724, %v2719
    %v3025 = vpack.c.b16 %v2725, %v2720
    %v3026 = vpack.c.b16 %v2726, %v2721
    %v3027 = vpack.c.b16 %v2727, %v2722
    %v3028 = vpack.c.b16 %v2728, %v2723
    %v3029 = vpack.c.b16 %v2734, %v2729
    %v3030 = vpack.c.b16 %v2735, %v2730
    %v3031 = vpack.c.b16 %v2736, %v2731
    %v3032 = vpack.c.b16 %v2737, %v2732
    %v3033 = vpack.c.b16 %v2738, %v2733
    %v3034 = vpack.c.b16 %v2744, %v2739
    %v3035 = vpack.c.b16 %v2745, %v2740
    %v3036 = vpack.c.b16 %v2746, %v2741
    %v3037 = vpack.c.b16 %v2747, %v2742
    %v3038 = vpack.c.b16 %v2748, %v2743
    %v3039 = vpack.c.b16 %v2754, %v2749
    %v3040 = vpack.c.b16 %v2755, %v2750
    %v3041 = vpack.c.b16 %v2756, %v2751
    %v3042 = vpack.c.b16 %v2757, %v2752
    %v3043 = vpack.c.b16 %v2758, %v2753
    %v3044 = vpack.c.b16 %v2764, %v2759
    %v3045 = vpack.c.b16 %v2765, %v2760
    %v3046 = vpack.c.b16 %v2766, %v2761
    %v3047 = vpack.c.b16 %v2767, %v2762
    %v3048 = vpack.c.b16 %v2768, %v2763
    %v3049 = vpack.c.b16 %v2774, %v2769
    %v3050 = vpack.c.b16 %v2775, %v2770
    %v3051 = vpack.c.b16 %v2776, %v2771
    %v3052 = vpack.c.b16 %v2777, %v2772
    %v3053 = vpack.c.b16 %v2778, %v2773
    %v3054 = vpack.c.b16 %v2784, %v2779
    %v3055 = vpack.c.b16 %v2785, %v2780
    %v3056 = vpack.c.b16 %v2786, %v2781
    %v3057 = vpack.c.b16 %v2787, %v2782
    %v3058 = vpack.c.b16 %v2788, %v2783
    %v3059 = vpack.c.b16 %v2794, %v2789
    %v3060 = vpack.c.b16 %v2795, %v2790
    %v3061 = vpack.c.b16 %v2796, %v2791
    %v3062 = vpack.c.b16 %v2797, %v2792
    %v3063 = vpack.c.b16 %v2798, %v2793
    %v3064 = vpack.c.b16 %v2804, %v2799
    %v3065 = vpack.c.b16 %v2805, %v2800
    %v3066 = vpack.c.b16 %v2806, %v2801
    %v3067 = vpack.c.b16 %v2807, %v2802
    %v3068 = vpack.c.b16 %v2808, %v2803
    %v3069 = vpack.c.b16 %v2814, %v2809
    %v3070 = vpack.c.b16 %v2815, %v2810
    %v3071 = vpack.c.b16 %v2816, %v2811
    %v3072 = vpack.c.b16 %v2817, %v2812
    %v3073 = vpack.c.b16 %v2818, %v2813
    %v3074 = vpack.c.b16 %v2824, %v2819
    %v3075 = vpack.c.b16 %v2825, %v2820
    %v3076 = vpack.c.b16 %v2826, %v2821
    %v3077 = vpack.c.b16 %v2827, %v2822
    %v3078 = vpack.c.b16 %v2828, %v2823
    %v3079 = vpack.c.b16 %v2834, %v2829
    %v3080 = vpack.c.b16 %v2835, %v2830
    %v3081 = vpack.c.b16 %v2836, %v2831
    %v3082 = vpack.c.b16 %v2837, %v2832
    %v3083 = vpack.c.b16 %v2838, %v2833
    %v3084 = vpack.c.b16 %v2844, %v2839
    %v3085 = vpack.c.b16 %v2845, %v2840
    %v3086 = vpack.c.b16 %v2846, %v2841
    %v3087 = vpack.c.b16 %v2847, %v2842
    %v3088 = vpack.c.b16 %v2848, %v2843
    %v3089 = vpack.c.b16 %v2854, %v2849
    %v3090 = vpack.c.b16 %v2855, %v2850
    %v3091 = vpack.c.b16 %v2856, %v2851
    %v3092 = vpack.c.b16 %v2857, %v2852
    %v3093 = vpack.c.b16 %v2858, %v2853
    %v3094 = vpack.c.b16 %v2864, %v2859
    %v3095 = vpack.c.b16 %v2865, %v2860
    %v3096 = vpack.c.b16 %v2866, %v2861
    %v3097 = vpack.c.b16 %v2867, %v2862
    %v3098 = vpack.c.b16 %v2868, %v2863
    %v3099 = vpack.c.b16 %v2874, %v2869
    %v3100 = vpack.c.b16 %v2875, %v2870
    %v3101 = vpack.c.b16 %v2876, %v2871
    %v3102 = vpack.c.b16 %v2877, %v2872
    %v3103 = vpack.c.b16 %v2878, %v2873
    %v3104 = vpack.c.b16 %v2884, %v2879
    %v3105 = vpack.c.b16 %v2885, %v2880
    %v3106 = vpack.c.b16 %v2886, %v2881
    %v3107 = vpack.c.b16 %v2887, %v2882
    %v3108 = vpack.c.b16 %v2888, %v2883
    %v3109 = vpack.c.b16 %v2894, %v2889
    %v3110 = vpack.c.b16 %v2895, %v2890
    %v3111 = vpack.c.b16 %v2896, %v2891
    %v3112 = vpack.c.b16 %v2897, %v2892
    %v3113 = vpack.c.b16 %v2898, %v2893
    %v3114 = vpack.c.b16 %v2904, %v2899
    %v3115 = vpack.c.b16 %v2905, %v2900
    %v3116 = vpack.c.b16 %v2906, %v2901
    %v3117 = vpack.c.b16 %v2907, %v2902
    %v3118 = vpack.c.b16 %v2908, %v2903
    %v3119 = vpack.c.b16 %v2914, %v2909
    %v3120 = vpack.c.b16 %v2915, %v2910
    %v3121 = vpack.c.b16 %v2916, %v2911
    %v3122 = vpack.c.b16 %v2917, %v2912
    %v3123 = vpack.c.b16 %v2918, %v2913
    %v3124 = vpack.c.b16 %v2924, %v2919
    %v3125 = vpack.c.b16 %v2925, %v2920
    %v3126 = vpack.c.b16 %v2926, %v2921
    %v3127 = vpack.c.b16 %v2927, %v2922
    %v3128 = vpack.c.b16 %v2928, %v2923
    %3329 = vmatprep.subr.bf16.mxu0 %v2930
    %3330 = vmatpush1.bf16.msra.mxu0 %v2929
    %3331 = vmatprep.subr.bf16.mxu0 %v2935
    %3332 = vmatpush1.bf16.msra.mxu0 %v2934
    %3333 = vmatprep.subr.bf16.mxu0 %v2940
    %3334 = vmatpush1.bf16.msra.mxu0 %v2939
    %3335 = vmatprep.subr.bf16.mxu0 %v2945
    %3336 = vmatpush1.bf16.msra.mxu0 %v2944
    %3337 = vmatprep.subr.bf16.mxu0 %v2950
    %3338 = vmatpush1.bf16.msra.mxu0 %v2949
    %3339 = vmatprep.subr.bf16.mxu0 %v2955
    %3340 = vmatpush1.bf16.msra.mxu0 %v2954
    %3341 = vmatprep.subr.bf16.mxu0 %v2960
    %3342 = vmatpush1.bf16.msra.mxu0 %v2959
    %3343 = vmatprep.subr.bf16.mxu0 %v2965
    %3344 = vmatpush1.bf16.msra.mxu0 %v2964
    %3345 = vmatprep.subr.bf16.mxu0 %v2970
    %3346 = vmatpush1.bf16.msra.mxu0 %v2969
    %3347 = vmatprep.subr.bf16.mxu0 %v2975
    %3348 = vmatpush1.bf16.msra.mxu0 %v2974
    %3349 = vmatprep.subr.bf16.mxu0 %v2980
    %3350 = vmatpush1.bf16.msra.mxu0 %v2979
    %3351 = vmatprep.subr.bf16.mxu0 %v2985
    %3352 = vmatpush1.bf16.msra.mxu0 %v2984
    %3353 = vmatprep.subr.bf16.mxu0 %v2990
    %3354 = vmatpush1.bf16.msra.mxu0 %v2989
    %3355 = vmatprep.subr.bf16.mxu0 %v2995
    %3356 = vmatpush1.bf16.msra.mxu0 %v2994
    %3357 = vmatprep.subr.bf16.mxu0 %v3000
    %3358 = vmatpush1.bf16.msra.mxu0 %v2999
    %3359 = vmatprep.subr.bf16.mxu0 %v3005
    %3360 = vmatpush1.bf16.msra.mxu0 %v3004
    %3361 = vmatprep.mubr.bf16.mxu0 %v2018
    %3362 = vmatmul.mubr.bf16.gmra.mrb[0].mxu0 %v2017
    %v3363 = vpop.f32.mrb[0].mxu0
    %v3364 = vadd.f32 %v2267, %v3363
    %v3365 = vpop.f32.mrb[0].mxu0
    %v3366 = vadd.f32 %v2271, %v3365
    %v3367 = vpop.f32.mrb[0].mxu0
    %v3368 = vpop.f32.mrb[0].mxu0
    %3369 = vdwg.mxu0
    %3370 = vmatprep.subr.bf16.mxu0 %v3010
    %3371 = vmatpush1.bf16.msra.mxu0 %v3009
    %3372 = vmatprep.subr.bf16.mxu0 %v3015
    %3373 = vmatpush1.bf16.msra.mxu0 %v3014
    %3374 = vmatprep.subr.bf16.mxu0 %v3020
    %3375 = vmatpush1.bf16.msra.mxu0 %v3019
    %3376 = vmatprep.subr.bf16.mxu0 %v3025
    %3377 = vmatpush1.bf16.msra.mxu0 %v3024
    %3378 = vmatprep.subr.bf16.mxu0 %v3030
    %3379 = vmatpush1.bf16.msra.mxu0 %v3029
    %3380 = vmatprep.subr.bf16.mxu0 %v3035
    %3381 = vmatpush1.bf16.msra.mxu0 %v3034
    %3382 = vmatprep.subr.bf16.mxu0 %v3040
    %3383 = vmatpush1.bf16.msra.mxu0 %v3039
    %3384 = vmatprep.subr.bf16.mxu0 %v3045
    %3385 = vmatpush1.bf16.msra.mxu0 %v3044
    %3386 = vmatprep.subr.bf16.mxu0 %v3050
    %3387 = vmatpush1.bf16.msra.mxu0 %v3049
    %3388 = vmatprep.subr.bf16.mxu0 %v3055
    %3389 = vmatpush1.bf16.msra.mxu0 %v3054
    %3390 = vmatprep.subr.bf16.mxu0 %v3060
    %3391 = vmatpush1.bf16.msra.mxu0 %v3059
    %3392 = vmatprep.subr.bf16.mxu0 %v3065
    %3393 = vmatpush1.bf16.msra.mxu0 %v3064
    %3394 = vmatprep.subr.bf16.mxu0 %v3070
    %3395 = vmatpush1.bf16.msra.mxu0 %v3069
    %3396 = vmatprep.subr.bf16.mxu0 %v3075
    %3397 = vmatpush1.bf16.msra.mxu0 %v3074
    %3398 = vmatprep.subr.bf16.mxu0 %v3080
    %3399 = vmatpush1.bf16.msra.mxu0 %v3079
    %3400 = vmatprep.subr.bf16.mxu0 %v3085
    %3401 = vmatpush1.bf16.msra.mxu0 %v3084
    %3402 = vmatprep.mubr.bf16.mxu0 %v2020
    %3403 = vmatmul.mubr.bf16.gmra.mrb[0].mxu0 %v2019
    %v3404 = vpop.f32.mrb[0].mxu0
    %v3405 = vadd.f32 %v3364, %v3404
    %v3406 = vpop.f32.mrb[0].mxu0
    %v3407 = vadd.f32 %v3366, %v3406
    %v3408 = vpop.f32.mrb[0].mxu0
    %v3409 = vpop.f32.mrb[0].mxu0
    %3410 = vdwg.mxu0
    %3411 = vmatprep.subr.bf16.mxu0 %v3090
    %3412 = vmatpush1.bf16.msra.mxu0 %v3089
    %3413 = vmatprep.subr.bf16.mxu0 %v3095
    %3414 = vmatpush1.bf16.msra.mxu0 %v3094
    %3415 = vmatprep.subr.bf16.mxu0 %v3100
    %3416 = vmatpush1.bf16.msra.mxu0 %v3099
    %3417 = vmatprep.subr.bf16.mxu0 %v3105
    %3418 = vmatpush1.bf16.msra.mxu0 %v3104
    %3419 = vmatprep.subr.bf16.mxu0 %v3110
    %3420 = vmatpush1.bf16.msra.mxu0 %v3109
    %3421 = vmatprep.subr.bf16.mxu0 %v3115
    %3422 = vmatpush1.bf16.msra.mxu0 %v3114
    %3423 = vmatprep.subr.bf16.mxu0 %v3120
    %3424 = vmatpush1.bf16.msra.mxu0 %v3119
    %3425 = vmatprep.subr.bf16.mxu0 %v3125
    %3426 = vmatpush1.bf16.msra.mxu0 %v3124
    %3427 = vmatprep.subr.bf16.mxu0 0
    %3428 = vmatpush1.bf16.msra.mxu0 0
    %3429 = vmatprep.subr.bf16.mxu0 0
    %3430 = vmatpush1.bf16.msra.mxu0 0
    %3431 = vmatprep.subr.bf16.mxu0 0
    %3432 = vmatpush1.bf16.msra.mxu0 0
    %3433 = vmatprep.subr.bf16.mxu0 0
    %3434 = vmatpush1.bf16.msra.mxu0 0
    %3435 = vmatprep.subr.bf16.mxu0 0
    %3436 = vmatpush1.bf16.msra.mxu0 0
    %3437 = vmatprep.subr.bf16.mxu0 0
    %3438 = vmatpush1.bf16.msra.mxu0 0
    %3439 = vmatprep.subr.bf16.mxu0 0
    %3440 = vmatpush1.bf16.msra.mxu0 0
    %3441 = vmatprep.subr.bf16.mxu0 0
    %3442 = vmatpush1.bf16.msra.mxu0 0
    %3443 = vmatprep.mubr.bf16.mxu0 0
    %3444 = vmatmul.mubr.bf16.gmra.mrb[0].mxu0 %v2021
    %v3445 = vpop.f32.mrb[0].mxu0
    %v3446 = vadd.f32 %v3405, %v3445
    %v3447 = vpop.f32.mrb[0].mxu0
    %v3448 = vadd.f32 %v3407, %v3447
    %v3449 = vpop.f32.mrb[0].mxu0
    %v3450 = vpop.f32.mrb[0].mxu0
    %3451 = vdwg.mxu0
    %3452 = vmatprep.subr.bf16.mxu0 %v2932
    %3453 = vmatpush1.bf16.msra.mxu0 %v2931
    %3454 = vmatprep.subr.bf16.mxu0 %v2937
    %3455 = vmatpush1.bf16.msra.mxu0 %v2936
    %3456 = vmatprep.subr.bf16.mxu0 %v2942
    %3457 = vmatpush1.bf16.msra.mxu0 %v2941
    %3458 = vmatprep.subr.bf16.mxu0 %v2947
    %3459 = vmatpush1.bf16.msra.mxu0 %v2946
    %3460 = vmatprep.subr.bf16.mxu0 %v2952
    %3461 = vmatpush1.bf16.msra.mxu0 %v2951
    %3462 = vmatprep.subr.bf16.mxu0 %v2957
    %3463 = vmatpush1.bf16.msra.mxu0 %v2956
    %3464 = vmatprep.subr.bf16.mxu0 %v2962
    %3465 = vmatpush1.bf16.msra.mxu0 %v2961
    %3466 = vmatprep.subr.bf16.mxu0 %v2967
    %3467 = vmatpush1.bf16.msra.mxu0 %v2966
    %3468 = vmatprep.subr.bf16.mxu0 %v2972
    %3469 = vmatpush1.bf16.msra.mxu0 %v2971
    %3470 = vmatprep.subr.bf16.mxu0 %v2977
    %3471 = vmatpush1.bf16.msra.mxu0 %v2976
    %3472 = vmatprep.subr.bf16.mxu0 %v2982
    %3473 = vmatpush1.bf16.msra.mxu0 %v2981
    %3474 = vmatprep.subr.bf16.mxu0 %v2987
    %3475 = vmatpush1.bf16.msra.mxu0 %v2986
    %3476 = vmatprep.subr.bf16.mxu0 %v2992
    %3477 = vmatpush1.bf16.msra.mxu0 %v2991
    %3478 = vmatprep.subr.bf16.mxu0 %v2997
    %3479 = vmatpush1.bf16.msra.mxu0 %v2996
    %3480 = vmatprep.subr.bf16.mxu0 %v3002
    %3481 = vmatpush1.bf16.msra.mxu0 %v3001
    %3482 = vmatprep.subr.bf16.mxu0 %v3007
    %3483 = vmatpush1.bf16.msra.mxu0 %v3006
    %3484 = vmatprep.mubr.bf16.mxu0 %v2018
    %3485 = vmatmul.mubr.bf16.gmra.mrb[0].mxu0 %v2017
    %v3486 = vpop.f32.mrb[0].mxu0
    %v3487 = vadd.f32 %v2275, %v3486
    %v3488 = vpop.f32.mrb[0].mxu0
    %v3489 = vadd.f32 %v2279, %v3488
    %v3490 = vpop.f32.mrb[0].mxu0
    %v3491 = vpop.f32.mrb[0].mxu0
    %3492 = vdwg.mxu0
    %3493 = vmatprep.subr.bf16.mxu0 %v3012
    %3494 = vmatpush1.bf16.msra.mxu0 %v3011
    %3495 = vmatprep.subr.bf16.mxu0 %v3017
    %3496 = vmatpush1.bf16.msra.mxu0 %v3016
    %3497 = vmatprep.subr.bf16.mxu0 %v3022
    %3498 = vmatpush1.bf16.msra.mxu0 %v3021
    %3499 = vmatprep.subr.bf16.mxu0 %v3027
    %3500 = vmatpush1.bf16.msra.mxu0 %v3026
    %3501 = vmatprep.subr.bf16.mxu0 %v3032
    %3502 = vmatpush1.bf16.msra.mxu0 %v3031
    %3503 = vmatprep.subr.bf16.mxu0 %v3037
    %3504 = vmatpush1.bf16.msra.mxu0 %v3036
    %3505 = vmatprep.subr.bf16.mxu0 %v3042
    %3506 = vmatpush1.bf16.msra.mxu0 %v3041
    %3507 = vmatprep.subr.bf16.mxu0 %v3047
    %3508 = vmatpush1.bf16.msra.mxu0 %v3046
    %3509 = vmatprep.subr.bf16.mxu0 %v3052
    %3510 = vmatpush1.bf16.msra.mxu0 %v3051
    %3511 = vmatprep.subr.bf16.mxu0 %v3057
    %3512 = vmatpush1.bf16.msra.mxu0 %v3056
    %3513 = vmatprep.subr.bf16.mxu0 %v3062
    %3514 = vmatpush1.bf16.msra.mxu0 %v3061
    %3515 = vmatprep.subr.bf16.mxu0 %v3067
    %3516 = vmatpush1.bf16.msra.mxu0 %v3066
    %3517 = vmatprep.subr.bf16.mxu0 %v3072
    %3518 = vmatpush1.bf16.msra.mxu0 %v3071
    %3519 = vmatprep.subr.bf16.mxu0 %v3077
    %3520 = vmatpush1.bf16.msra.mxu0 %v3076
    %3521 = vmatprep.subr.bf16.mxu0 %v3082
    %3522 = vmatpush1.bf16.msra.mxu0 %v3081
    %3523 = vmatprep.subr.bf16.mxu0 %v3087
    %3524 = vmatpush1.bf16.msra.mxu0 %v3086
    %3525 = vmatprep.mubr.bf16.mxu0 %v2020
    %3526 = vmatmul.mubr.bf16.gmra.mrb[0].mxu0 %v2019
    %v3527 = vpop.f32.mrb[0].mxu0
    %v3528 = vadd.f32 %v3487, %v3527
    %v3529 = vpop.f32.mrb[0].mxu0
    %v3530 = vadd.f32 %v3489, %v3529
    %v3531 = vpop.f32.mrb[0].mxu0
    %v3532 = vpop.f32.mrb[0].mxu0
    %3533 = vdwg.mxu0
    %3534 = vmatprep.subr.bf16.mxu0 %v3092
    %3535 = vmatpush1.bf16.msra.mxu0 %v3091
    %3536 = vmatprep.subr.bf16.mxu0 %v3097
    %3537 = vmatpush1.bf16.msra.mxu0 %v3096
    %3538 = vmatprep.subr.bf16.mxu0 %v3102
    %3539 = vmatpush1.bf16.msra.mxu0 %v3101
    %3540 = vmatprep.subr.bf16.mxu0 %v3107
    %3541 = vmatpush1.bf16.msra.mxu0 %v3106
    %3542 = vmatprep.subr.bf16.mxu0 %v3112
    %3543 = vmatpush1.bf16.msra.mxu0 %v3111
    %3544 = vmatprep.subr.bf16.mxu0 %v3117
    %3545 = vmatpush1.bf16.msra.mxu0 %v3116
    %3546 = vmatprep.subr.bf16.mxu0 %v3122
    %3547 = vmatpush1.bf16.msra.mxu0 %v3121
    %3548 = vmatprep.subr.bf16.mxu0 %v3127
    %3549 = vmatpush1.bf16.msra.mxu0 %v3126
    %3550 = vmatprep.subr.bf16.mxu0 0
    %3551 = vmatpush1.bf16.msra.mxu0 0
    %3552 = vmatprep.subr.bf16.mxu0 0
    %3553 = vmatpush1.bf16.msra.mxu0 0
    %3554 = vmatprep.subr.bf16.mxu0 0
    %3555 = vmatpush1.bf16.msra.mxu0 0
    %3556 = vmatprep.subr.bf16.mxu0 0
    %3557 = vmatpush1.bf16.msra.mxu0 0
    %3558 = vmatprep.subr.bf16.mxu0 0
    %3559 = vmatpush1.bf16.msra.mxu0 0
    %3560 = vmatprep.subr.bf16.mxu0 0
    %3561 = vmatpush1.bf16.msra.mxu0 0
    %3562 = vmatprep.subr.bf16.mxu0 0
    %3563 = vmatpush1.bf16.msra.mxu0 0
    %3564 = vmatprep.subr.bf16.mxu0 0
    %3565 = vmatpush1.bf16.msra.mxu0 0
    %3566 = vmatprep.mubr.bf16.mxu0 0
    %3567 = vmatmul.mubr.bf16.gmra.mrb[0].mxu0 %v2021
    %v3568 = vpop.f32.mrb[0].mxu0
    %v3569 = vadd.f32 %v3528, %v3568
    %v3570 = vpop.f32.mrb[0].mxu0
    %v3571 = vadd.f32 %v3530, %v3570
    %v3572 = vpop.f32.mrb[0].mxu0
    %v3573 = vpop.f32.mrb[0].mxu0
    %3574 = vdwg.mxu0
    %3575 = vmatprep.subr.bf16.mxu0 0
    %3576 = vmatpush1.bf16.msra.mxu0 %v2933
    %3577 = vmatprep.subr.bf16.mxu0 0
    %3578 = vmatpush1.bf16.msra.mxu0 %v2938
    %3579 = vmatprep.subr.bf16.mxu0 0
    %3580 = vmatpush1.bf16.msra.mxu0 %v2943
    %3581 = vmatprep.subr.bf16.mxu0 0
    %3582 = vmatpush1.bf16.msra.mxu0 %v2948
    %3583 = vmatprep.subr.bf16.mxu0 0
    %3584 = vmatpush1.bf16.msra.mxu0 %v2953
    %3585 = vmatprep.subr.bf16.mxu0 0
    %3586 = vmatpush1.bf16.msra.mxu0 %v2958
    %3587 = vmatprep.subr.bf16.mxu0 0
    %3588 = vmatpush1.bf16.msra.mxu0 %v2963
    %3589 = vmatprep.subr.bf16.mxu0 0
    %3590 = vmatpush1.bf16.msra.mxu0 %v2968
    %3591 = vmatprep.subr.bf16.mxu0 0
    %3592 = vmatpush1.bf16.msra.mxu0 %v2973
    %3593 = vmatprep.subr.bf16.mxu0 0
    %3594 = vmatpush1.bf16.msra.mxu0 %v2978
    %3595 = vmatprep.subr.bf16.mxu0 0
    %3596 = vmatpush1.bf16.msra.mxu0 %v2983
    %3597 = vmatprep.subr.bf16.mxu0 0
    %3598 = vmatpush1.bf16.msra.mxu0 %v2988
    %3599 = vmatprep.subr.bf16.mxu0 0
    %3600 = vmatpush1.bf16.msra.mxu0 %v2993
    %3601 = vmatprep.subr.bf16.mxu0 0
    %3602 = vmatpush1.bf16.msra.mxu0 %v2998
    %3603 = vmatprep.subr.bf16.mxu0 0
    %3604 = vmatpush1.bf16.msra.mxu0 %v3003
    %3605 = vmatprep.subr.bf16.mxu0 0
    %3606 = vmatpush1.bf16.msra.mxu0 %v3008
    %3607 = vmatprep.mubr.bf16.mxu0 %v2018
    %3608 = vmatmul.mubr.bf16.gmra.mrb[0].mxu0 %v2017
    %v3609 = vpop.f32.mrb[0].mxu0
    %v3610 = vadd.f32 %v2283, %v3609
    %v3611 = vpop.f32.mrb[0].mxu0
    %v3612 = vpop.f32.mrb[0].mxu0
    %v3613 = vpop.f32.mrb[0].mxu0
    %3614 = vdwg.mxu0
    %3615 = vmatprep.subr.bf16.mxu0 0
    %3616 = vmatpush1.bf16.msra.mxu0 %v3013
    %3617 = vmatprep.subr.bf16.mxu0 0
    %3618 = vmatpush1.bf16.msra.mxu0 %v3018
    %3619 = vmatprep.subr.bf16.mxu0 0
    %3620 = vmatpush1.bf16.msra.mxu0 %v3023
    %3621 = vmatprep.subr.bf16.mxu0 0
    %3622 = vmatpush1.bf16.msra.mxu0 %v3028
    %3623 = vmatprep.subr.bf16.mxu0 0
    %3624 = vmatpush1.bf16.msra.mxu0 %v3033
    %3625 = vmatprep.subr.bf16.mxu0 0
    %3626 = vmatpush1.bf16.msra.mxu0 %v3038
    %3627 = vmatprep.subr.bf16.mxu0 0
    %3628 = vmatpush1.bf16.msra.mxu0 %v3043
    %3629 = vmatprep.subr.bf16.mxu0 0
    %3630 = vmatpush1.bf16.msra.mxu0 %v3048
    %3631 = vmatprep.subr.bf16.mxu0 0
    %3632 = vmatpush1.bf16.msra.mxu0 %v3053
    %3633 = vmatprep.subr.bf16.mxu0 0
    %3634 = vmatpush1.bf16.msra.mxu0 %v3058
    %3635 = vmatprep.subr.bf16.mxu0 0
    %3636 = vmatpush1.bf16.msra.mxu0 %v3063
    %3637 = vmatprep.subr.bf16.mxu0 0
    %3638 = vmatpush1.bf16.msra.mxu0 %v3068
    %3639 = vmatprep.subr.bf16.mxu0 0
    %3640 = vmatpush1.bf16.msra.mxu0 %v3073
    %3641 = vmatprep.subr.bf16.mxu0 0
    %3642 = vmatpush1.bf16.msra.mxu0 %v3078
    %3643 = vmatprep.subr.bf16.mxu0 0
    %3644 = vmatpush1.bf16.msra.mxu0 %v3083
    %3645 = vmatprep.subr.bf16.mxu0 0
    %3646 = vmatpush1.bf16.msra.mxu0 %v3088
    %3647 = vmatprep.mubr.bf16.mxu0 %v2020
    %3648 = vmatmul.mubr.bf16.gmra.mrb[0].mxu0 %v2019
    %v3649 = vpop.f32.mrb[0].mxu0
    %v3650 = vadd.f32 %v3610, %v3649
    %v3651 = vpop.f32.mrb[0].mxu0
    %v3652 = vpop.f32.mrb[0].mxu0
    %v3653 = vpop.f32.mrb[0].mxu0
    %3654 = vdwg.mxu0
    %3655 = vmatprep.subr.bf16.mxu0 0
    %3656 = vmatpush1.bf16.msra.mxu0 %v3093
    %3657 = vmatprep.subr.bf16.mxu0 0
    %3658 = vmatpush1.bf16.msra.mxu0 %v3098
    %3659 = vmatprep.subr.bf16.mxu0 0
    %3660 = vmatpush1.bf16.msra.mxu0 %v3103
    %3661 = vmatprep.subr.bf16.mxu0 0
    %3662 = vmatpush1.bf16.msra.mxu0 %v3108
    %3663 = vmatprep.subr.bf16.mxu0 0
    %3664 = vmatpush1.bf16.msra.mxu0 %v3113
    %3665 = vmatprep.subr.bf16.mxu0 0
    %3666 = vmatpush1.bf16.msra.mxu0 %v3118
    %3667 = vmatprep.subr.bf16.mxu0 0
    %3668 = vmatpush1.bf16.msra.mxu0 %v3123
    %3669 = vmatprep.subr.bf16.mxu0 0
    %3670 = vmatpush1.bf16.msra.mxu0 %v3128
    %3671 = vmatprep.subr.bf16.mxu0 0
    %3672 = vmatpush1.bf16.msra.mxu0 0
    %3673 = vmatprep.subr.bf16.mxu0 0
    %3674 = vmatpush1.bf16.msra.mxu0 0
    %3675 = vmatprep.subr.bf16.mxu0 0
    %3676 = vmatpush1.bf16.msra.mxu0 0
    %3677 = vmatprep.subr.bf16.mxu0 0
    %3678 = vmatpush1.bf16.msra.mxu0 0
    %3679 = vmatprep.subr.bf16.mxu0 0
    %3680 = vmatpush1.bf16.msra.mxu0 0
    %3681 = vmatprep.subr.bf16.mxu0 0
    %3682 = vmatpush1.bf16.msra.mxu0 0
    %3683 = vmatprep.subr.bf16.mxu0 0
    %3684 = vmatpush1.bf16.msra.mxu0 0
    %3685 = vmatprep.subr.bf16.mxu0 0
    %3686 = vmatpush1.bf16.msra.mxu0 0
    %3687 = vmatprep.mubr.bf16.mxu0 0
    %3688 = vmatmul.mubr.bf16.gmra.mrb[0].mxu0 %v2021
    %v3689 = vpop.f32.mrb[0].mxu0
    %v3690 = vadd.f32 %v3650, %v3689
    %v3691 = vpop.f32.mrb[0].mxu0
    %v3692 = vpop.f32.mrb[0].mxu0
    %v3693 = vpop.f32.mrb[0].mxu0
    %3694 = vdwg.mxu0
    %v3695 = vmax.f32 %v3446, 0.0
    %v3696 = vmax.f32 %v3448, 0.0
    %v3697 = vmax.f32 %v3569, 0.0
    %v3698 = vmax.f32 %v3571, 0.0
    %v3699 = vmax.f32 %v3690, 0.0
    %v3700 = vpack.c.bf16 %v3695, %v3695
    %v3701 = vpack.c.bf16 %v3696, %v3696
    %v3702 = vpack.c.bf16 %v3697, %v3697
    %v3703 = vpack.c.bf16 %v3698, %v3698
    %v3704 = vpack.c.bf16 %v3699, %v3699
    %v3705 = vld [vmem:[%s8] sm:$0xf]
    %v3706 = vld [vmem:[%s8 + $0x4] sm:$0xf]
    %v3707 = vld [vmem:[%s8 + $0x8] sm:$0xf]
    %v3708 = vld [vmem:[%s8 + $0xc] sm:$0xf]
    %v3709 = vld [vmem:[%s8 + $0x10] sm:$0xf]
    %v3710 = vld [vmem:[%s8 + $0x14] sm:$0xf]
    %v3711 = vld [vmem:[%s8 + $0x18] sm:$0xf]
    %v3712 = vld [vmem:[%s8 + $0x1c] sm:$0xf]
    %v3713 = vld [vmem:[%s8 + $0x20] sm:$0xf]
    %v3714 = vld [vmem:[%s8 + $0x24] sm:$0xf]
    %v3715 = vld [vmem:[%s8 + $0x28] sm:$0xf]
    %v3716 = vld [vmem:[%s8 + $0x2c] sm:$0xf]
    %v3717 = vld [vmem:[%s8 + $0x30] sm:$0xf]
    %v3718 = vld [vmem:[%s8 + $0x34] sm:$0xf]
    %v3719 = vld [vmem:[%s8 + $0x38] sm:$0xf]
    %v3720 = vld [vmem:[%s8 + $0x3c] sm:$0xf]
    %v3721 = vld [vmem:[%s8 + $0x40] sm:$0xf]
    %v3722 = vld [vmem:[%s8 + $0x44] sm:$0xf]
    %v3723 = vld [vmem:[%s8 + $0x48] sm:$0xf]
    %v3724 = vld [vmem:[%s8 + $0x4c] sm:$0xf]
    %v3725 = vld [vmem:[%s8 + $0x50] sm:$0xf]
    %v3726 = vld [vmem:[%s8 + $0x54] sm:$0xf]
    %v3727 = vld [vmem:[%s8 + $0x58] sm:$0xf]
    %v3728 = vld [vmem:[%s8 + $0x5c] sm:$0xf]
    %v3729 = vld [vmem:[%s8 + $0x60] sm:$0xf]
    %v3730 = vld [vmem:[%s8 + $0x64] sm:$0xf]
    %v3731 = vld [vmem:[%s8 + $0x68] sm:$0xf]
    %v3732 = vld [vmem:[%s8 + $0x6c] sm:$0xf]
    %v3733 = vld [vmem:[%s8 + $0x70] sm:$0xf]
    %v3734 = vld [vmem:[%s8 + $0x74] sm:$0xf]
    %v3735 = vld [vmem:[%s8 + $0x78] sm:$0xf]
    %v3736 = vld [vmem:[%s8 + $0x7c] sm:$0xf]
    %v3737 = vld [vmem:[%s8 + $0x80] sm:$0xf]
    %v3738 = vld [vmem:[%s8 + $0x84] sm:$0xf]
    %v3739 = vld [vmem:[%s8 + $0x88] sm:$0xf]
    %v3740 = vld [vmem:[%s8 + $0x8c] sm:$0xf]
    %v3741 = vld [vmem:[%s8 + $0x90] sm:$0xf]
    %v3742 = vld [vmem:[%s8 + $0x94] sm:$0xf]
    %v3743 = vld [vmem:[%s8 + $0x98] sm:$0xf]
    %v3744 = vld [vmem:[%s8 + $0x9c] sm:$0xf]
    %v3745 = vld [vmem:[%s8 + $0xa0] sm:$0xf]
    %v3746 = vld [vmem:[%s8 + $0xa4] sm:$0xf]
    %v3747 = vld [vmem:[%s8 + $0xa8] sm:$0xf]
    %v3748 = vld [vmem:[%s8 + $0xac] sm:$0xf]
    %v3749 = vld [vmem:[%s8 + $0xb0] sm:$0xf]
    %v3750 = vld [vmem:[%s8 + $0xb4] sm:$0xf]
    %v3751 = vld [vmem:[%s8 + $0xb8] sm:$0xf]
    %v3752 = vld [vmem:[%s8 + $0xbc] sm:$0xf]
    %v3753 = vld [vmem:[%s8 + $0xc0] sm:$0xf]
    %v3754 = vld [vmem:[%s8 + $0xc4] sm:$0xf]
    %v3755 = vld [vmem:[%s8 + $0xc8] sm:$0xf]
    %v3756 = vld [vmem:[%s8 + $0xcc] sm:$0xf]
    %v3757 = vld [vmem:[%s8 + $0xd0] sm:$0xf]
    %v3758 = vld [vmem:[%s8 + $0xd4] sm:$0xf]
    %v3759 = vld [vmem:[%s8 + $0xd8] sm:$0xf]
    %v3760 = vld [vmem:[%s8 + $0xdc] sm:$0xf]
    %v3761 = vld [vmem:[%s8 + $0xe0] sm:$0xf]
    %v3762 = vld [vmem:[%s8 + $0xe4] sm:$0xf]
    %v3763 = vld [vmem:[%s8 + $0xe8] sm:$0xf]
    %v3764 = vld [vmem:[%s8 + $0xec] sm:$0xf]
    %v3765 = vld [vmem:[%s8 + $0xf0] sm:$0xf]
    %v3766 = vld [vmem:[%s8 + $0xf4] sm:$0xf]
    %v3767 = vld [vmem:[%s8 + $0xf8] sm:$0xf]
    %v3768 = vld [vmem:[%s8 + $0xfc] sm:$0xf]
    %v3769 = vld [vmem:[%s8 + $0x100] sm:$0xf]
    %v3770 = vld [vmem:[%s8 + $0x104] sm:$0xf]
    %v3771 = vld [vmem:[%s8 + $0x108] sm:$0xf]
    %v3772 = vld [vmem:[%s8 + $0x10c] sm:$0xf]
    %v3773 = vld [vmem:[%s8 + $0x110] sm:$0xf]
    %v3774 = vld [vmem:[%s8 + $0x114] sm:$0xf]
    %v3775 = vld [vmem:[%s8 + $0x118] sm:$0xf]
    %v3776 = vld [vmem:[%s8 + $0x11c] sm:$0xf]
    %v3777 = vld [vmem:[%s8 + $0x120] sm:$0xf]
    %v3778 = vld [vmem:[%s8 + $0x124] sm:$0xf]
    %v3779 = vld [vmem:[%s8 + $0x128] sm:$0xf]
    %v3780 = vld [vmem:[%s8 + $0x12c] sm:$0xf]
    %v3781 = vld [vmem:[%s8 + $0x130] sm:$0xf]
    %v3782 = vld [vmem:[%s8 + $0x134] sm:$0xf]
    %v3783 = vld [vmem:[%s8 + $0x138] sm:$0xf]
    %v3784 = vld [vmem:[%s8 + $0x13c] sm:$0xf]
    %v3785 = vld [vmem:[%s9] sm:$0x1]
    %v3787 = vlaneseq
    %v3788 = vshrl.u32 %v3787, 7
    %v3789 = vsub.s32 0, %v3788
    %v3790 = vrot.slane %v3785, %v3789
    %v3872 = vunpack.c.l.b16 %v3705
    %v3873 = vunpack.c.l.b16 %v3706
    %v3874 = vunpack.c.l.b16 %v3707
    %v3875 = vunpack.c.l.b16 %v3708
    %v3876 = vunpack.c.l.b16 %v3709
    %v3877 = vunpack.c.l.b16 %v3710
    %v3878 = vunpack.c.l.b16 %v3711
    %v3879 = vunpack.c.l.b16 %v3712
    %v3880 = vunpack.c.l.b16 %v3713
    %v3881 = vunpack.c.l.b16 %v3714
    %v3882 = vunpack.c.l.b16 %v3715
    %v3883 = vunpack.c.l.b16 %v3716
    %v3884 = vunpack.c.l.b16 %v3717
    %v3885 = vunpack.c.l.b16 %v3718
    %v3886 = vunpack.c.l.b16 %v3719
    %v3887 = vunpack.c.l.b16 %v3720
    %v3888 = vunpack.c.l.b16 %v3721
    %v3889 = vunpack.c.l.b16 %v3722
    %v3890 = vunpack.c.l.b16 %v3723
    %v3891 = vunpack.c.l.b16 %v3724
    %v3892 = vunpack.c.l.b16 %v3725
    %v3893 = vunpack.c.l.b16 %v3726
    %v3894 = vunpack.c.l.b16 %v3727
    %v3895 = vunpack.c.l.b16 %v3728
    %v3896 = vunpack.c.l.b16 %v3729
    %v3897 = vunpack.c.l.b16 %v3730
    %v3898 = vunpack.c.l.b16 %v3731
    %v3899 = vunpack.c.l.b16 %v3732
    %v3900 = vunpack.c.l.b16 %v3733
    %v3901 = vunpack.c.l.b16 %v3734
    %v3902 = vunpack.c.l.b16 %v3735
    %v3903 = vunpack.c.l.b16 %v3736
    %v3904 = vunpack.c.l.b16 %v3737
    %v3905 = vunpack.c.l.b16 %v3738
    %v3906 = vunpack.c.l.b16 %v3739
    %v3907 = vunpack.c.l.b16 %v3740
    %v3908 = vunpack.c.l.b16 %v3741
    %v3909 = vunpack.c.l.b16 %v3742
    %v3910 = vunpack.c.l.b16 %v3743
    %v3911 = vunpack.c.l.b16 %v3744
    %v3912 = vunpack.c.l.b16 %v3745
    %v3913 = vunpack.c.l.b16 %v3746
    %v3914 = vunpack.c.l.b16 %v3747
    %v3915 = vunpack.c.l.b16 %v3748
    %v3916 = vunpack.c.l.b16 %v3749
    %v3917 = vunpack.c.l.b16 %v3750
    %v3918 = vunpack.c.l.b16 %v3751
    %v3919 = vunpack.c.l.b16 %v3752
    %v3920 = vunpack.c.l.b16 %v3753
    %v3921 = vunpack.c.l.b16 %v3754
    %v3922 = vunpack.c.l.b16 %v3755
    %v3923 = vunpack.c.l.b16 %v3756
    %v3924 = vunpack.c.l.b16 %v3757
    %v3925 = vunpack.c.l.b16 %v3758
    %v3926 = vunpack.c.l.b16 %v3759
    %v3927 = vunpack.c.l.b16 %v3760
    %v3928 = vunpack.c.l.b16 %v3761
    %v3929 = vunpack.c.l.b16 %v3762
    %v3930 = vunpack.c.l.b16 %v3763
    %v3931 = vunpack.c.l.b16 %v3764
    %v3932 = vunpack.c.l.b16 %v3765
    %v3933 = vunpack.c.l.b16 %v3766
    %v3934 = vunpack.c.l.b16 %v3767
    %v3935 = vunpack.c.l.b16 %v3768
    %v3936 = vunpack.c.l.b16 %v3769
    %v3937 = vunpack.c.l.b16 %v3770
    %v3938 = vunpack.c.l.b16 %v3771
    %v3939 = vunpack.c.l.b16 %v3772
    %v3940 = vunpack.c.l.b16 %v3773
    %v3941 = vunpack.c.l.b16 %v3774
    %v3942 = vunpack.c.l.b16 %v3775
    %v3943 = vunpack.c.l.b16 %v3776
    %v3944 = vunpack.c.l.b16 %v3777
    %v3945 = vunpack.c.l.b16 %v3778
    %v3946 = vunpack.c.l.b16 %v3779
    %v3947 = vunpack.c.l.b16 %v3780
    %v3948 = vunpack.c.l.b16 %v3781
    %v3949 = vunpack.c.l.b16 %v3782
    %v3950 = vunpack.c.l.b16 %v3783
    %v3951 = vunpack.c.l.b16 %v3784
    %v3952 = vpack.c.b16 %v3873, %v3872
    %v3953 = vpack.c.b16 %v3875, %v3874
    %v3954 = vpack.c.b16 %v3877, %v3876
    %v3955 = vpack.c.b16 %v3879, %v3878
    %v3956 = vpack.c.b16 %v3881, %v3880
    %v3957 = vpack.c.b16 %v3883, %v3882
    %v3958 = vpack.c.b16 %v3885, %v3884
    %v3959 = vpack.c.b16 %v3887, %v3886
    %v3960 = vpack.c.b16 %v3889, %v3888
    %v3961 = vpack.c.b16 %v3891, %v3890
    %v3962 = vpack.c.b16 %v3893, %v3892
    %v3963 = vpack.c.b16 %v3895, %v3894
    %v3964 = vpack.c.b16 %v3897, %v3896
    %v3965 = vpack.c.b16 %v3899, %v3898
    %v3966 = vpack.c.b16 %v3901, %v3900
    %v3967 = vpack.c.b16 %v3903, %v3902
    %v3968 = vpack.c.b16 %v3905, %v3904
    %v3969 = vpack.c.b16 %v3907, %v3906
    %v3970 = vpack.c.b16 %v3909, %v3908
    %v3971 = vpack.c.b16 %v3911, %v3910
    %v3972 = vpack.c.b16 %v3913, %v3912
    %v3973 = vpack.c.b16 %v3915, %v3914
    %v3974 = vpack.c.b16 %v3917, %v3916
    %v3975 = vpack.c.b16 %v3919, %v3918
    %v3976 = vpack.c.b16 %v3921, %v3920
    %v3977 = vpack.c.b16 %v3923, %v3922
    %v3978 = vpack.c.b16 %v3925, %v3924
    %v3979 = vpack.c.b16 %v3927, %v3926
    %v3980 = vpack.c.b16 %v3929, %v3928
    %v3981 = vpack.c.b16 %v3931, %v3930
    %v3982 = vpack.c.b16 %v3933, %v3932
    %v3983 = vpack.c.b16 %v3935, %v3934
    %v3984 = vpack.c.b16 %v3937, %v3936
    %v3985 = vpack.c.b16 %v3939, %v3938
    %v3986 = vpack.c.b16 %v3941, %v3940
    %v3987 = vpack.c.b16 %v3943, %v3942
    %v3988 = vpack.c.b16 %v3945, %v3944
    %v3989 = vpack.c.b16 %v3947, %v3946
    %v3990 = vpack.c.b16 %v3949, %v3948
    %v3991 = vpack.c.b16 %v3951, %v3950
    %4032 = vmatprep.subr.bf16.mxu0 0
    %4033 = vmatpush1.bf16.msra.mxu0 %v3952
    %4034 = vmatprep.subr.bf16.mxu0 0
    %4035 = vmatpush1.bf16.msra.mxu0 %v3953
    %4036 = vmatprep.subr.bf16.mxu0 0
    %4037 = vmatpush1.bf16.msra.mxu0 %v3954
    %4038 = vmatprep.subr.bf16.mxu0 0
    %4039 = vmatpush1.bf16.msra.mxu0 %v3955
    %4040 = vmatprep.subr.bf16.mxu0 0
    %4041 = vmatpush1.bf16.msra.mxu0 %v3956
    %4042 = vmatprep.subr.bf16.mxu0 0
    %4043 = vmatpush1.bf16.msra.mxu0 %v3957
    %4044 = vmatprep.subr.bf16.mxu0 0
    %4045 = vmatpush1.bf16.msra.mxu0 %v3958
    %4046 = vmatprep.subr.bf16.mxu0 0
    %4047 = vmatpush1.bf16.msra.mxu0 %v3959
    %4048 = vmatprep.subr.bf16.mxu0 0
    %4049 = vmatpush1.bf16.msra.mxu0 %v3960
    %4050 = vmatprep.subr.bf16.mxu0 0
    %4051 = vmatpush1.bf16.msra.mxu0 %v3961
    %4052 = vmatprep.subr.bf16.mxu0 0
    %4053 = vmatpush1.bf16.msra.mxu0 %v3962
    %4054 = vmatprep.subr.bf16.mxu0 0
    %4055 = vmatpush1.bf16.msra.mxu0 %v3963
    %4056 = vmatprep.subr.bf16.mxu0 0
    %4057 = vmatpush1.bf16.msra.mxu0 %v3964
    %4058 = vmatprep.subr.bf16.mxu0 0
    %4059 = vmatpush1.bf16.msra.mxu0 %v3965
    %4060 = vmatprep.subr.bf16.mxu0 0
    %4061 = vmatpush1.bf16.msra.mxu0 %v3966
    %4062 = vmatprep.subr.bf16.mxu0 0
    %4063 = vmatpush1.bf16.msra.mxu0 %v3967
    %4064 = vmatprep.mubr.bf16.mxu0 %v3701
    %4065 = vmatmul.mubr.bf16.gmra.mrb[0].mxu0 %v3700
    %v4066 = vpop.f32.mrb[0].mxu0
    %v4067 = vadd.f32 %v3790, %v4066
    %v4068 = vpop.f32.mrb[0].mxu0
    %v4069 = vpop.f32.mrb[0].mxu0
    %v4070 = vpop.f32.mrb[0].mxu0
    %4071 = vdwg.mxu0
    %4072 = vmatprep.subr.bf16.mxu0 0
    %4073 = vmatpush1.bf16.msra.mxu0 %v3968
    %4074 = vmatprep.subr.bf16.mxu0 0
    %4075 = vmatpush1.bf16.msra.mxu0 %v3969
    %4076 = vmatprep.subr.bf16.mxu0 0
    %4077 = vmatpush1.bf16.msra.mxu0 %v3970
    %4078 = vmatprep.subr.bf16.mxu0 0
    %4079 = vmatpush1.bf16.msra.mxu0 %v3971
    %4080 = vmatprep.subr.bf16.mxu0 0
    %4081 = vmatpush1.bf16.msra.mxu0 %v3972
    %4082 = vmatprep.subr.bf16.mxu0 0
    %4083 = vmatpush1.bf16.msra.mxu0 %v3973
    %4084 = vmatprep.subr.bf16.mxu0 0
    %4085 = vmatpush1.bf16.msra.mxu0 %v3974
    %4086 = vmatprep.subr.bf16.mxu0 0
    %4087 = vmatpush1.bf16.msra.mxu0 %v3975
    %4088 = vmatprep.subr.bf16.mxu0 0
    %4089 = vmatpush1.bf16.msra.mxu0 %v3976
    %4090 = vmatprep.subr.bf16.mxu0 0
    %4091 = vmatpush1.bf16.msra.mxu0 %v3977
    %4092 = vmatprep.subr.bf16.mxu0 0
    %4093 = vmatpush1.bf16.msra.mxu0 %v3978
    %4094 = vmatprep.subr.bf16.mxu0 0
    %4095 = vmatpush1.bf16.msra.mxu0 %v3979
    %4096 = vmatprep.subr.bf16.mxu0 0
    %4097 = vmatpush1.bf16.msra.mxu0 %v3980
    %4098 = vmatprep.subr.bf16.mxu0 0
    %4099 = vmatpush1.bf16.msra.mxu0 %v3981
    %4100 = vmatprep.subr.bf16.mxu0 0
    %4101 = vmatpush1.bf16.msra.mxu0 %v3982
    %4102 = vmatprep.subr.bf16.mxu0 0
    %4103 = vmatpush1.bf16.msra.mxu0 %v3983
    %4104 = vmatprep.mubr.bf16.mxu0 %v3703
    %4105 = vmatmul.mubr.bf16.gmra.mrb[0].mxu0 %v3702
    %v4106 = vpop.f32.mrb[0].mxu0
    %v4107 = vadd.f32 %v4067, %v4106
    %v4108 = vpop.f32.mrb[0].mxu0
    %v4109 = vpop.f32.mrb[0].mxu0
    %v4110 = vpop.f32.mrb[0].mxu0
    %4111 = vdwg.mxu0
    %4112 = vmatprep.subr.bf16.mxu0 0
    %4113 = vmatpush1.bf16.msra.mxu0 %v3984
    %4114 = vmatprep.subr.bf16.mxu0 0
    %4115 = vmatpush1.bf16.msra.mxu0 %v3985
    %4116 = vmatprep.subr.bf16.mxu0 0
    %4117 = vmatpush1.bf16.msra.mxu0 %v3986
    %4118 = vmatprep.subr.bf16.mxu0 0
    %4119 = vmatpush1.bf16.msra.mxu0 %v3987
    %4120 = vmatprep.subr.bf16.mxu0 0
    %4121 = vmatpush1.bf16.msra.mxu0 %v3988
    %4122 = vmatprep.subr.bf16.mxu0 0
    %4123 = vmatpush1.bf16.msra.mxu0 %v3989
    %4124 = vmatprep.subr.bf16.mxu0 0
    %4125 = vmatpush1.bf16.msra.mxu0 %v3990
    %4126 = vmatprep.subr.bf16.mxu0 0
    %4127 = vmatpush1.bf16.msra.mxu0 %v3991
    %4128 = vmatprep.subr.bf16.mxu0 0
    %4129 = vmatpush1.bf16.msra.mxu0 0
    %4130 = vmatprep.subr.bf16.mxu0 0
    %4131 = vmatpush1.bf16.msra.mxu0 0
    %4132 = vmatprep.subr.bf16.mxu0 0
    %4133 = vmatpush1.bf16.msra.mxu0 0
    %4134 = vmatprep.subr.bf16.mxu0 0
    %4135 = vmatpush1.bf16.msra.mxu0 0
    %4136 = vmatprep.subr.bf16.mxu0 0
    %4137 = vmatpush1.bf16.msra.mxu0 0
    %4138 = vmatprep.subr.bf16.mxu0 0
    %4139 = vmatpush1.bf16.msra.mxu0 0
    %4140 = vmatprep.subr.bf16.mxu0 0
    %4141 = vmatpush1.bf16.msra.mxu0 0
    %4142 = vmatprep.subr.bf16.mxu0 0
    %4143 = vmatpush1.bf16.msra.mxu0 0
    %4144 = vmatprep.mubr.bf16.mxu0 0
    %4145 = vmatmul.mubr.bf16.gmra.mrb[0].mxu0 %v3704
    %v4146 = vpop.f32.mrb[0].mxu0
    %v4147 = vadd.f32 %v4107, %v4146
    %v4148 = vpop.f32.mrb[0].mxu0
    %v4149 = vpop.f32.mrb[0].mxu0
    %v4150 = vpop.f32.mrb[0].mxu0
    %4151 = vdwg.mxu0
    %v4152 = vld [vmem:[%s1] sm:$0xff]
    %v4153 = vmul.f32 %v4147, %v4152
    %vm4154 = vcmask 56320
    %v4155 = vsel %vm4154, %v4153, 0.0
    %4156 = vadd.xlane.f32.xlu0 %v4155
    %v4157 = vpop.xlane.xlu0 %4156
    %v4158 = vsel %vm4154, %v4152, 0.0
    %4159 = vadd.xlane.f32.xlu0 %v4158
    %v4160 = vpop.xlane.xlu0 %4159
    %v4161 = vrcp.pop %v4160
    %v4162 = vmul.f32 %v4157, %v4161
    %vm4163 = vcmask 7168
    %4164 = vst.msk [vmem:[%s10] sm:$0xff] %vm4163, %v4162
    // Predicated region
    $region50: #{racenet_forward.1} parent=1 // pred_check
      _
    $region51: #{racenet_forward.1} parent=1 // pred_check_branch
      %4166 = sbr.rel (0) target = $region53
    $region52: #{racenet_forward.1} parent=1 // pred_region
      _
    $region53: #{racenet_forward.1} parent=1 // pred_fallthru
      _
    // Predicated region
    $region54: #{racenet_forward.1} parent=1 // pred_check
      _
    $region55: #{racenet_forward.1} parent=1 // pred_check_branch
      %4168 = sbr.rel (0) target = $region57
    $region56: #{racenet_forward.1} parent=1 // pred_region
      _
    $region57: #{racenet_forward.1} parent=1 // pred_fallthru
      _
    %4169 = vsyncpa [#allocation3], 1
    %4170 = vsyncpa [#allocation5], 1

</llo_original>
